<compile_context>
chip_gen: v5e
topology: v5e:2x2
jax: 0.10.0
libtpu: 0.0.40
codegen_flags: <defaults>
</compile_context>

<pallas_src>
import math

import jax
import jax.numpy as jnp
from jax import lax
from jax.experimental import pallas as pl
from jax.experimental.pallas import tpu as pltpu


# ----------------------------------------------------------------------------
# Kernel: one invocation, recurrence as an unrolled in-kernel loop,
# state carried in vregs via fori_loop carry.
# ----------------------------------------------------------------------------
def _esn_rollout_kernel(
    u_ref,       # (T, B, M)   pre-projected input  (x@w_in + summed bias1)
    x1_ref,      # (B, M)      initial reservoir state 1
    x2_ref,      # (B, M)      initial reservoir state 2
    ww_ref,      # (2M, 2M)    [[W_res1*m1, 0],[W_res21*m2, W_res2*m4]]
    w12_ref,     # (M, M)      W_res12*m3
    b2_ref,      # (1, M)      b_res12 + b_x2
    out_ref,     # (T, B, 2M)  per-step [x1 | x2]
):
    T = u_ref.shape[0]
    B, M = x1_ref.shape

    # Hoisted out of the recurrence: weights loaded once, bias pre-broadcast
    # (JAX does not CSE broadcast_in_dim across unrolled iterations).
    ww = ww_ref[...]
    w12 = w12_ref[...]
    b2 = jnp.broadcast_to(b2_ref[...], (B, M))

    def body(t, carry):
        x1, x2 = carry
        # One wide MXU pass: R[:, :M] = x1@(W_res1*m1) + x2@(W_res21*m2)
        #                    R[:, M:] = x2@(W_res2*m4)
        a = jnp.concatenate([x1, x2], axis=-1)                       # (B, 2M)
        r = jnp.dot(a, ww, preferred_element_type=jnp.float32)       # (B, 2M)

        z1 = u_ref[t] + r[:, :M]
        # z2 uses the *pre-tanh* z1 and the *old* x2 (its term is already in r).
        z2 = jnp.dot(z1, w12, preferred_element_type=jnp.float32) + r[:, M:] + b2

        x1n = jnp.tanh(z1)
        x2n = jnp.tanh(z2)
        out_ref[t] = jnp.concatenate([x1n, x2n], axis=-1)            # (B, 2M)
        return (x1n, x2n)

    lax.fori_loop(0, T, body, (x1_ref[...], x2_ref[...]), unroll=True)


# ----------------------------------------------------------------------------
# One-time (outside the hot path) fold of masks, bias sums, weight stacking.
# ----------------------------------------------------------------------------
def fuse_reservior_params(params, bindes):
    """Fold static gating masks into weights, pre-sum biases, build wide blocks."""
    M = params["w_res1"].shape[0]
    w_wide = jnp.zeros((2 * M, 2 * M), jnp.float32)
    w_wide = w_wide.at[:M, :M].set(params["w_res1"] * bindes[0])     # x1 -> z1
    w_wide = w_wide.at[M:, :M].set(params["w_res21"] * bindes[1])    # x2 -> z1
    w_wide = w_wide.at[M:, M:].set(params["w_res2"] * bindes[3])     # x2 -> z2
    # top-right block stays zero
    w12 = params["w_res12"] * bindes[2]                               # z1 -> z2
    b1 = (params["b_in"] + params["b_x1"] + params["b_res21"]).reshape(1, M)
    b2 = (params["b_res12"] + params["b_x2"]).reshape(1, M)
    return dict(w_in=params["w_in"], w_wide=w_wide, w12=w12, b1=b1, b2=b2)


# ----------------------------------------------------------------------------
# Rollout over a sequence xs: (T, B, size_in) -> per-step (T, B, M) states.
# ----------------------------------------------------------------------------
def reservior_rollout(xs, x1_0, x2_0, fused):
    T, B, size_in = xs.shape
    M = x1_0.shape[1]

    # Hoisted, non-recurrent input projection: one dense XLA matmul over all
    # T*B rows (good MXU utilization, no zero-padding, no per-step feed).
    u = (xs.reshape(T * B, size_in) @ fused["w_in"] + fused["b1"]).reshape(T, B, M)

    vmem = pl.BlockSpec(memory_space=pltpu.MemorySpace.VMEM)
    out = pl.pallas_call(
        _esn_rollout_kernel,
        out_shape=jax.ShapeDtypeStruct((T, B, 2 * M), jnp.float32),
        in_specs=[vmem] * 6,
        out_specs=vmem,
    )(u, x1_0, x2_0, fused["w_wide"], fused["w12"], fused["b2"])

    return out[:, :, :M], out[:, :, M:]


def reservior_forward(x, x1, x2, fused):
    """Exact single-step forward of the PyTorch module (T == 1 rollout)."""
    out1, out2 = reservior_rollout(x[None], x1, x2, fused)
    return out1[0], out2[0]


# ----------------------------------------------------------------------------
# Init + pure-JAX reference (unfused math) for validation.
# ----------------------------------------------------------------------------
def _kaiming_uniform_pair(key, shape, dtype=jnp.float32):
    """Mimic nn.init.kaiming_uniform_(w, a=sqrt(5)) + uniform bias init."""
    fan_in = shape[1]  # torch fan_in for a 2D tensor is size(1)
    gain = math.sqrt(2.0 / (1.0 + 5.0))  # a = sqrt(5)
    w_bound = gain * math.sqrt(3.0 / fan_in)
    b_bound = 1.0 / math.sqrt(fan_in)
    kw, kb = jax.random.split(key)
    w = jax.random.uniform(kw, shape, dtype, minval=-w_bound, maxval=w_bound)
    b = jax.random.uniform(kb, (shape[1],), dtype, minval=-b_bound, maxval=b_bound)
    return w, b


def _reference_step(x, x1, x2, params, bindes):
    z1 = (x @ params["w_in"] + params["b_in"]
          + x1 @ (params["w_res1"] * bindes[0]) + params["b_x1"]
          + x2 @ (params["w_res21"] * bindes[1]) + params["b_res21"])
    z2 = (z1 @ (params["w_res12"] * bindes[2]) + params["b_res12"]
          + x2 @ (params["w_res2"] * bindes[3]) + params["b_x2"])
    return jnp.tanh(z1), jnp.tanh(z2)


if __name__ == "__main__":
    # Shapes consistent with the module: args.batch, args.size_in, args.size_middle,
    # rolled over T time steps (e.g. MNIST rows fed sequentially into the ESN).
    B, SIZE_IN, SIZE_MID, T = 8, 32, 128, 28

    key = jax.random.PRNGKey(0)
    keys = jax.random.split(key, 12)

    w_in, b_in = _kaiming_uniform_pair(keys[0], (SIZE_IN, SIZE_MID))
    w_res1, b_x1 = _kaiming_uniform_pair(keys[1], (SIZE_MID, SIZE_MID))
    w_res12, b_res12 = _kaiming_uniform_pair(keys[2], (SIZE_MID, SIZE_MID))
    w_res2, b_x2 = _kaiming_uniform_pair(keys[3], (SIZE_MID, SIZE_MID))
    w_res21, b_res21 = _kaiming_uniform_pair(keys[4], (SIZE_MID, SIZE_MID))

    params = dict(
        w_in=w_in, w_res1=w_res1, w_res12=w_res12, w_res2=w_res2, w_res21=w_res21,
        b_in=b_in, b_x1=b_x1, b_res12=b_res12, b_x2=b_x2, b_res21=b_res21,
    )

    # Fixed binary gating masks (same shape as the reservoir weights they gate).
    bindes = tuple(
        (jax.random.uniform(keys[8 + i], (SIZE_MID, SIZE_MID)) < 0.5).astype(jnp.float32)
        for i in range(4)
    )

    # Fold masks / bias sums / wide weight blocks ONCE, outside the hot path.
    fused = jax.tree_util.tree_map(jnp.asarray, fuse_reservior_params(params, bindes))

    # ---------------- rollout over T steps (recurrence inside the kernel) ----
    xs = jax.random.normal(keys[5], (T, B, SIZE_IN), jnp.float32)
    x1_0 = jnp.zeros((B, SIZE_MID), jnp.float32)   # module init state
    x2_0 = jnp.zeros((B, SIZE_MID), jnp.float32)

    rollout = jax.jit(reservior_rollout)
    out1_seq, out2_seq = rollout(xs, x1_0, x2_0, fused)
    jax.block_until_ready((out1_seq, out2_seq))

    # Reference: call the module's forward T times in pure JAX.
    ref1_list, ref2_list = [], []
    x1r, x2r = x1_0, x2_0
    for t in range(T):
        x1r, x2r = _reference_step(xs[t], x1r, x2r, params, bindes)
        ref1_list.append(x1r)
        ref2_list.append(x2r)
    ref1_seq = jnp.stack(ref1_list)
    ref2_seq = jnp.stack(ref2_list)

    assert out1_seq.shape == (T, B, SIZE_MID) and out2_seq.shape == (T, B, SIZE_MID)
    assert jnp.allclose(out1_seq, ref1_seq, atol=1e-4, rtol=1e-4)
    assert jnp.allclose(out2_seq, ref2_seq, atol=1e-4, rtol=1e-4)

    # ---------------- single-step path (exact module.forward semantics) ------
    x1_state = jax.random.normal(keys[6], (B, SIZE_MID), jnp.float32) * 0.1
    x2_state = jax.random.normal(keys[7], (B, SIZE_MID), jnp.float32) * 0.1

    step = jax.jit(reservior_forward)
    o1, o2 = step(xs[0], x1_state, x2_state, fused)
    jax.block_until_ready((o1, o2))

    r1, r2 = _reference_step(xs[0], x1_state, x2_state, params, bindes)
    assert o1.shape == (B, SIZE_MID) and o2.shape == (B, SIZE_MID)
    assert jnp.allclose(o1, r1, atol=1e-4, rtol=1e-4)
    assert jnp.allclose(o2, r2, atol=1e-4, rtol=1e-4)

    print("KERNEL_OK")
</pallas_src>

<mosaic_0001>
module attributes {stable_mosaic.version = 11 : i64} {
  func.func @_esn_rollout_kernel(%arg0: memref<28x8x128xf32, #tpu.memory_space<vmem>>, %arg1: memref<8x128xf32, #tpu.memory_space<vmem>>, %arg2: memref<8x128xf32, #tpu.memory_space<vmem>>, %arg3: memref<256x256xf32, #tpu.memory_space<vmem>>, %arg4: memref<128x128xf32, #tpu.memory_space<vmem>>, %arg5: memref<1x128xf32, #tpu.memory_space<vmem>>, %arg6: memref<28x8x256xf32, #tpu.memory_space<vmem>>) attributes {dimension_semantics = [], scalar_prefetch = 0 : i64, scratch_operands = 0 : i64, tpu.core_type = #tpu.core_type<tc>} {
    %c0 = arith.constant 0 : index
    %c0_0 = arith.constant 0 : index
    %0 = vector.load %arg3[%c0, %c0_0] : memref<256x256xf32, #tpu.memory_space<vmem>>, vector<256x256xf32>
    %c0_1 = arith.constant 0 : index
    %c0_2 = arith.constant 0 : index
    %1 = vector.load %arg4[%c0_1, %c0_2] : memref<128x128xf32, #tpu.memory_space<vmem>>, vector<128x128xf32>
    %c0_3 = arith.constant 0 : index
    %c0_4 = arith.constant 0 : index
    %2 = vector.load %arg5[%c0_3, %c0_4] : memref<1x128xf32, #tpu.memory_space<vmem>>, vector<1x128xf32>
    %3 = vector.shape_cast %2 : vector<1x128xf32> to vector<1x128xf32>
    %4 = vector.broadcast %3 : vector<1x128xf32> to vector<8x128xf32>
    %c0_5 = arith.constant 0 : index
    %c0_6 = arith.constant 0 : index
    %5 = vector.load %arg1[%c0_5, %c0_6] : memref<8x128xf32, #tpu.memory_space<vmem>>, vector<8x128xf32>
    %c0_7 = arith.constant 0 : index
    %c0_8 = arith.constant 0 : index
    %6 = vector.load %arg2[%c0_7, %c0_8] : memref<8x128xf32, #tpu.memory_space<vmem>>, vector<8x128xf32>
    %c0_i32 = arith.constant 0 : i32
    %7 = tpu.concatenate %5, %6 in 1 : vector<8x128xf32>, vector<8x128xf32> -> vector<8x256xf32>
    %cst = arith.constant dense<0.000000e+00> : vector<8x256xf32>
    %8 = tpu.matmul %7, %0, %cst {dimension_numbers = #tpu.dot_dimension_numbers<[1], [0], [0], [1], [0, 0, 1, 1], [], []>} : vector<8x256xf32>, vector<256x256xf32>, vector<8x256xf32> -> vector<8x256xf32>
    %9 = arith.index_cast %c0_i32 : i32 to index
    %c0_9 = arith.constant 0 : index
    %c0_10 = arith.constant 0 : index
    %10 = vector.load %arg0[%9, %c0_9, %c0_10] : memref<28x8x128xf32, #tpu.memory_space<vmem>>, vector<1x8x128xf32>
    %11 = vector.shape_cast %10 : vector<1x8x128xf32> to vector<8x128xf32>
    %12 = vector.extract_strided_slice %8 {offsets = [0, 0], sizes = [8, 128], strides = [1, 1]} : vector<8x256xf32> to vector<8x128xf32>
    %13 = arith.addf %11, %12 : vector<8x128xf32>
    %cst_11 = arith.constant dense<0.000000e+00> : vector<8x128xf32>
    %14 = tpu.matmul %13, %1, %cst_11 {dimension_numbers = #tpu.dot_dimension_numbers<[1], [0], [0], [1], [0, 0, 1, 1], [], []>} : vector<8x128xf32>, vector<128x128xf32>, vector<8x128xf32> -> vector<8x128xf32>
    %15 = vector.extract_strided_slice %8 {offsets = [0, 128], sizes = [8, 128], strides = [1, 1]} : vector<8x256xf32> to vector<8x128xf32>
    %16 = arith.addf %14, %15 : vector<8x128xf32>
    %17 = arith.addf %16, %4 : vector<8x128xf32>
    %18 = math.tanh %13 : vector<8x128xf32>
    %19 = math.tanh %17 : vector<8x128xf32>
    %20 = tpu.concatenate %18, %19 in 1 : vector<8x128xf32>, vector<8x128xf32> -> vector<8x256xf32>
    %21 = arith.index_cast %c0_i32 : i32 to index
    %c0_12 = arith.constant 0 : index
    %c0_13 = arith.constant 0 : index
    %22 = vector.load %arg6[%21, %c0_12, %c0_13] : memref<28x8x256xf32, #tpu.memory_space<vmem>>, vector<1x8x256xf32>
    %23 = vector.shape_cast %22 : vector<1x8x256xf32> to vector<8x256xf32>
    %24 = vector.shape_cast %20 : vector<8x256xf32> to vector<1x8x256xf32>
    tpu.vector_store %arg6[%21, %c0_12, %c0_13], %24 {strides = array<i32>} : memref<28x8x256xf32, #tpu.memory_space<vmem>>, vector<1x8x256xf32>,
    %c1_i32 = arith.constant 1 : i32
    %25 = tpu.concatenate %18, %19 in 1 : vector<8x128xf32>, vector<8x128xf32> -> vector<8x256xf32>
    %cst_14 = arith.constant dense<0.000000e+00> : vector<8x256xf32>
    %26 = tpu.matmul %25, %0, %cst_14 {dimension_numbers = #tpu.dot_dimension_numbers<[1], [0], [0], [1], [0, 0, 1, 1], [], []>} : vector<8x256xf32>, vector<256x256xf32>, vector<8x256xf32> -> vector<8x256xf32>
    %27 = arith.index_cast %c1_i32 : i32 to index
    %c0_15 = arith.constant 0 : index
    %c0_16 = arith.constant 0 : index
    %28 = vector.load %arg0[%27, %c0_15, %c0_16] : memref<28x8x128xf32, #tpu.memory_space<vmem>>, vector<1x8x128xf32>
    %29 = vector.shape_cast %28 : vector<1x8x128xf32> to vector<8x128xf32>
    %30 = vector.extract_strided_slice %26 {offsets = [0, 0], sizes = [8, 128], strides = [1, 1]} : vector<8x256xf32> to vector<8x128xf32>
    %31 = arith.addf %29, %30 : vector<8x128xf32>
    %cst_17 = arith.constant dense<0.000000e+00> : vector<8x128xf32>
    %32 = tpu.matmul %31, %1, %cst_17 {dimension_numbers = #tpu.dot_dimension_numbers<[1], [0], [0], [1], [0, 0, 1, 1], [], []>} : vector<8x128xf32>, vector<128x128xf32>, vector<8x128xf32> -> vector<8x128xf32>
    %33 = vector.extract_strided_slice %26 {offsets = [0, 128], sizes = [8, 128], strides = [1, 1]} : vector<8x256xf32> to vector<8x128xf32>
    %34 = arith.addf %32, %33 : vector<8x128xf32>
    %35 = arith.addf %34, %4 : vector<8x128xf32>
    %36 = math.tanh %31 : vector<8x128xf32>
    %37 = math.tanh %35 : vector<8x128xf32>
    %38 = tpu.concatenate %36, %37 in 1 : vector<8x128xf32>, vector<8x128xf32> -> vector<8x256xf32>
    %39 = arith.index_cast %c1_i32 : i32 to index
    %c0_18 = arith.constant 0 : index
    %c0_19 = arith.constant 0 : index
    %40 = vector.load %arg6[%39, %c0_18, %c0_19] : memref<28x8x256xf32, #tpu.memory_space<vmem>>, vector<1x8x256xf32>
    %41 = vector.shape_cast %40 : vector<1x8x256xf32> to vector<8x256xf32>
    %42 = vector.shape_cast %38 : vector<8x256xf32> to vector<1x8x256xf32>
    tpu.vector_store %arg6[%39, %c0_18, %c0_19], %42 {strides = array<i32>} : memref<28x8x256xf32, #tpu.memory_space<vmem>>, vector<1x8x256xf32>,
    %c2_i32 = arith.constant 2 : i32
    %43 = tpu.concatenate %36, %37 in 1 : vector<8x128xf32>, vector<8x128xf32> -> vector<8x256xf32>
    %cst_20 = arith.constant dense<0.000000e+00> : vector<8x256xf32>
    %44 = tpu.matmul %43, %0, %cst_20 {dimension_numbers = #tpu.dot_dimension_numbers<[1], [0], [0], [1], [0, 0, 1, 1], [], []>} : vector<8x256xf32>, vector<256x256xf32>, vector<8x256xf32> -> vector<8x256xf32>
    %45 = arith.index_cast %c2_i32 : i32 to index
    %c0_21 = arith.constant 0 : index
    %c0_22 = arith.constant 0 : index
    %46 = vector.load %arg0[%45, %c0_21, %c0_22] : memref<28x8x128xf32, #tpu.memory_space<vmem>>, vector<1x8x128xf32>
    %47 = vector.shape_cast %46 : vector<1x8x128xf32> to vector<8x128xf32>
    %48 = vector.extract_strided_slice %44 {offsets = [0, 0], sizes = [8, 128], strides = [1, 1]} : vector<8x256xf32> to vector<8x128xf32>
    %49 = arith.addf %47, %48 : vector<8x128xf32>
    %cst_23 = arith.constant dense<0.000000e+00> : vector<8x128xf32>
    %50 = tpu.matmul %49, %1, %cst_23 {dimension_numbers = #tpu.dot_dimension_numbers<[1], [0], [0], [1], [0, 0, 1, 1], [], []>} : vector<8x128xf32>, vector<128x128xf32>, vector<8x128xf32> -> vector<8x128xf32>
    %51 = vector.extract_strided_slice %44 {offsets = [0, 128], sizes = [8, 128], strides = [1, 1]} : vector<8x256xf32> to vector<8x128xf32>
    %52 = arith.addf %50, %51 : vector<8x128xf32>
    %53 = arith.addf %52, %4 : vector<8x128xf32>
    %54 = math.tanh %49 : vector<8x128xf32>
    %55 = math.tanh %53 : vector<8x128xf32>
    %56 = tpu.concatenate %54, %55 in 1 : vector<8x128xf32>, vector<8x128xf32> -> vector<8x256xf32>
    %57 = arith.index_cast %c2_i32 : i32 to index
    %c0_24 = arith.constant 0 : index
    %c0_25 = arith.constant 0 : index
    %58 = vector.load %arg6[%57, %c0_24, %c0_25] : memref<28x8x256xf32, #tpu.memory_space<vmem>>, vector<1x8x256xf32>
    %59 = vector.shape_cast %58 : vector<1x8x256xf32> to vector<8x256xf32>
    %60 = vector.shape_cast %56 : vector<8x256xf32> to vector<1x8x256xf32>
    tpu.vector_store %arg6[%57, %c0_24, %c0_25], %60 {strides = array<i32>} : memref<28x8x256xf32, #tpu.memory_space<vmem>>, vector<1x8x256xf32>,
    %c3_i32 = arith.constant 3 : i32
    %61 = tpu.concatenate %54, %55 in 1 : vector<8x128xf32>, vector<8x128xf32> -> vector<8x256xf32>
    %cst_26 = arith.constant dense<0.000000e+00> : vector<8x256xf32>
    %62 = tpu.matmul %61, %0, %cst_26 {dimension_numbers = #tpu.dot_dimension_numbers<[1], [0], [0], [1], [0, 0, 1, 1], [], []>} : vector<8x256xf32>, vector<256x256xf32>, vector<8x256xf32> -> vector<8x256xf32>
    %63 = arith.index_cast %c3_i32 : i32 to index
    %c0_27 = arith.constant 0 : index
    %c0_28 = arith.constant 0 : index
    %64 = vector.load %arg0[%63, %c0_27, %c0_28] : memref<28x8x128xf32, #tpu.memory_space<vmem>>, vector<1x8x128xf32>
    %65 = vector.shape_cast %64 : vector<1x8x128xf32> to vector<8x128xf32>
    %66 = vector.extract_strided_slice %62 {offsets = [0, 0], sizes = [8, 128], strides = [1, 1]} : vector<8x256xf32> to vector<8x128xf32>
    %67 = arith.addf %65, %66 : vector<8x128xf32>
    %cst_29 = arith.constant dense<0.000000e+00> : vector<8x128xf32>
    %68 = tpu.matmul %67, %1, %cst_29 {dimension_numbers = #tpu.dot_dimension_numbers<[1], [0], [0], [1], [0, 0, 1, 1], [], []>} : vector<8x128xf32>, vector<128x128xf32>, vector<8x128xf32> -> vector<8x128xf32>
    %69 = vector.extract_strided_slice %62 {offsets = [0, 128], sizes = [8, 128], strides = [1, 1]} : vector<8x256xf32> to vector<8x128xf32>
    %70 = arith.addf %68, %69 : vector<8x128xf32>
    %71 = arith.addf %70, %4 : vector<8x128xf32>
    %72 = math.tanh %67 : vector<8x128xf32>
    %73 = math.tanh %71 : vector<8x128xf32>
    %74 = tpu.concatenate %72, %73 in 1 : vector<8x128xf32>, vector<8x128xf32> -> vector<8x256xf32>
    %75 = arith.index_cast %c3_i32 : i32 to index
    %c0_30 = arith.constant 0 : index
    %c0_31 = arith.constant 0 : index
    %76 = vector.load %arg6[%75, %c0_30, %c0_31] : memref<28x8x256xf32, #tpu.memory_space<vmem>>, vector<1x8x256xf32>
    %77 = vector.shape_cast %76 : vector<1x8x256xf32> to vector<8x256xf32>
    %78 = vector.shape_cast %74 : vector<8x256xf32> to vector<1x8x256xf32>
    tpu.vector_store %arg6[%75, %c0_30, %c0_31], %78 {strides = array<i32>} : memref<28x8x256xf32, #tpu.memory_space<vmem>>, vector<1x8x256xf32>,
    %c4_i32 = arith.constant 4 : i32
    %79 = tpu.concatenate %72, %73 in 1 : vector<8x128xf32>, vector<8x128xf32> -> vector<8x256xf32>
    %cst_32 = arith.constant dense<0.000000e+00> : vector<8x256xf32>
    %80 = tpu.matmul %79, %0, %cst_32 {dimension_numbers = #tpu.dot_dimension_numbers<[1], [0], [0], [1], [0, 0, 1, 1], [], []>} : vector<8x256xf32>, vector<256x256xf32>, vector<8x256xf32> -> vector<8x256xf32>
    %81 = arith.index_cast %c4_i32 : i32 to index
    %c0_33 = arith.constant 0 : index
    %c0_34 = arith.constant 0 : index
    %82 = vector.load %arg0[%81, %c0_33, %c0_34] : memref<28x8x128xf32, #tpu.memory_space<vmem>>, vector<1x8x128xf32>
    %83 = vector.shape_cast %82 : vector<1x8x128xf32> to vector<8x128xf32>
    %84 = vector.extract_strided_slice %80 {offsets = [0, 0], sizes = [8, 128], strides = [1, 1]} : vector<8x256xf32> to vector<8x128xf32>
    %85 = arith.addf %83, %84 : vector<8x128xf32>
    %cst_35 = arith.constant dense<0.000000e+00> : vector<8x128xf32>
    %86 = tpu.matmul %85, %1, %cst_35 {dimension_numbers = #tpu.dot_dimension_numbers<[1], [0], [0], [1], [0, 0, 1, 1], [], []>} : vector<8x128xf32>, vector<128x128xf32>, vector<8x128xf32> -> vector<8x128xf32>
    %87 = vector.extract_strided_slice %80 {offsets = [0, 128], sizes = [8, 128], strides = [1, 1]} : vector<8x256xf32> to vector<8x128xf32>
    %88 = arith.addf %86, %87 : vector<8x128xf32>
    %89 = arith.addf %88, %4 : vector<8x128xf32>
    %90 = math.tanh %85 : vector<8x128xf32>
    %91 = math.tanh %89 : vector<8x128xf32>
    %92 = tpu.concatenate %90, %91 in 1 : vector<8x128xf32>, vector<8x128xf32> -> vector<8x256xf32>
    %93 = arith.index_cast %c4_i32 : i32 to index
    %c0_36 = arith.constant 0 : index
    %c0_37 = arith.constant 0 : index
    %94 = vector.load %arg6[%93, %c0_36, %c0_37] : memref<28x8x256xf32, #tpu.memory_space<vmem>>, vector<1x8x256xf32>
    %95 = vector.shape_cast %94 : vector<1x8x256xf32> to vector<8x256xf32>
    %96 = vector.shape_cast %92 : vector<8x256xf32> to vector<1x8x256xf32>
    tpu.vector_store %arg6[%93, %c0_36, %c0_37], %96 {strides = array<i32>} : memref<28x8x256xf32, #tpu.memory_space<vmem>>, vector<1x8x256xf32>,
    %c5_i32 = arith.constant 5 : i32
    %97 = tpu.concatenate %90, %91 in 1 : vector<8x128xf32>, vector<8x128xf32> -> vector<8x256xf32>
    %cst_38 = arith.constant dense<0.000000e+00> : vector<8x256xf32>
    %98 = tpu.matmul %97, %0, %cst_38 {dimension_numbers = #tpu.dot_dimension_numbers<[1], [0], [0], [1], [0, 0, 1, 1], [], []>} : vector<8x256xf32>, vector<256x256xf32>, vector<8x256xf32> -> vector<8x256xf32>
    %99 = arith.index_cast %c5_i32 : i32 to index
    %c0_39 = arith.constant 0 : index
    %c0_40 = arith.constant 0 : index
    %100 = vector.load %arg0[%99, %c0_39, %c0_40] : memref<28x8x128xf32, #tpu.memory_space<vmem>>, vector<1x8x128xf32>
    %101 = vector.shape_cast %100 : vector<1x8x128xf32> to vector<8x128xf32>
    %102 = vector.extract_strided_slice %98 {offsets = [0, 0], sizes = [8, 128], strides = [1, 1]} : vector<8x256xf32> to vector<8x128xf32>
    %103 = arith.addf %101, %102 : vector<8x128xf32>
    %cst_41 = arith.constant dense<0.000000e+00> : vector<8x128xf32>
    %104 = tpu.matmul %103, %1, %cst_41 {dimension_numbers = #tpu.dot_dimension_numbers<[1], [0], [0], [1], [0, 0, 1, 1], [], []>} : vector<8x128xf32>, vector<128x128xf32>, vector<8x128xf32> -> vector<8x128xf32>
    %105 = vector.extract_strided_slice %98 {offsets = [0, 128], sizes = [8, 128], strides = [1, 1]} : vector<8x256xf32> to vector<8x128xf32>
    %106 = arith.addf %104, %105 : vector<8x128xf32>
    %107 = arith.addf %106, %4 : vector<8x128xf32>
    %108 = math.tanh %103 : vector<8x128xf32>
    %109 = math.tanh %107 : vector<8x128xf32>
    %110 = tpu.concatenate %108, %109 in 1 : vector<8x128xf32>, vector<8x128xf32> -> vector<8x256xf32>
    %111 = arith.index_cast %c5_i32 : i32 to index
    %c0_42 = arith.constant 0 : index
    %c0_43 = arith.constant 0 : index
    %112 = vector.load %arg6[%111, %c0_42, %c0_43] : memref<28x8x256xf32, #tpu.memory_space<vmem>>, vector<1x8x256xf32>
    %113 = vector.shape_cast %112 : vector<1x8x256xf32> to vector<8x256xf32>
    %114 = vector.shape_cast %110 : vector<8x256xf32> to vector<1x8x256xf32>
    tpu.vector_store %arg6[%111, %c0_42, %c0_43], %114 {strides = array<i32>} : memref<28x8x256xf32, #tpu.memory_space<vmem>>, vector<1x8x256xf32>,
    %c6_i32 = arith.constant 6 : i32
    %115 = tpu.concatenate %108, %109 in 1 : vector<8x128xf32>, vector<8x128xf32> -> vector<8x256xf32>
    %cst_44 = arith.constant dense<0.000000e+00> : vector<8x256xf32>
    %116 = tpu.matmul %115, %0, %cst_44 {dimension_numbers = #tpu.dot_dimension_numbers<[1], [0], [0], [1], [0, 0, 1, 1], [], []>} : vector<8x256xf32>, vector<256x256xf32>, vector<8x256xf32> -> vector<8x256xf32>
    %117 = arith.index_cast %c6_i32 : i32 to index
    %c0_45 = arith.constant 0 : index
    %c0_46 = arith.constant 0 : index
    %118 = vector.load %arg0[%117, %c0_45, %c0_46] : memref<28x8x128xf32, #tpu.memory_space<vmem>>, vector<1x8x128xf32>
    %119 = vector.shape_cast %118 : vector<1x8x128xf32> to vector<8x128xf32>
    %120 = vector.extract_strided_slice %116 {offsets = [0, 0], sizes = [8, 128], strides = [1, 1]} : vector<8x256xf32> to vector<8x128xf32>
    %121 = arith.addf %119, %120 : vector<8x128xf32>
    %cst_47 = arith.constant dense<0.000000e+00> : vector<8x128xf32>
    %122 = tpu.matmul %121, %1, %cst_47 {dimension_numbers = #tpu.dot_dimension_numbers<[1], [0], [0], [1], [0, 0, 1, 1], [], []>} : vector<8x128xf32>, vector<128x128xf32>, vector<8x128xf32> -> vector<8x128xf32>
    %123 = vector.extract_strided_slice %116 {offsets = [0, 128], sizes = [8, 128], strides = [1, 1]} : vector<8x256xf32> to vector<8x128xf32>
    %124 = arith.addf %122, %123 : vector<8x128xf32>
    %125 = arith.addf %124, %4 : vector<8x128xf32>
    %126 = math.tanh %121 : vector<8x128xf32>
    %127 = math.tanh %125 : vector<8x128xf32>
    %128 = tpu.concatenate %126, %127 in 1 : vector<8x128xf32>, vector<8x128xf32> -> vector<8x256xf32>
    %129 = arith.index_cast %c6_i32 : i32 to index
    %c0_48 = arith.constant 0 : index
    %c0_49 = arith.constant 0 : index
    %130 = vector.load %arg6[%129, %c0_48, %c0_49] : memref<28x8x256xf32, #tpu.memory_space<vmem>>, vector<1x8x256xf32>
    %131 = vector.shape_cast %130 : vector<1x8x256xf32> to vector<8x256xf32>
    %132 = vector.shape_cast %128 : vector<8x256xf32> to vector<1x8x256xf32>
    tpu.vector_store %arg6[%129, %c0_48, %c0_49], %132 {strides = array<i32>} : memref<28x8x256xf32, #tpu.memory_space<vmem>>, vector<1x8x256xf32>,
    %c7_i32 = arith.constant 7 : i32
    %133 = tpu.concatenate %126, %127 in 1 : vector<8x128xf32>, vector<8x128xf32> -> vector<8x256xf32>
    %cst_50 = arith.constant dense<0.000000e+00> : vector<8x256xf32>
    %134 = tpu.matmul %133, %0, %cst_50 {dimension_numbers = #tpu.dot_dimension_numbers<[1], [0], [0], [1], [0, 0, 1, 1], [], []>} : vector<8x256xf32>, vector<256x256xf32>, vector<8x256xf32> -> vector<8x256xf32>
    %135 = arith.index_cast %c7_i32 : i32 to index
    %c0_51 = arith.constant 0 : index
    %c0_52 = arith.constant 0 : index
    %136 = vector.load %arg0[%135, %c0_51, %c0_52] : memref<28x8x128xf32, #tpu.memory_space<vmem>>, vector<1x8x128xf32>
    %137 = vector.shape_cast %136 : vector<1x8x128xf32> to vector<8x128xf32>
    %138 = vector.extract_strided_slice %134 {offsets = [0, 0], sizes = [8, 128], strides = [1, 1]} : vector<8x256xf32> to vector<8x128xf32>
    %139 = arith.addf %137, %138 : vector<8x128xf32>
    %cst_53 = arith.constant dense<0.000000e+00> : vector<8x128xf32>
    %140 = tpu.matmul %139, %1, %cst_53 {dimension_numbers = #tpu.dot_dimension_numbers<[1], [0], [0], [1], [0, 0, 1, 1], [], []>} : vector<8x128xf32>, vector<128x128xf32>, vector<8x128xf32> -> vector<8x128xf32>
    %141 = vector.extract_strided_slice %134 {offsets = [0, 128], sizes = [8, 128], strides = [1, 1]} : vector<8x256xf32> to vector<8x128xf32>
    %142 = arith.addf %140, %141 : vector<8x128xf32>
    %143 = arith.addf %142, %4 : vector<8x128xf32>
    %144 = math.tanh %139 : vector<8x128xf32>
    %145 = math.tanh %143 : vector<8x128xf32>
    %146 = tpu.concatenate %144, %145 in 1 : vector<8x128xf32>, vector<8x128xf32> -> vector<8x256xf32>
    %147 = arith.index_cast %c7_i32 : i32 to index
    %c0_54 = arith.constant 0 : index
    %c0_55 = arith.constant 0 : index
    %148 = vector.load %arg6[%147, %c0_54, %c0_55] : memref<28x8x256xf32, #tpu.memory_space<vmem>>, vector<1x8x256xf32>
    %149 = vector.shape_cast %148 : vector<1x8x256xf32> to vector<8x256xf32>
    %150 = vector.shape_cast %146 : vector<8x256xf32> to vector<1x8x256xf32>
    tpu.vector_store %arg6[%147, %c0_54, %c0_55], %150 {strides = array<i32>} : memref<28x8x256xf32, #tpu.memory_space<vmem>>, vector<1x8x256xf32>,
    %c8_i32 = arith.constant 8 : i32
    %151 = tpu.concatenate %144, %145 in 1 : vector<8x128xf32>, vector<8x128xf32> -> vector<8x256xf32>
    %cst_56 = arith.constant dense<0.000000e+00> : vector<8x256xf32>
    %152 = tpu.matmul %151, %0, %cst_56 {dimension_numbers = #tpu.dot_dimension_numbers<[1], [0], [0], [1], [0, 0, 1, 1], [], []>} : vector<8x256xf32>, vector<256x256xf32>, vector<8x256xf32> -> vector<8x256xf32>
    %153 = arith.index_cast %c8_i32 : i32 to index
    %c0_57 = arith.constant 0 : index
    %c0_58 = arith.constant 0 : index
    %154 = vector.load %arg0[%153, %c0_57, %c0_58] : memref<28x8x128xf32, #tpu.memory_space<vmem>>, vector<1x8x128xf32>
    %155 = vector.shape_cast %154 : vector<1x8x128xf32> to vector<8x128xf32>
    %156 = vector.extract_strided_slice %152 {offsets = [0, 0], sizes = [8, 128], strides = [1, 1]} : vector<8x256xf32> to vector<8x128xf32>
    %157 = arith.addf %155, %156 : vector<8x128xf32>
    %cst_59 = arith.constant dense<0.000000e+00> : vector<8x128xf32>
    %158 = tpu.matmul %157, %1, %cst_59 {dimension_numbers = #tpu.dot_dimension_numbers<[1], [0], [0], [1], [0, 0, 1, 1], [], []>} : vector<8x128xf32>, vector<128x128xf32>, vector<8x128xf32> -> vector<8x128xf32>
    %159 = vector.extract_strided_slice %152 {offsets = [0, 128], sizes = [8, 128], strides = [1, 1]} : vector<8x256xf32> to vector<8x128xf32>
    %160 = arith.addf %158, %159 : vector<8x128xf32>
    %161 = arith.addf %160, %4 : vector<8x128xf32>
    %162 = math.tanh %157 : vector<8x128xf32>
    %163 = math.tanh %161 : vector<8x128xf32>
    %164 = tpu.concatenate %162, %163 in 1 : vector<8x128xf32>, vector<8x128xf32> -> vector<8x256xf32>
    %165 = arith.index_cast %c8_i32 : i32 to index
    %c0_60 = arith.constant 0 : index
    %c0_61 = arith.constant 0 : index
    %166 = vector.load %arg6[%165, %c0_60, %c0_61] : memref<28x8x256xf32, #tpu.memory_space<vmem>>, vector<1x8x256xf32>
    %167 = vector.shape_cast %166 : vector<1x8x256xf32> to vector<8x256xf32>
    %168 = vector.shape_cast %164 : vector<8x256xf32> to vector<1x8x256xf32>
    tpu.vector_store %arg6[%165, %c0_60, %c0_61], %168 {strides = array<i32>} : memref<28x8x256xf32, #tpu.memory_space<vmem>>, vector<1x8x256xf32>,
    %c9_i32 = arith.constant 9 : i32
    %169 = tpu.concatenate %162, %163 in 1 : vector<8x128xf32>, vector<8x128xf32> -> vector<8x256xf32>
    %cst_62 = arith.constant dense<0.000000e+00> : vector<8x256xf32>
    %170 = tpu.matmul %169, %0, %cst_62 {dimension_numbers = #tpu.dot_dimension_numbers<[1], [0], [0], [1], [0, 0, 1, 1], [], []>} : vector<8x256xf32>, vector<256x256xf32>, vector<8x256xf32> -> vector<8x256xf32>
    %171 = arith.index_cast %c9_i32 : i32 to index
    %c0_63 = arith.constant 0 : index
    %c0_64 = arith.constant 0 : index
    %172 = vector.load %arg0[%171, %c0_63, %c0_64] : memref<28x8x128xf32, #tpu.memory_space<vmem>>, vector<1x8x128xf32>
    %173 = vector.shape_cast %172 : vector<1x8x128xf32> to vector<8x128xf32>
    %174 = vector.extract_strided_slice %170 {offsets = [0, 0], sizes = [8, 128], strides = [1, 1]} : vector<8x256xf32> to vector<8x128xf32>
    %175 = arith.addf %173, %174 : vector<8x128xf32>
    %cst_65 = arith.constant dense<0.000000e+00> : vector<8x128xf32>
    %176 = tpu.matmul %175, %1, %cst_65 {dimension_numbers = #tpu.dot_dimension_numbers<[1], [0], [0], [1], [0, 0, 1, 1], [], []>} : vector<8x128xf32>, vector<128x128xf32>, vector<8x128xf32> -> vector<8x128xf32>
    %177 = vector.extract_strided_slice %170 {offsets = [0, 128], sizes = [8, 128], strides = [1, 1]} : vector<8x256xf32> to vector<8x128xf32>
    %178 = arith.addf %176, %177 : vector<8x128xf32>
    %179 = arith.addf %178, %4 : vector<8x128xf32>
    %180 = math.tanh %175 : vector<8x128xf32>
    %181 = math.tanh %179 : vector<8x128xf32>
    %182 = tpu.concatenate %180, %181 in 1 : vector<8x128xf32>, vector<8x128xf32> -> vector<8x256xf32>
    %183 = arith.index_cast %c9_i32 : i32 to index
    %c0_66 = arith.constant 0 : index
    %c0_67 = arith.constant 0 : index
    %184 = vector.load %arg6[%183, %c0_66, %c0_67] : memref<28x8x256xf32, #tpu.memory_space<vmem>>, vector<1x8x256xf32>
    %185 = vector.shape_cast %184 : vector<1x8x256xf32> to vector<8x256xf32>
    %186 = vector.shape_cast %182 : vector<8x256xf32> to vector<1x8x256xf32>
    tpu.vector_store %arg6[%183, %c0_66, %c0_67], %186 {strides = array<i32>} : memref<28x8x256xf32, #tpu.memory_space<vmem>>, vector<1x8x256xf32>,
    %c10_i32 = arith.constant 10 : i32
    %187 = tpu.concatenate %180, %181 in 1 : vector<8x128xf32>, vector<8x128xf32> -> vector<8x256xf32>
    %cst_68 = arith.constant dense<0.000000e+00> : vector<8x256xf32>
    %188 = tpu.matmul %187, %0, %cst_68 {dimension_numbers = #tpu.dot_dimension_numbers<[1], [0], [0], [1], [0, 0, 1, 1], [], []>} : vector<8x256xf32>, vector<256x256xf32>, vector<8x256xf32> -> vector<8x256xf32>
    %189 = arith.index_cast %c10_i32 : i32 to index
    %c0_69 = arith.constant 0 : index
    %c0_70 = arith.constant 0 : index
    %190 = vector.load %arg0[%189, %c0_69, %c0_70] : memref<28x8x128xf32, #tpu.memory_space<vmem>>, vector<1x8x128xf32>
    %191 = vector.shape_cast %190 : vector<1x8x128xf32> to vector<8x128xf32>
    %192 = vector.extract_strided_slice %188 {offsets = [0, 0], sizes = [8, 128], strides = [1, 1]} : vector<8x256xf32> to vector<8x128xf32>
    %193 = arith.addf %191, %192 : vector<8x128xf32>
    %cst_71 = arith.constant dense<0.000000e+00> : vector<8x128xf32>
    %194 = tpu.matmul %193, %1, %cst_71 {dimension_numbers = #tpu.dot_dimension_numbers<[1], [0], [0], [1], [0, 0, 1, 1], [], []>} : vector<8x128xf32>, vector<128x128xf32>, vector<8x128xf32> -> vector<8x128xf32>
    %195 = vector.extract_strided_slice %188 {offsets = [0, 128], sizes = [8, 128], strides = [1, 1]} : vector<8x256xf32> to vector<8x128xf32>
    %196 = arith.addf %194, %195 : vector<8x128xf32>
    %197 = arith.addf %196, %4 : vector<8x128xf32>
    %198 = math.tanh %193 : vector<8x128xf32>
    %199 = math.tanh %197 : vector<8x128xf32>
    %200 = tpu.concatenate %198, %199 in 1 : vector<8x128xf32>, vector<8x128xf32> -> vector<8x256xf32>
    %201 = arith.index_cast %c10_i32 : i32 to index
    %c0_72 = arith.constant 0 : index
    %c0_73 = arith.constant 0 : index
    %202 = vector.load %arg6[%201, %c0_72, %c0_73] : memref<28x8x256xf32, #tpu.memory_space<vmem>>, vector<1x8x256xf32>
    %203 = vector.shape_cast %202 : vector<1x8x256xf32> to vector<8x256xf32>
    %204 = vector.shape_cast %200 : vector<8x256xf32> to vector<1x8x256xf32>
    tpu.vector_store %arg6[%201, %c0_72, %c0_73], %204 {strides = array<i32>} : memref<28x8x256xf32, #tpu.memory_space<vmem>>, vector<1x8x256xf32>,
    %c11_i32 = arith.constant 11 : i32
    %205 = tpu.concatenate %198, %199 in 1 : vector<8x128xf32>, vector<8x128xf32> -> vector<8x256xf32>
    %cst_74 = arith.constant dense<0.000000e+00> : vector<8x256xf32>
    %206 = tpu.matmul %205, %0, %cst_74 {dimension_numbers = #tpu.dot_dimension_numbers<[1], [0], [0], [1], [0, 0, 1, 1], [], []>} : vector<8x256xf32>, vector<256x256xf32>, vector<8x256xf32> -> vector<8x256xf32>
    %207 = arith.index_cast %c11_i32 : i32 to index
    %c0_75 = arith.constant 0 : index
    %c0_76 = arith.constant 0 : index
    %208 = vector.load %arg0[%207, %c0_75, %c0_76] : memref<28x8x128xf32, #tpu.memory_space<vmem>>, vector<1x8x128xf32>
    %209 = vector.shape_cast %208 : vector<1x8x128xf32> to vector<8x128xf32>
    %210 = vector.extract_strided_slice %206 {offsets = [0, 0], sizes = [8, 128], strides = [1, 1]} : vector<8x256xf32> to vector<8x128xf32>
    %211 = arith.addf %209, %210 : vector<8x128xf32>
    %cst_77 = arith.constant dense<0.000000e+00> : vector<8x128xf32>
    %212 = tpu.matmul %211, %1, %cst_77 {dimension_numbers = #tpu.dot_dimension_numbers<[1], [0], [0], [1], [0, 0, 1, 1], [], []>} : vector<8x128xf32>, vector<128x128xf32>, vector<8x128xf32> -> vector<8x128xf32>
    %213 = vector.extract_strided_slice %206 {offsets = [0, 128], sizes = [8, 128], strides = [1, 1]} : vector<8x256xf32> to vector<8x128xf32>
    %214 = arith.addf %212, %213 : vector<8x128xf32>
    %215 = arith.addf %214, %4 : vector<8x128xf32>
    %216 = math.tanh %211 : vector<8x128xf32>
    %217 = math.tanh %215 : vector<8x128xf32>
    %218 = tpu.concatenate %216, %217 in 1 : vector<8x128xf32>, vector<8x128xf32> -> vector<8x256xf32>
    %219 = arith.index_cast %c11_i32 : i32 to index
    %c0_78 = arith.constant 0 : index
    %c0_79 = arith.constant 0 : index
    %220 = vector.load %arg6[%219, %c0_78, %c0_79] : memref<28x8x256xf32, #tpu.memory_space<vmem>>, vector<1x8x256xf32>
    %221 = vector.shape_cast %220 : vector<1x8x256xf32> to vector<8x256xf32>
    %222 = vector.shape_cast %218 : vector<8x256xf32> to vector<1x8x256xf32>
    tpu.vector_store %arg6[%219, %c0_78, %c0_79], %222 {strides = array<i32>} : memref<28x8x256xf32, #tpu.memory_space<vmem>>, vector<1x8x256xf32>,
    %c12_i32 = arith.constant 12 : i32
    %223 = tpu.concatenate %216, %217 in 1 : vector<8x128xf32>, vector<8x128xf32> -> vector<8x256xf32>
    %cst_80 = arith.constant dense<0.000000e+00> : vector<8x256xf32>
    %224 = tpu.matmul %223, %0, %cst_80 {dimension_numbers = #tpu.dot_dimension_numbers<[1], [0], [0], [1], [0, 0, 1, 1], [], []>} : vector<8x256xf32>, vector<256x256xf32>, vector<8x256xf32> -> vector<8x256xf32>
    %225 = arith.index_cast %c12_i32 : i32 to index
    %c0_81 = arith.constant 0 : index
    %c0_82 = arith.constant 0 : index
    %226 = vector.load %arg0[%225, %c0_81, %c0_82] : memref<28x8x128xf32, #tpu.memory_space<vmem>>, vector<1x8x128xf32>
    %227 = vector.shape_cast %226 : vector<1x8x128xf32> to vector<8x128xf32>
    %228 = vector.extract_strided_slice %224 {offsets = [0, 0], sizes = [8, 128], strides = [1, 1]} : vector<8x256xf32> to vector<8x128xf32>
    %229 = arith.addf %227, %228 : vector<8x128xf32>
    %cst_83 = arith.constant dense<0.000000e+00> : vector<8x128xf32>
    %230 = tpu.matmul %229, %1, %cst_83 {dimension_numbers = #tpu.dot_dimension_numbers<[1], [0], [0], [1], [0, 0, 1, 1], [], []>} : vector<8x128xf32>, vector<128x128xf32>, vector<8x128xf32> -> vector<8x128xf32>
    %231 = vector.extract_strided_slice %224 {offsets = [0, 128], sizes = [8, 128], strides = [1, 1]} : vector<8x256xf32> to vector<8x128xf32>
    %232 = arith.addf %230, %231 : vector<8x128xf32>
    %233 = arith.addf %232, %4 : vector<8x128xf32>
    %234 = math.tanh %229 : vector<8x128xf32>
    %235 = math.tanh %233 : vector<8x128xf32>
    %236 = tpu.concatenate %234, %235 in 1 : vector<8x128xf32>, vector<8x128xf32> -> vector<8x256xf32>
    %237 = arith.index_cast %c12_i32 : i32 to index
    %c0_84 = arith.constant 0 : index
    %c0_85 = arith.constant 0 : index
    %238 = vector.load %arg6[%237, %c0_84, %c0_85] : memref<28x8x256xf32, #tpu.memory_space<vmem>>, vector<1x8x256xf32>
    %239 = vector.shape_cast %238 : vector<1x8x256xf32> to vector<8x256xf32>
    %240 = vector.shape_cast %236 : vector<8x256xf32> to vector<1x8x256xf32>
    tpu.vector_store %arg6[%237, %c0_84, %c0_85], %240 {strides = array<i32>} : memref<28x8x256xf32, #tpu.memory_space<vmem>>, vector<1x8x256xf32>,
    %c13_i32 = arith.constant 13 : i32
    %241 = tpu.concatenate %234, %235 in 1 : vector<8x128xf32>, vector<8x128xf32> -> vector<8x256xf32>
    %cst_86 = arith.constant dense<0.000000e+00> : vector<8x256xf32>
    %242 = tpu.matmul %241, %0, %cst_86 {dimension_numbers = #tpu.dot_dimension_numbers<[1], [0], [0], [1], [0, 0, 1, 1], [], []>} : vector<8x256xf32>, vector<256x256xf32>, vector<8x256xf32> -> vector<8x256xf32>
    %243 = arith.index_cast %c13_i32 : i32 to index
    %c0_87 = arith.constant 0 : index
    %c0_88 = arith.constant 0 : index
    %244 = vector.load %arg0[%243, %c0_87, %c0_88] : memref<28x8x128xf32, #tpu.memory_space<vmem>>, vector<1x8x128xf32>
    %245 = vector.shape_cast %244 : vector<1x8x128xf32> to vector<8x128xf32>
    %246 = vector.extract_strided_slice %242 {offsets = [0, 0], sizes = [8, 128], strides = [1, 1]} : vector<8x256xf32> to vector<8x128xf32>
    %247 = arith.addf %245, %246 : vector<8x128xf32>
    %cst_89 = arith.constant dense<0.000000e+00> : vector<8x128xf32>
    %248 = tpu.matmul %247, %1, %cst_89 {dimension_numbers = #tpu.dot_dimension_numbers<[1], [0], [0], [1], [0, 0, 1, 1], [], []>} : vector<8x128xf32>, vector<128x128xf32>, vector<8x128xf32> -> vector<8x128xf32>
    %249 = vector.extract_strided_slice %242 {offsets = [0, 128], sizes = [8, 128], strides = [1, 1]} : vector<8x256xf32> to vector<8x128xf32>
    %250 = arith.addf %248, %249 : vector<8x128xf32>
    %251 = arith.addf %250, %4 : vector<8x128xf32>
    %252 = math.tanh %247 : vector<8x128xf32>
    %253 = math.tanh %251 : vector<8x128xf32>
    %254 = tpu.concatenate %252, %253 in 1 : vector<8x128xf32>, vector<8x128xf32> -> vector<8x256xf32>
    %255 = arith.index_cast %c13_i32 : i32 to index
    %c0_90 = arith.constant 0 : index
    %c0_91 = arith.constant 0 : index
    %256 = vector.load %arg6[%255, %c0_90, %c0_91] : memref<28x8x256xf32, #tpu.memory_space<vmem>>, vector<1x8x256xf32>
    %257 = vector.shape_cast %256 : vector<1x8x256xf32> to vector<8x256xf32>
    %258 = vector.shape_cast %254 : vector<8x256xf32> to vector<1x8x256xf32>
    tpu.vector_store %arg6[%255, %c0_90, %c0_91], %258 {strides = array<i32>} : memref<28x8x256xf32, #tpu.memory_space<vmem>>, vector<1x8x256xf32>,
    %c14_i32 = arith.constant 14 : i32
    %259 = tpu.concatenate %252, %253 in 1 : vector<8x128xf32>, vector<8x128xf32> -> vector<8x256xf32>
    %cst_92 = arith.constant dense<0.000000e+00> : vector<8x256xf32>
    %260 = tpu.matmul %259, %0, %cst_92 {dimension_numbers = #tpu.dot_dimension_numbers<[1], [0], [0], [1], [0, 0, 1, 1], [], []>} : vector<8x256xf32>, vector<256x256xf32>, vector<8x256xf32> -> vector<8x256xf32>
    %261 = arith.index_cast %c14_i32 : i32 to index
    %c0_93 = arith.constant 0 : index
    %c0_94 = arith.constant 0 : index
    %262 = vector.load %arg0[%261, %c0_93, %c0_94] : memref<28x8x128xf32, #tpu.memory_space<vmem>>, vector<1x8x128xf32>
    %263 = vector.shape_cast %262 : vector<1x8x128xf32> to vector<8x128xf32>
    %264 = vector.extract_strided_slice %260 {offsets = [0, 0], sizes = [8, 128], strides = [1, 1]} : vector<8x256xf32> to vector<8x128xf32>
    %265 = arith.addf %263, %264 : vector<8x128xf32>
    %cst_95 = arith.constant dense<0.000000e+00> : vector<8x128xf32>
    %266 = tpu.matmul %265, %1, %cst_95 {dimension_numbers = #tpu.dot_dimension_numbers<[1], [0], [0], [1], [0, 0, 1, 1], [], []>} : vector<8x128xf32>, vector<128x128xf32>, vector<8x128xf32> -> vector<8x128xf32>
    %267 = vector.extract_strided_slice %260 {offsets = [0, 128], sizes = [8, 128], strides = [1, 1]} : vector<8x256xf32> to vector<8x128xf32>
    %268 = arith.addf %266, %267 : vector<8x128xf32>
    %269 = arith.addf %268, %4 : vector<8x128xf32>
    %270 = math.tanh %265 : vector<8x128xf32>
    %271 = math.tanh %269 : vector<8x128xf32>
    %272 = tpu.concatenate %270, %271 in 1 : vector<8x128xf32>, vector<8x128xf32> -> vector<8x256xf32>
    %273 = arith.index_cast %c14_i32 : i32 to index
    %c0_96 = arith.constant 0 : index
    %c0_97 = arith.constant 0 : index
    %274 = vector.load %arg6[%273, %c0_96, %c0_97] : memref<28x8x256xf32, #tpu.memory_space<vmem>>, vector<1x8x256xf32>
    %275 = vector.shape_cast %274 : vector<1x8x256xf32> to vector<8x256xf32>
    %276 = vector.shape_cast %272 : vector<8x256xf32> to vector<1x8x256xf32>
    tpu.vector_store %arg6[%273, %c0_96, %c0_97], %276 {strides = array<i32>} : memref<28x8x256xf32, #tpu.memory_space<vmem>>, vector<1x8x256xf32>,
    %c15_i32 = arith.constant 15 : i32
    %277 = tpu.concatenate %270, %271 in 1 : vector<8x128xf32>, vector<8x128xf32> -> vector<8x256xf32>
    %cst_98 = arith.constant dense<0.000000e+00> : vector<8x256xf32>
    %278 = tpu.matmul %277, %0, %cst_98 {dimension_numbers = #tpu.dot_dimension_numbers<[1], [0], [0], [1], [0, 0, 1, 1], [], []>} : vector<8x256xf32>, vector<256x256xf32>, vector<8x256xf32> -> vector<8x256xf32>
    %279 = arith.index_cast %c15_i32 : i32 to index
    %c0_99 = arith.constant 0 : index
    %c0_100 = arith.constant 0 : index
    %280 = vector.load %arg0[%279, %c0_99, %c0_100] : memref<28x8x128xf32, #tpu.memory_space<vmem>>, vector<1x8x128xf32>
    %281 = vector.shape_cast %280 : vector<1x8x128xf32> to vector<8x128xf32>
    %282 = vector.extract_strided_slice %278 {offsets = [0, 0], sizes = [8, 128], strides = [1, 1]} : vector<8x256xf32> to vector<8x128xf32>
    %283 = arith.addf %281, %282 : vector<8x128xf32>
    %cst_101 = arith.constant dense<0.000000e+00> : vector<8x128xf32>
    %284 = tpu.matmul %283, %1, %cst_101 {dimension_numbers = #tpu.dot_dimension_numbers<[1], [0], [0], [1], [0, 0, 1, 1], [], []>} : vector<8x128xf32>, vector<128x128xf32>, vector<8x128xf32> -> vector<8x128xf32>
    %285 = vector.extract_strided_slice %278 {offsets = [0, 128], sizes = [8, 128], strides = [1, 1]} : vector<8x256xf32> to vector<8x128xf32>
    %286 = arith.addf %284, %285 : vector<8x128xf32>
    %287 = arith.addf %286, %4 : vector<8x128xf32>
    %288 = math.tanh %283 : vector<8x128xf32>
    %289 = math.tanh %287 : vector<8x128xf32>
    %290 = tpu.concatenate %288, %289 in 1 : vector<8x128xf32>, vector<8x128xf32> -> vector<8x256xf32>
    %291 = arith.index_cast %c15_i32 : i32 to index
    %c0_102 = arith.constant 0 : index
    %c0_103 = arith.constant 0 : index
    %292 = vector.load %arg6[%291, %c0_102, %c0_103] : memref<28x8x256xf32, #tpu.memory_space<vmem>>, vector<1x8x256xf32>
    %293 = vector.shape_cast %292 : vector<1x8x256xf32> to vector<8x256xf32>
    %294 = vector.shape_cast %290 : vector<8x256xf32> to vector<1x8x256xf32>
    tpu.vector_store %arg6[%291, %c0_102, %c0_103], %294 {strides = array<i32>} : memref<28x8x256xf32, #tpu.memory_space<vmem>>, vector<1x8x256xf32>,
    %c16_i32 = arith.constant 16 : i32
    %295 = tpu.concatenate %288, %289 in 1 : vector<8x128xf32>, vector<8x128xf32> -> vector<8x256xf32>
    %cst_104 = arith.constant dense<0.000000e+00> : vector<8x256xf32>
    %296 = tpu.matmul %295, %0, %cst_104 {dimension_numbers = #tpu.dot_dimension_numbers<[1], [0], [0], [1], [0, 0, 1, 1], [], []>} : vector<8x256xf32>, vector<256x256xf32>, vector<8x256xf32> -> vector<8x256xf32>
    %297 = arith.index_cast %c16_i32 : i32 to index
    %c0_105 = arith.constant 0 : index
    %c0_106 = arith.constant 0 : index
    %298 = vector.load %arg0[%297, %c0_105, %c0_106] : memref<28x8x128xf32, #tpu.memory_space<vmem>>, vector<1x8x128xf32>
    %299 = vector.shape_cast %298 : vector<1x8x128xf32> to vector<8x128xf32>
    %300 = vector.extract_strided_slice %296 {offsets = [0, 0], sizes = [8, 128], strides = [1, 1]} : vector<8x256xf32> to vector<8x128xf32>
    %301 = arith.addf %299, %300 : vector<8x128xf32>
    %cst_107 = arith.constant dense<0.000000e+00> : vector<8x128xf32>
    %302 = tpu.matmul %301, %1, %cst_107 {dimension_numbers = #tpu.dot_dimension_numbers<[1], [0], [0], [1], [0, 0, 1, 1], [], []>} : vector<8x128xf32>, vector<128x128xf32>, vector<8x128xf32> -> vector<8x128xf32>
    %303 = vector.extract_strided_slice %296 {offsets = [0, 128], sizes = [8, 128], strides = [1, 1]} : vector<8x256xf32> to vector<8x128xf32>
    %304 = arith.addf %302, %303 : vector<8x128xf32>
    %305 = arith.addf %304, %4 : vector<8x128xf32>
    %306 = math.tanh %301 : vector<8x128xf32>
    %307 = math.tanh %305 : vector<8x128xf32>
    %308 = tpu.concatenate %306, %307 in 1 : vector<8x128xf32>, vector<8x128xf32> -> vector<8x256xf32>
    %309 = arith.index_cast %c16_i32 : i32 to index
    %c0_108 = arith.constant 0 : index
    %c0_109 = arith.constant 0 : index
    %310 = vector.load %arg6[%309, %c0_108, %c0_109] : memref<28x8x256xf32, #tpu.memory_space<vmem>>, vector<1x8x256xf32>
    %311 = vector.shape_cast %310 : vector<1x8x256xf32> to vector<8x256xf32>
    %312 = vector.shape_cast %308 : vector<8x256xf32> to vector<1x8x256xf32>
    tpu.vector_store %arg6[%309, %c0_108, %c0_109], %312 {strides = array<i32>} : memref<28x8x256xf32, #tpu.memory_space<vmem>>, vector<1x8x256xf32>,
    %c17_i32 = arith.constant 17 : i32
    %313 = tpu.concatenate %306, %307 in 1 : vector<8x128xf32>, vector<8x128xf32> -> vector<8x256xf32>
    %cst_110 = arith.constant dense<0.000000e+00> : vector<8x256xf32>
    %314 = tpu.matmul %313, %0, %cst_110 {dimension_numbers = #tpu.dot_dimension_numbers<[1], [0], [0], [1], [0, 0, 1, 1], [], []>} : vector<8x256xf32>, vector<256x256xf32>, vector<8x256xf32> -> vector<8x256xf32>
    %315 = arith.index_cast %c17_i32 : i32 to index
    %c0_111 = arith.constant 0 : index
    %c0_112 = arith.constant 0 : index
    %316 = vector.load %arg0[%315, %c0_111, %c0_112] : memref<28x8x128xf32, #tpu.memory_space<vmem>>, vector<1x8x128xf32>
    %317 = vector.shape_cast %316 : vector<1x8x128xf32> to vector<8x128xf32>
    %318 = vector.extract_strided_slice %314 {offsets = [0, 0], sizes = [8, 128], strides = [1, 1]} : vector<8x256xf32> to vector<8x128xf32>
    %319 = arith.addf %317, %318 : vector<8x128xf32>
    %cst_113 = arith.constant dense<0.000000e+00> : vector<8x128xf32>
    %320 = tpu.matmul %319, %1, %cst_113 {dimension_numbers = #tpu.dot_dimension_numbers<[1], [0], [0], [1], [0, 0, 1, 1], [], []>} : vector<8x128xf32>, vector<128x128xf32>, vector<8x128xf32> -> vector<8x128xf32>
    %321 = vector.extract_strided_slice %314 {offsets = [0, 128], sizes = [8, 128], strides = [1, 1]} : vector<8x256xf32> to vector<8x128xf32>
    %322 = arith.addf %320, %321 : vector<8x128xf32>
    %323 = arith.addf %322, %4 : vector<8x128xf32>
    %324 = math.tanh %319 : vector<8x128xf32>
    %325 = math.tanh %323 : vector<8x128xf32>
    %326 = tpu.concatenate %324, %325 in 1 : vector<8x128xf32>, vector<8x128xf32> -> vector<8x256xf32>
    %327 = arith.index_cast %c17_i32 : i32 to index
    %c0_114 = arith.constant 0 : index
    %c0_115 = arith.constant 0 : index
    %328 = vector.load %arg6[%327, %c0_114, %c0_115] : memref<28x8x256xf32, #tpu.memory_space<vmem>>, vector<1x8x256xf32>
    %329 = vector.shape_cast %328 : vector<1x8x256xf32> to vector<8x256xf32>
    %330 = vector.shape_cast %326 : vector<8x256xf32> to vector<1x8x256xf32>
    tpu.vector_store %arg6[%327, %c0_114, %c0_115], %330 {strides = array<i32>} : memref<28x8x256xf32, #tpu.memory_space<vmem>>, vector<1x8x256xf32>,
    %c18_i32 = arith.constant 18 : i32
    %331 = tpu.concatenate %324, %325 in 1 : vector<8x128xf32>, vector<8x128xf32> -> vector<8x256xf32>
    %cst_116 = arith.constant dense<0.000000e+00> : vector<8x256xf32>
    %332 = tpu.matmul %331, %0, %cst_116 {dimension_numbers = #tpu.dot_dimension_numbers<[1], [0], [0], [1], [0, 0, 1, 1], [], []>} : vector<8x256xf32>, vector<256x256xf32>, vector<8x256xf32> -> vector<8x256xf32>
    %333 = arith.index_cast %c18_i32 : i32 to index
    %c0_117 = arith.constant 0 : index
    %c0_118 = arith.constant 0 : index
    %334 = vector.load %arg0[%333, %c0_117, %c0_118] : memref<28x8x128xf32, #tpu.memory_space<vmem>>, vector<1x8x128xf32>
    %335 = vector.shape_cast %334 : vector<1x8x128xf32> to vector<8x128xf32>
    %336 = vector.extract_strided_slice %332 {offsets = [0, 0], sizes = [8, 128], strides = [1, 1]} : vector<8x256xf32> to vector<8x128xf32>
    %337 = arith.addf %335, %336 : vector<8x128xf32>
    %cst_119 = arith.constant dense<0.000000e+00> : vector<8x128xf32>
    %338 = tpu.matmul %337, %1, %cst_119 {dimension_numbers = #tpu.dot_dimension_numbers<[1], [0], [0], [1], [0, 0, 1, 1], [], []>} : vector<8x128xf32>, vector<128x128xf32>, vector<8x128xf32> -> vector<8x128xf32>
    %339 = vector.extract_strided_slice %332 {offsets = [0, 128], sizes = [8, 128], strides = [1, 1]} : vector<8x256xf32> to vector<8x128xf32>
    %340 = arith.addf %338, %339 : vector<8x128xf32>
    %341 = arith.addf %340, %4 : vector<8x128xf32>
    %342 = math.tanh %337 : vector<8x128xf32>
    %343 = math.tanh %341 : vector<8x128xf32>
    %344 = tpu.concatenate %342, %343 in 1 : vector<8x128xf32>, vector<8x128xf32> -> vector<8x256xf32>
    %345 = arith.index_cast %c18_i32 : i32 to index
    %c0_120 = arith.constant 0 : index
    %c0_121 = arith.constant 0 : index
    %346 = vector.load %arg6[%345, %c0_120, %c0_121] : memref<28x8x256xf32, #tpu.memory_space<vmem>>, vector<1x8x256xf32>
    %347 = vector.shape_cast %346 : vector<1x8x256xf32> to vector<8x256xf32>
    %348 = vector.shape_cast %344 : vector<8x256xf32> to vector<1x8x256xf32>
    tpu.vector_store %arg6[%345, %c0_120, %c0_121], %348 {strides = array<i32>} : memref<28x8x256xf32, #tpu.memory_space<vmem>>, vector<1x8x256xf32>,
    %c19_i32 = arith.constant 19 : i32
    %349 = tpu.concatenate %342, %343 in 1 : vector<8x128xf32>, vector<8x128xf32> -> vector<8x256xf32>
    %cst_122 = arith.constant dense<0.000000e+00> : vector<8x256xf32>
    %350 = tpu.matmul %349, %0, %cst_122 {dimension_numbers = #tpu.dot_dimension_numbers<[1], [0], [0], [1], [0, 0, 1, 1], [], []>} : vector<8x256xf32>, vector<256x256xf32>, vector<8x256xf32> -> vector<8x256xf32>
    %351 = arith.index_cast %c19_i32 : i32 to index
    %c0_123 = arith.constant 0 : index
    %c0_124 = arith.constant 0 : index
    %352 = vector.load %arg0[%351, %c0_123, %c0_124] : memref<28x8x128xf32, #tpu.memory_space<vmem>>, vector<1x8x128xf32>
    %353 = vector.shape_cast %352 : vector<1x8x128xf32> to vector<8x128xf32>
    %354 = vector.extract_strided_slice %350 {offsets = [0, 0], sizes = [8, 128], strides = [1, 1]} : vector<8x256xf32> to vector<8x128xf32>
    %355 = arith.addf %353, %354 : vector<8x128xf32>
    %cst_125 = arith.constant dense<0.000000e+00> : vector<8x128xf32>
    %356 = tpu.matmul %355, %1, %cst_125 {dimension_numbers = #tpu.dot_dimension_numbers<[1], [0], [0], [1], [0, 0, 1, 1], [], []>} : vector<8x128xf32>, vector<128x128xf32>, vector<8x128xf32> -> vector<8x128xf32>
    %357 = vector.extract_strided_slice %350 {offsets = [0, 128], sizes = [8, 128], strides = [1, 1]} : vector<8x256xf32> to vector<8x128xf32>
    %358 = arith.addf %356, %357 : vector<8x128xf32>
    %359 = arith.addf %358, %4 : vector<8x128xf32>
    %360 = math.tanh %355 : vector<8x128xf32>
    %361 = math.tanh %359 : vector<8x128xf32>
    %362 = tpu.concatenate %360, %361 in 1 : vector<8x128xf32>, vector<8x128xf32> -> vector<8x256xf32>
    %363 = arith.index_cast %c19_i32 : i32 to index
    %c0_126 = arith.constant 0 : index
    %c0_127 = arith.constant 0 : index
    %364 = vector.load %arg6[%363, %c0_126, %c0_127] : memref<28x8x256xf32, #tpu.memory_space<vmem>>, vector<1x8x256xf32>
    %365 = vector.shape_cast %364 : vector<1x8x256xf32> to vector<8x256xf32>
    %366 = vector.shape_cast %362 : vector<8x256xf32> to vector<1x8x256xf32>
    tpu.vector_store %arg6[%363, %c0_126, %c0_127], %366 {strides = array<i32>} : memref<28x8x256xf32, #tpu.memory_space<vmem>>, vector<1x8x256xf32>,
    %c20_i32 = arith.constant 20 : i32
    %367 = tpu.concatenate %360, %361 in 1 : vector<8x128xf32>, vector<8x128xf32> -> vector<8x256xf32>
    %cst_128 = arith.constant dense<0.000000e+00> : vector<8x256xf32>
    %368 = tpu.matmul %367, %0, %cst_128 {dimension_numbers = #tpu.dot_dimension_numbers<[1], [0], [0], [1], [0, 0, 1, 1], [], []>} : vector<8x256xf32>, vector<256x256xf32>, vector<8x256xf32> -> vector<8x256xf32>
    %369 = arith.index_cast %c20_i32 : i32 to index
    %c0_129 = arith.constant 0 : index
    %c0_130 = arith.constant 0 : index
    %370 = vector.load %arg0[%369, %c0_129, %c0_130] : memref<28x8x128xf32, #tpu.memory_space<vmem>>, vector<1x8x128xf32>
    %371 = vector.shape_cast %370 : vector<1x8x128xf32> to vector<8x128xf32>
    %372 = vector.extract_strided_slice %368 {offsets = [0, 0], sizes = [8, 128], strides = [1, 1]} : vector<8x256xf32> to vector<8x128xf32>
    %373 = arith.addf %371, %372 : vector<8x128xf32>
    %cst_131 = arith.constant dense<0.000000e+00> : vector<8x128xf32>
    %374 = tpu.matmul %373, %1, %cst_131 {dimension_numbers = #tpu.dot_dimension_numbers<[1], [0], [0], [1], [0, 0, 1, 1], [], []>} : vector<8x128xf32>, vector<128x128xf32>, vector<8x128xf32> -> vector<8x128xf32>
    %375 = vector.extract_strided_slice %368 {offsets = [0, 128], sizes = [8, 128], strides = [1, 1]} : vector<8x256xf32> to vector<8x128xf32>
    %376 = arith.addf %374, %375 : vector<8x128xf32>
    %377 = arith.addf %376, %4 : vector<8x128xf32>
    %378 = math.tanh %373 : vector<8x128xf32>
    %379 = math.tanh %377 : vector<8x128xf32>
    %380 = tpu.concatenate %378, %379 in 1 : vector<8x128xf32>, vector<8x128xf32> -> vector<8x256xf32>
    %381 = arith.index_cast %c20_i32 : i32 to index
    %c0_132 = arith.constant 0 : index
    %c0_133 = arith.constant 0 : index
    %382 = vector.load %arg6[%381, %c0_132, %c0_133] : memref<28x8x256xf32, #tpu.memory_space<vmem>>, vector<1x8x256xf32>
    %383 = vector.shape_cast %382 : vector<1x8x256xf32> to vector<8x256xf32>
    %384 = vector.shape_cast %380 : vector<8x256xf32> to vector<1x8x256xf32>
    tpu.vector_store %arg6[%381, %c0_132, %c0_133], %384 {strides = array<i32>} : memref<28x8x256xf32, #tpu.memory_space<vmem>>, vector<1x8x256xf32>,
    %c21_i32 = arith.constant 21 : i32
    %385 = tpu.concatenate %378, %379 in 1 : vector<8x128xf32>, vector<8x128xf32> -> vector<8x256xf32>
    %cst_134 = arith.constant dense<0.000000e+00> : vector<8x256xf32>
    %386 = tpu.matmul %385, %0, %cst_134 {dimension_numbers = #tpu.dot_dimension_numbers<[1], [0], [0], [1], [0, 0, 1, 1], [], []>} : vector<8x256xf32>, vector<256x256xf32>, vector<8x256xf32> -> vector<8x256xf32>
    %387 = arith.index_cast %c21_i32 : i32 to index
    %c0_135 = arith.constant 0 : index
    %c0_136 = arith.constant 0 : index
    %388 = vector.load %arg0[%387, %c0_135, %c0_136] : memref<28x8x128xf32, #tpu.memory_space<vmem>>, vector<1x8x128xf32>
    %389 = vector.shape_cast %388 : vector<1x8x128xf32> to vector<8x128xf32>
    %390 = vector.extract_strided_slice %386 {offsets = [0, 0], sizes = [8, 128], strides = [1, 1]} : vector<8x256xf32> to vector<8x128xf32>
    %391 = arith.addf %389, %390 : vector<8x128xf32>
    %cst_137 = arith.constant dense<0.000000e+00> : vector<8x128xf32>
    %392 = tpu.matmul %391, %1, %cst_137 {dimension_numbers = #tpu.dot_dimension_numbers<[1], [0], [0], [1], [0, 0, 1, 1], [], []>} : vector<8x128xf32>, vector<128x128xf32>, vector<8x128xf32> -> vector<8x128xf32>
    %393 = vector.extract_strided_slice %386 {offsets = [0, 128], sizes = [8, 128], strides = [1, 1]} : vector<8x256xf32> to vector<8x128xf32>
    %394 = arith.addf %392, %393 : vector<8x128xf32>
    %395 = arith.addf %394, %4 : vector<8x128xf32>
    %396 = math.tanh %391 : vector<8x128xf32>
    %397 = math.tanh %395 : vector<8x128xf32>
    %398 = tpu.concatenate %396, %397 in 1 : vector<8x128xf32>, vector<8x128xf32> -> vector<8x256xf32>
    %399 = arith.index_cast %c21_i32 : i32 to index
    %c0_138 = arith.constant 0 : index
    %c0_139 = arith.constant 0 : index
    %400 = vector.load %arg6[%399, %c0_138, %c0_139] : memref<28x8x256xf32, #tpu.memory_space<vmem>>, vector<1x8x256xf32>
    %401 = vector.shape_cast %400 : vector<1x8x256xf32> to vector<8x256xf32>
    %402 = vector.shape_cast %398 : vector<8x256xf32> to vector<1x8x256xf32>
    tpu.vector_store %arg6[%399, %c0_138, %c0_139], %402 {strides = array<i32>} : memref<28x8x256xf32, #tpu.memory_space<vmem>>, vector<1x8x256xf32>,
    %c22_i32 = arith.constant 22 : i32
    %403 = tpu.concatenate %396, %397 in 1 : vector<8x128xf32>, vector<8x128xf32> -> vector<8x256xf32>
    %cst_140 = arith.constant dense<0.000000e+00> : vector<8x256xf32>
    %404 = tpu.matmul %403, %0, %cst_140 {dimension_numbers = #tpu.dot_dimension_numbers<[1], [0], [0], [1], [0, 0, 1, 1], [], []>} : vector<8x256xf32>, vector<256x256xf32>, vector<8x256xf32> -> vector<8x256xf32>
    %405 = arith.index_cast %c22_i32 : i32 to index
    %c0_141 = arith.constant 0 : index
    %c0_142 = arith.constant 0 : index
    %406 = vector.load %arg0[%405, %c0_141, %c0_142] : memref<28x8x128xf32, #tpu.memory_space<vmem>>, vector<1x8x128xf32>
    %407 = vector.shape_cast %406 : vector<1x8x128xf32> to vector<8x128xf32>
    %408 = vector.extract_strided_slice %404 {offsets = [0, 0], sizes = [8, 128], strides = [1, 1]} : vector<8x256xf32> to vector<8x128xf32>
    %409 = arith.addf %407, %408 : vector<8x128xf32>
    %cst_143 = arith.constant dense<0.000000e+00> : vector<8x128xf32>
    %410 = tpu.matmul %409, %1, %cst_143 {dimension_numbers = #tpu.dot_dimension_numbers<[1], [0], [0], [1], [0, 0, 1, 1], [], []>} : vector<8x128xf32>, vector<128x128xf32>, vector<8x128xf32> -> vector<8x128xf32>
    %411 = vector.extract_strided_slice %404 {offsets = [0, 128], sizes = [8, 128], strides = [1, 1]} : vector<8x256xf32> to vector<8x128xf32>
    %412 = arith.addf %410, %411 : vector<8x128xf32>
    %413 = arith.addf %412, %4 : vector<8x128xf32>
    %414 = math.tanh %409 : vector<8x128xf32>
    %415 = math.tanh %413 : vector<8x128xf32>
    %416 = tpu.concatenate %414, %415 in 1 : vector<8x128xf32>, vector<8x128xf32> -> vector<8x256xf32>
    %417 = arith.index_cast %c22_i32 : i32 to index
    %c0_144 = arith.constant 0 : index
    %c0_145 = arith.constant 0 : index
    %418 = vector.load %arg6[%417, %c0_144, %c0_145] : memref<28x8x256xf32, #tpu.memory_space<vmem>>, vector<1x8x256xf32>
    %419 = vector.shape_cast %418 : vector<1x8x256xf32> to vector<8x256xf32>
    %420 = vector.shape_cast %416 : vector<8x256xf32> to vector<1x8x256xf32>
    tpu.vector_store %arg6[%417, %c0_144, %c0_145], %420 {strides = array<i32>} : memref<28x8x256xf32, #tpu.memory_space<vmem>>, vector<1x8x256xf32>,
    %c23_i32 = arith.constant 23 : i32
    %421 = tpu.concatenate %414, %415 in 1 : vector<8x128xf32>, vector<8x128xf32> -> vector<8x256xf32>
    %cst_146 = arith.constant dense<0.000000e+00> : vector<8x256xf32>
    %422 = tpu.matmul %421, %0, %cst_146 {dimension_numbers = #tpu.dot_dimension_numbers<[1], [0], [0], [1], [0, 0, 1, 1], [], []>} : vector<8x256xf32>, vector<256x256xf32>, vector<8x256xf32> -> vector<8x256xf32>
    %423 = arith.index_cast %c23_i32 : i32 to index
    %c0_147 = arith.constant 0 : index
    %c0_148 = arith.constant 0 : index
    %424 = vector.load %arg0[%423, %c0_147, %c0_148] : memref<28x8x128xf32, #tpu.memory_space<vmem>>, vector<1x8x128xf32>
    %425 = vector.shape_cast %424 : vector<1x8x128xf32> to vector<8x128xf32>
    %426 = vector.extract_strided_slice %422 {offsets = [0, 0], sizes = [8, 128], strides = [1, 1]} : vector<8x256xf32> to vector<8x128xf32>
    %427 = arith.addf %425, %426 : vector<8x128xf32>
    %cst_149 = arith.constant dense<0.000000e+00> : vector<8x128xf32>
    %428 = tpu.matmul %427, %1, %cst_149 {dimension_numbers = #tpu.dot_dimension_numbers<[1], [0], [0], [1], [0, 0, 1, 1], [], []>} : vector<8x128xf32>, vector<128x128xf32>, vector<8x128xf32> -> vector<8x128xf32>
    %429 = vector.extract_strided_slice %422 {offsets = [0, 128], sizes = [8, 128], strides = [1, 1]} : vector<8x256xf32> to vector<8x128xf32>
    %430 = arith.addf %428, %429 : vector<8x128xf32>
    %431 = arith.addf %430, %4 : vector<8x128xf32>
    %432 = math.tanh %427 : vector<8x128xf32>
    %433 = math.tanh %431 : vector<8x128xf32>
    %434 = tpu.concatenate %432, %433 in 1 : vector<8x128xf32>, vector<8x128xf32> -> vector<8x256xf32>
    %435 = arith.index_cast %c23_i32 : i32 to index
    %c0_150 = arith.constant 0 : index
    %c0_151 = arith.constant 0 : index
    %436 = vector.load %arg6[%435, %c0_150, %c0_151] : memref<28x8x256xf32, #tpu.memory_space<vmem>>, vector<1x8x256xf32>
    %437 = vector.shape_cast %436 : vector<1x8x256xf32> to vector<8x256xf32>
    %438 = vector.shape_cast %434 : vector<8x256xf32> to vector<1x8x256xf32>
    tpu.vector_store %arg6[%435, %c0_150, %c0_151], %438 {strides = array<i32>} : memref<28x8x256xf32, #tpu.memory_space<vmem>>, vector<1x8x256xf32>,
    %c24_i32 = arith.constant 24 : i32
    %439 = tpu.concatenate %432, %433 in 1 : vector<8x128xf32>, vector<8x128xf32> -> vector<8x256xf32>
    %cst_152 = arith.constant dense<0.000000e+00> : vector<8x256xf32>
    %440 = tpu.matmul %439, %0, %cst_152 {dimension_numbers = #tpu.dot_dimension_numbers<[1], [0], [0], [1], [0, 0, 1, 1], [], []>} : vector<8x256xf32>, vector<256x256xf32>, vector<8x256xf32> -> vector<8x256xf32>
    %441 = arith.index_cast %c24_i32 : i32 to index
    %c0_153 = arith.constant 0 : index
    %c0_154 = arith.constant 0 : index
    %442 = vector.load %arg0[%441, %c0_153, %c0_154] : memref<28x8x128xf32, #tpu.memory_space<vmem>>, vector<1x8x128xf32>
    %443 = vector.shape_cast %442 : vector<1x8x128xf32> to vector<8x128xf32>
    %444 = vector.extract_strided_slice %440 {offsets = [0, 0], sizes = [8, 128], strides = [1, 1]} : vector<8x256xf32> to vector<8x128xf32>
    %445 = arith.addf %443, %444 : vector<8x128xf32>
    %cst_155 = arith.constant dense<0.000000e+00> : vector<8x128xf32>
    %446 = tpu.matmul %445, %1, %cst_155 {dimension_numbers = #tpu.dot_dimension_numbers<[1], [0], [0], [1], [0, 0, 1, 1], [], []>} : vector<8x128xf32>, vector<128x128xf32>, vector<8x128xf32> -> vector<8x128xf32>
    %447 = vector.extract_strided_slice %440 {offsets = [0, 128], sizes = [8, 128], strides = [1, 1]} : vector<8x256xf32> to vector<8x128xf32>
    %448 = arith.addf %446, %447 : vector<8x128xf32>
    %449 = arith.addf %448, %4 : vector<8x128xf32>
    %450 = math.tanh %445 : vector<8x128xf32>
    %451 = math.tanh %449 : vector<8x128xf32>
    %452 = tpu.concatenate %450, %451 in 1 : vector<8x128xf32>, vector<8x128xf32> -> vector<8x256xf32>
    %453 = arith.index_cast %c24_i32 : i32 to index
    %c0_156 = arith.constant 0 : index
    %c0_157 = arith.constant 0 : index
    %454 = vector.load %arg6[%453, %c0_156, %c0_157] : memref<28x8x256xf32, #tpu.memory_space<vmem>>, vector<1x8x256xf32>
    %455 = vector.shape_cast %454 : vector<1x8x256xf32> to vector<8x256xf32>
    %456 = vector.shape_cast %452 : vector<8x256xf32> to vector<1x8x256xf32>
    tpu.vector_store %arg6[%453, %c0_156, %c0_157], %456 {strides = array<i32>} : memref<28x8x256xf32, #tpu.memory_space<vmem>>, vector<1x8x256xf32>,
    %c25_i32 = arith.constant 25 : i32
    %457 = tpu.concatenate %450, %451 in 1 : vector<8x128xf32>, vector<8x128xf32> -> vector<8x256xf32>
    %cst_158 = arith.constant dense<0.000000e+00> : vector<8x256xf32>
    %458 = tpu.matmul %457, %0, %cst_158 {dimension_numbers = #tpu.dot_dimension_numbers<[1], [0], [0], [1], [0, 0, 1, 1], [], []>} : vector<8x256xf32>, vector<256x256xf32>, vector<8x256xf32> -> vector<8x256xf32>
    %459 = arith.index_cast %c25_i32 : i32 to index
    %c0_159 = arith.constant 0 : index
    %c0_160 = arith.constant 0 : index
    %460 = vector.load %arg0[%459, %c0_159, %c0_160] : memref<28x8x128xf32, #tpu.memory_space<vmem>>, vector<1x8x128xf32>
    %461 = vector.shape_cast %460 : vector<1x8x128xf32> to vector<8x128xf32>
    %462 = vector.extract_strided_slice %458 {offsets = [0, 0], sizes = [8, 128], strides = [1, 1]} : vector<8x256xf32> to vector<8x128xf32>
    %463 = arith.addf %461, %462 : vector<8x128xf32>
    %cst_161 = arith.constant dense<0.000000e+00> : vector<8x128xf32>
    %464 = tpu.matmul %463, %1, %cst_161 {dimension_numbers = #tpu.dot_dimension_numbers<[1], [0], [0], [1], [0, 0, 1, 1], [], []>} : vector<8x128xf32>, vector<128x128xf32>, vector<8x128xf32> -> vector<8x128xf32>
    %465 = vector.extract_strided_slice %458 {offsets = [0, 128], sizes = [8, 128], strides = [1, 1]} : vector<8x256xf32> to vector<8x128xf32>
    %466 = arith.addf %464, %465 : vector<8x128xf32>
    %467 = arith.addf %466, %4 : vector<8x128xf32>
    %468 = math.tanh %463 : vector<8x128xf32>
    %469 = math.tanh %467 : vector<8x128xf32>
    %470 = tpu.concatenate %468, %469 in 1 : vector<8x128xf32>, vector<8x128xf32> -> vector<8x256xf32>
    %471 = arith.index_cast %c25_i32 : i32 to index
    %c0_162 = arith.constant 0 : index
    %c0_163 = arith.constant 0 : index
    %472 = vector.load %arg6[%471, %c0_162, %c0_163] : memref<28x8x256xf32, #tpu.memory_space<vmem>>, vector<1x8x256xf32>
    %473 = vector.shape_cast %472 : vector<1x8x256xf32> to vector<8x256xf32>
    %474 = vector.shape_cast %470 : vector<8x256xf32> to vector<1x8x256xf32>
    tpu.vector_store %arg6[%471, %c0_162, %c0_163], %474 {strides = array<i32>} : memref<28x8x256xf32, #tpu.memory_space<vmem>>, vector<1x8x256xf32>,
    %c26_i32 = arith.constant 26 : i32
    %475 = tpu.concatenate %468, %469 in 1 : vector<8x128xf32>, vector<8x128xf32> -> vector<8x256xf32>
    %cst_164 = arith.constant dense<0.000000e+00> : vector<8x256xf32>
    %476 = tpu.matmul %475, %0, %cst_164 {dimension_numbers = #tpu.dot_dimension_numbers<[1], [0], [0], [1], [0, 0, 1, 1], [], []>} : vector<8x256xf32>, vector<256x256xf32>, vector<8x256xf32> -> vector<8x256xf32>
    %477 = arith.index_cast %c26_i32 : i32 to index
    %c0_165 = arith.constant 0 : index
    %c0_166 = arith.constant 0 : index
    %478 = vector.load %arg0[%477, %c0_165, %c0_166] : memref<28x8x128xf32, #tpu.memory_space<vmem>>, vector<1x8x128xf32>
    %479 = vector.shape_cast %478 : vector<1x8x128xf32> to vector<8x128xf32>
    %480 = vector.extract_strided_slice %476 {offsets = [0, 0], sizes = [8, 128], strides = [1, 1]} : vector<8x256xf32> to vector<8x128xf32>
    %481 = arith.addf %479, %480 : vector<8x128xf32>
    %cst_167 = arith.constant dense<0.000000e+00> : vector<8x128xf32>
    %482 = tpu.matmul %481, %1, %cst_167 {dimension_numbers = #tpu.dot_dimension_numbers<[1], [0], [0], [1], [0, 0, 1, 1], [], []>} : vector<8x128xf32>, vector<128x128xf32>, vector<8x128xf32> -> vector<8x128xf32>
    %483 = vector.extract_strided_slice %476 {offsets = [0, 128], sizes = [8, 128], strides = [1, 1]} : vector<8x256xf32> to vector<8x128xf32>
    %484 = arith.addf %482, %483 : vector<8x128xf32>
    %485 = arith.addf %484, %4 : vector<8x128xf32>
    %486 = math.tanh %481 : vector<8x128xf32>
    %487 = math.tanh %485 : vector<8x128xf32>
    %488 = tpu.concatenate %486, %487 in 1 : vector<8x128xf32>, vector<8x128xf32> -> vector<8x256xf32>
    %489 = arith.index_cast %c26_i32 : i32 to index
    %c0_168 = arith.constant 0 : index
    %c0_169 = arith.constant 0 : index
    %490 = vector.load %arg6[%489, %c0_168, %c0_169] : memref<28x8x256xf32, #tpu.memory_space<vmem>>, vector<1x8x256xf32>
    %491 = vector.shape_cast %490 : vector<1x8x256xf32> to vector<8x256xf32>
    %492 = vector.shape_cast %488 : vector<8x256xf32> to vector<1x8x256xf32>
    tpu.vector_store %arg6[%489, %c0_168, %c0_169], %492 {strides = array<i32>} : memref<28x8x256xf32, #tpu.memory_space<vmem>>, vector<1x8x256xf32>,
    %c27_i32 = arith.constant 27 : i32
    %493 = tpu.concatenate %486, %487 in 1 : vector<8x128xf32>, vector<8x128xf32> -> vector<8x256xf32>
    %cst_170 = arith.constant dense<0.000000e+00> : vector<8x256xf32>
    %494 = tpu.matmul %493, %0, %cst_170 {dimension_numbers = #tpu.dot_dimension_numbers<[1], [0], [0], [1], [0, 0, 1, 1], [], []>} : vector<8x256xf32>, vector<256x256xf32>, vector<8x256xf32> -> vector<8x256xf32>
    %495 = arith.index_cast %c27_i32 : i32 to index
    %c0_171 = arith.constant 0 : index
    %c0_172 = arith.constant 0 : index
    %496 = vector.load %arg0[%495, %c0_171, %c0_172] : memref<28x8x128xf32, #tpu.memory_space<vmem>>, vector<1x8x128xf32>
    %497 = vector.shape_cast %496 : vector<1x8x128xf32> to vector<8x128xf32>
    %498 = vector.extract_strided_slice %494 {offsets = [0, 0], sizes = [8, 128], strides = [1, 1]} : vector<8x256xf32> to vector<8x128xf32>
    %499 = arith.addf %497, %498 : vector<8x128xf32>
    %cst_173 = arith.constant dense<0.000000e+00> : vector<8x128xf32>
    %500 = tpu.matmul %499, %1, %cst_173 {dimension_numbers = #tpu.dot_dimension_numbers<[1], [0], [0], [1], [0, 0, 1, 1], [], []>} : vector<8x128xf32>, vector<128x128xf32>, vector<8x128xf32> -> vector<8x128xf32>
    %501 = vector.extract_strided_slice %494 {offsets = [0, 128], sizes = [8, 128], strides = [1, 1]} : vector<8x256xf32> to vector<8x128xf32>
    %502 = arith.addf %500, %501 : vector<8x128xf32>
    %503 = arith.addf %502, %4 : vector<8x128xf32>
    %504 = math.tanh %499 : vector<8x128xf32>
    %505 = math.tanh %503 : vector<8x128xf32>
    %506 = tpu.concatenate %504, %505 in 1 : vector<8x128xf32>, vector<8x128xf32> -> vector<8x256xf32>
    %507 = arith.index_cast %c27_i32 : i32 to index
    %c0_174 = arith.constant 0 : index
    %c0_175 = arith.constant 0 : index
    %508 = vector.load %arg6[%507, %c0_174, %c0_175] : memref<28x8x256xf32, #tpu.memory_space<vmem>>, vector<1x8x256xf32>
    %509 = vector.shape_cast %508 : vector<1x8x256xf32> to vector<8x256xf32>
    %510 = vector.shape_cast %506 : vector<8x256xf32> to vector<1x8x256xf32>
    tpu.vector_store %arg6[%507, %c0_174, %c0_175], %510 {strides = array<i32>} : memref<28x8x256xf32, #tpu.memory_space<vmem>>, vector<1x8x256xf32>,
    %c28_i32 = arith.constant 28 : i32
    return
  }
}

</mosaic_0001>

<llo_original>
// kernel: reservior_rollout.1
$region0: #{reservior_rollout.1}
  #allocation0 [shape = 'u32[]', space=smem, size = 0x4, offset = 0x4, fixed_abs, tag = 'smem constant byte address 0x4 - core index']
  #allocation1 [shape = 'u32[72,128]{1,0:T(1,128)}', space=vmem, size = 0x9000, scoped, tag = 'internal scratch']
  %s0 = inlined_call_operand.vmem [shape: f32[28,8,128], index: 0, kind: input, shape index: {}]
  %s1 = inlined_call_operand.vmem [shape: f32[8,128], index: 1, kind: input, shape index: {}]
  %s2 = inlined_call_operand.vmem [shape: f32[8,128], index: 2, kind: input, shape index: {}]
  %s3 = inlined_call_operand.hbm [shape: f32[256,256], index: 3, kind: input, shape index: {}]
  %s4 = inlined_call_operand.vmem [shape: f32[128,128], index: 4, kind: input, shape index: {}]
  %s5 = inlined_call_operand.vmem [shape: f32[1,128], index: 5, kind: input, shape index: {}]
  %s6 = inlined_call_operand.vmem [shape: f32[28,8,256], index: 6, kind: output, shape index: {}]
  %s7 = sld [smem:[#allocation0]]
  $region38: #{reservior_rollout.1} parent=0
    _
  %s9 = ssub.s32 1, %s7
  %s10 = scalar_select 0, %s9, %s7
  $region1: #{reservior_rollout.1} parent=0
    #allocation2 [shape = 'u8[262144]{0}', space=vmem, size = 0x40000, scoped, tag = 'input window, operand 3, single buffered']
    #allocation3 [shape = 's32[1]{0}', space=sflag, size = 0x4, scoped, tag = 'scoped memory for reservior_rollout.1']
    %11 = vsyncpa [#allocation3], 0
    // Predicated region
    $region2: #{reservior_rollout.1} parent=1 // pred_check
      _
    $region3: #{reservior_rollout.1} parent=1 // pred_check_branch
      %13 = sbr.rel (0) target = $region5
    $region4: #{reservior_rollout.1} parent=1 // pred_region
      _
    $region5: #{reservior_rollout.1} parent=1 // pred_fallthru
      _
    // Predicated region
    $region6: #{reservior_rollout.1} parent=1 // pred_check
      _
    $region7: #{reservior_rollout.1} parent=1 // pred_check_branch
      %15 = sbr.rel (0) target = $region9
    $region8: #{reservior_rollout.1} parent=1 // pred_region
      _
    $region9: #{reservior_rollout.1} parent=1 // pred_fallthru
      _
    // Predicated region
    $region10: #{reservior_rollout.1} parent=1 // pred_check
      _
    $region11: #{reservior_rollout.1} parent=1 // pred_check_branch
      %17 = sbr.rel (0) target = $region13
    $region12: #{reservior_rollout.1} parent=1 // pred_region
      _
    $region13: #{reservior_rollout.1} parent=1 // pred_fallthru
      _
    // Predicated region
    $region14: #{reservior_rollout.1} parent=1 // pred_check
      _
    $region15: #{reservior_rollout.1} parent=1 // pred_check_branch
      %19 = sbr.rel (0) target = $region17
    $region16: #{reservior_rollout.1} parent=1 // pred_region
      %21 = vsyncadd [#allocation3], 0
      %s22 = sshll.u32 %s3, 4
      %s23 = int_to_ptr.hbm [resolvable:$true] %s22
      %s24 = sshll.u32 [#allocation2], 4
      %s25 = int_to_ptr.vmem [resolvable:$true] %s24
      %30 = dma.hbm_to_vmem [thread:$0]  %s23, 8192, %s25, [#allocation3], 256, 256, 16
    $region17: #{reservior_rollout.1} parent=1 // pred_fallthru
      _
    // Predicated region
    $region18: #{reservior_rollout.1} parent=1 // pred_check
      _
    $region19: #{reservior_rollout.1} parent=1 // pred_check_branch
      %32 = sbr.rel (0) target = $region21
    $region20: #{reservior_rollout.1} parent=1 // pred_region
      _
    $region21: #{reservior_rollout.1} parent=1 // pred_fallthru
      _
    // Predicated region
    $region22: #{reservior_rollout.1} parent=1 // pred_check
      _
    $region23: #{reservior_rollout.1} parent=1 // pred_check_branch
      %34 = sbr.rel (0) target = $region25
    $region24: #{reservior_rollout.1} parent=1 // pred_region
      _
    $region25: #{reservior_rollout.1} parent=1 // pred_fallthru
      _
    // Predicated region
    $region26: #{reservior_rollout.1} parent=1 // pred_check
      _
    $region27: #{reservior_rollout.1} parent=1 // pred_check_branch
      %36 = sbr.rel (0) target = $region29
    $region28: #{reservior_rollout.1} parent=1 // pred_region
      %38 = dma.done [#allocation3], 8192
    $region29: #{reservior_rollout.1} parent=1 // pred_fallthru
      _
    %v39 = vld [vmem:[#allocation2] sm:$0xff]
    %v40 = vld [vmem:[#allocation2 + $0x8] sm:$0xff]
    %v41 = vld [vmem:[#allocation2 + $0x10] sm:$0xff]
    %v42 = vld [vmem:[#allocation2 + $0x18] sm:$0xff]
    %v43 = vld [vmem:[#allocation2 + $0x20] sm:$0xff]
    %v44 = vld [vmem:[#allocation2 + $0x28] sm:$0xff]
    %v45 = vld [vmem:[#allocation2 + $0x30] sm:$0xff]
    %v46 = vld [vmem:[#allocation2 + $0x38] sm:$0xff]
    %v47 = vld [vmem:[#allocation2 + $0x40] sm:$0xff]
    %v48 = vld [vmem:[#allocation2 + $0x48] sm:$0xff]
    %v49 = vld [vmem:[#allocation2 + $0x50] sm:$0xff]
    %v50 = vld [vmem:[#allocation2 + $0x58] sm:$0xff]
    %v51 = vld [vmem:[#allocation2 + $0x60] sm:$0xff]
    %v52 = vld [vmem:[#allocation2 + $0x68] sm:$0xff]
    %v53 = vld [vmem:[#allocation2 + $0x70] sm:$0xff]
    %v54 = vld [vmem:[#allocation2 + $0x78] sm:$0xff]
    %v55 = vld [vmem:[#allocation2 + $0x80] sm:$0xff]
    %v56 = vld [vmem:[#allocation2 + $0x88] sm:$0xff]
    %v57 = vld [vmem:[#allocation2 + $0x90] sm:$0xff]
    %v58 = vld [vmem:[#allocation2 + $0x98] sm:$0xff]
    %v59 = vld [vmem:[#allocation2 + $0xa0] sm:$0xff]
    %v60 = vld [vmem:[#allocation2 + $0xa8] sm:$0xff]
    %v61 = vld [vmem:[#allocation2 + $0xb0] sm:$0xff]
    %v62 = vld [vmem:[#allocation2 + $0xb8] sm:$0xff]
    %v63 = vld [vmem:[#allocation2 + $0xc0] sm:$0xff]
    %v64 = vld [vmem:[#allocation2 + $0xc8] sm:$0xff]
    %v65 = vld [vmem:[#allocation2 + $0xd0] sm:$0xff]
    %v66 = vld [vmem:[#allocation2 + $0xd8] sm:$0xff]
    %v67 = vld [vmem:[#allocation2 + $0xe0] sm:$0xff]
    %v68 = vld [vmem:[#allocation2 + $0xe8] sm:$0xff]
    %v69 = vld [vmem:[#allocation2 + $0xf0] sm:$0xff]
    %v70 = vld [vmem:[#allocation2 + $0xf8] sm:$0xff]
    %v71 = vld [vmem:[#allocation2 + $0x100] sm:$0xff]
    %v72 = vld [vmem:[#allocation2 + $0x108] sm:$0xff]
    %v73 = vld [vmem:[#allocation2 + $0x110] sm:$0xff]
    %v74 = vld [vmem:[#allocation2 + $0x118] sm:$0xff]
    %v75 = vld [vmem:[#allocation2 + $0x120] sm:$0xff]
    %v76 = vld [vmem:[#allocation2 + $0x128] sm:$0xff]
    %v77 = vld [vmem:[#allocation2 + $0x130] sm:$0xff]
    %v78 = vld [vmem:[#allocation2 + $0x138] sm:$0xff]
    %v79 = vld [vmem:[#allocation2 + $0x140] sm:$0xff]
    %v80 = vld [vmem:[#allocation2 + $0x148] sm:$0xff]
    %v81 = vld [vmem:[#allocation2 + $0x150] sm:$0xff]
    %v82 = vld [vmem:[#allocation2 + $0x158] sm:$0xff]
    %v83 = vld [vmem:[#allocation2 + $0x160] sm:$0xff]
    %v84 = vld [vmem:[#allocation2 + $0x168] sm:$0xff]
    %v85 = vld [vmem:[#allocation2 + $0x170] sm:$0xff]
    %v86 = vld [vmem:[#allocation2 + $0x178] sm:$0xff]
    %v87 = vld [vmem:[#allocation2 + $0x180] sm:$0xff]
    %v88 = vld [vmem:[#allocation2 + $0x188] sm:$0xff]
    %v89 = vld [vmem:[#allocation2 + $0x190] sm:$0xff]
    %v90 = vld [vmem:[#allocation2 + $0x198] sm:$0xff]
    %v91 = vld [vmem:[#allocation2 + $0x1a0] sm:$0xff]
    %v92 = vld [vmem:[#allocation2 + $0x1a8] sm:$0xff]
    %v93 = vld [vmem:[#allocation2 + $0x1b0] sm:$0xff]
    %v94 = vld [vmem:[#allocation2 + $0x1b8] sm:$0xff]
    %v95 = vld [vmem:[#allocation2 + $0x1c0] sm:$0xff]
    %v96 = vld [vmem:[#allocation2 + $0x1c8] sm:$0xff]
    %v97 = vld [vmem:[#allocation2 + $0x1d0] sm:$0xff]
    %v98 = vld [vmem:[#allocation2 + $0x1d8] sm:$0xff]
    %v99 = vld [vmem:[#allocation2 + $0x1e0] sm:$0xff]
    %v100 = vld [vmem:[#allocation2 + $0x1e8] sm:$0xff]
    %v101 = vld [vmem:[#allocation2 + $0x1f0] sm:$0xff]
    %v102 = vld [vmem:[#allocation2 + $0x1f8] sm:$0xff]
    %v103 = vld [vmem:[%s4] sm:$0xff]
    %v104 = vld [vmem:[%s4 + $0x8] sm:$0xff]
    %v105 = vld [vmem:[%s4 + $0x10] sm:$0xff]
    %v106 = vld [vmem:[%s4 + $0x18] sm:$0xff]
    %v107 = vld [vmem:[%s4 + $0x20] sm:$0xff]
    %v108 = vld [vmem:[%s4 + $0x28] sm:$0xff]
    %v109 = vld [vmem:[%s4 + $0x30] sm:$0xff]
    %v110 = vld [vmem:[%s4 + $0x38] sm:$0xff]
    %v111 = vld [vmem:[%s4 + $0x40] sm:$0xff]
    %v112 = vld [vmem:[%s4 + $0x48] sm:$0xff]
    %v113 = vld [vmem:[%s4 + $0x50] sm:$0xff]
    %v114 = vld [vmem:[%s4 + $0x58] sm:$0xff]
    %v115 = vld [vmem:[%s4 + $0x60] sm:$0xff]
    %v116 = vld [vmem:[%s4 + $0x68] sm:$0xff]
    %v117 = vld [vmem:[%s4 + $0x70] sm:$0xff]
    %v118 = vld [vmem:[%s4 + $0x78] sm:$0xff]
    %v119 = vld [vmem:[%s5] sm:$0x1]
    %v121 = vperm.slane %v119, 0
    %v123 = vld [vmem:[%s1] sm:$0xff]
    %v124 = vld [vmem:[%s2] sm:$0xff]
    %125 = vmatpush.msra.mxu0 %v69
    %126 = vmatpush.msra.mxu0 %v67
    %127 = vmatpush.msra.mxu0 %v65
    %128 = vmatpush.msra.mxu0 %v63
    %129 = vmatpush.msra.mxu0 %v61
    %130 = vmatpush.msra.mxu0 %v59
    %131 = vmatpush.msra.mxu0 %v57
    %132 = vmatpush.msra.mxu0 %v55
    %133 = vmatpush.msra.mxu0 %v53
    %134 = vmatpush.msra.mxu0 %v51
    %135 = vmatpush.msra.mxu0 %v49
    %136 = vmatpush.msra.mxu0 %v47
    %137 = vmatpush.msra.mxu0 %v45
    %138 = vmatpush.msra.mxu0 %v43
    %139 = vmatpush.msra.mxu0 %v41
    %140 = vmatpush.msra.mxu0 %v39
    %141 = vmatmul.f32.gmra.mxu0 %v123
    %v142 = vpop.f32.mrf.mxu0
    %v143 = vadd.f32 0.0, %v142
    %144 = vdwg.mxu0
    %145 = vmatpush.msra.mxu0 %v101
    %146 = vmatpush.msra.mxu0 %v99
    %147 = vmatpush.msra.mxu0 %v97
    %148 = vmatpush.msra.mxu0 %v95
    %149 = vmatpush.msra.mxu0 %v93
    %150 = vmatpush.msra.mxu0 %v91
    %151 = vmatpush.msra.mxu0 %v89
    %152 = vmatpush.msra.mxu0 %v87
    %153 = vmatpush.msra.mxu0 %v85
    %154 = vmatpush.msra.mxu0 %v83
    %155 = vmatpush.msra.mxu0 %v81
    %156 = vmatpush.msra.mxu0 %v79
    %157 = vmatpush.msra.mxu0 %v77
    %158 = vmatpush.msra.mxu0 %v75
    %159 = vmatpush.msra.mxu0 %v73
    %160 = vmatpush.msra.mxu0 %v71
    %161 = vmatmul.f32.gmra.mxu0 %v124
    %v162 = vpop.f32.mrf.mxu0
    %v163 = vadd.f32 %v143, %v162
    %164 = vdwg.mxu0
    %165 = vmatpush.msra.mxu0 %v70
    %166 = vmatpush.msra.mxu0 %v68
    %167 = vmatpush.msra.mxu0 %v66
    %168 = vmatpush.msra.mxu0 %v64
    %169 = vmatpush.msra.mxu0 %v62
    %170 = vmatpush.msra.mxu0 %v60
    %171 = vmatpush.msra.mxu0 %v58
    %172 = vmatpush.msra.mxu0 %v56
    %173 = vmatpush.msra.mxu0 %v54
    %174 = vmatpush.msra.mxu0 %v52
    %175 = vmatpush.msra.mxu0 %v50
    %176 = vmatpush.msra.mxu0 %v48
    %177 = vmatpush.msra.mxu0 %v46
    %178 = vmatpush.msra.mxu0 %v44
    %179 = vmatpush.msra.mxu0 %v42
    %180 = vmatpush.msra.mxu0 %v40
    %181 = vmatmul.f32.gmra.mxu0 %v123
    %v182 = vpop.f32.mrf.mxu0
    %v183 = vadd.f32 0.0, %v182
    %184 = vdwg.mxu0
    %185 = vmatpush.msra.mxu0 %v102
    %186 = vmatpush.msra.mxu0 %v100
    %187 = vmatpush.msra.mxu0 %v98
    %188 = vmatpush.msra.mxu0 %v96
    %189 = vmatpush.msra.mxu0 %v94
    %190 = vmatpush.msra.mxu0 %v92
    %191 = vmatpush.msra.mxu0 %v90
    %192 = vmatpush.msra.mxu0 %v88
    %193 = vmatpush.msra.mxu0 %v86
    %194 = vmatpush.msra.mxu0 %v84
    %195 = vmatpush.msra.mxu0 %v82
    %196 = vmatpush.msra.mxu0 %v80
    %197 = vmatpush.msra.mxu0 %v78
    %198 = vmatpush.msra.mxu0 %v76
    %199 = vmatpush.msra.mxu0 %v74
    %200 = vmatpush.msra.mxu0 %v72
    %201 = vmatmul.f32.gmra.mxu0 %v124
    %v202 = vpop.f32.mrf.mxu0
    %v203 = vadd.f32 %v183, %v202
    %204 = vdwg.mxu0
    %v205 = vld [vmem:[%s0] sm:$0xff]
    %v206 = vadd.f32 %v205, %v163
    %207 = vmatpush.msra.mxu0 %v118
    %208 = vmatpush.msra.mxu0 %v117
    %209 = vmatpush.msra.mxu0 %v116
    %210 = vmatpush.msra.mxu0 %v115
    %211 = vmatpush.msra.mxu0 %v114
    %212 = vmatpush.msra.mxu0 %v113
    %213 = vmatpush.msra.mxu0 %v112
    %214 = vmatpush.msra.mxu0 %v111
    %215 = vmatpush.msra.mxu0 %v110
    %216 = vmatpush.msra.mxu0 %v109
    %217 = vmatpush.msra.mxu0 %v108
    %218 = vmatpush.msra.mxu0 %v107
    %219 = vmatpush.msra.mxu0 %v106
    %220 = vmatpush.msra.mxu0 %v105
    %221 = vmatpush.msra.mxu0 %v104
    %222 = vmatpush.msra.mxu0 %v103
    %223 = vmatmul.f32.gmra.mxu0 %v206
    %v224 = vpop.f32.mrf.mxu0
    %v225 = vadd.f32 %v203, %v224
    %226 = vdwg.mxu0
    %v227 = vadd.f32 %v225, %v121
    %v228 = vtanh.pop %v206
    %v229 = vtanh.pop %v227
    %230 = vst [vmem:[%s6] sm:$0xff] %v228
    %231 = vst [vmem:[%s6 + $0x8] sm:$0xff] %v229
    %232 = vmatpush.msra.mxu0 %v69
    %233 = vmatpush.msra.mxu0 %v67
    %234 = vmatpush.msra.mxu0 %v65
    %235 = vmatpush.msra.mxu0 %v63
    %236 = vmatpush.msra.mxu0 %v61
    %237 = vmatpush.msra.mxu0 %v59
    %238 = vmatpush.msra.mxu0 %v57
    %239 = vmatpush.msra.mxu0 %v55
    %240 = vmatpush.msra.mxu0 %v53
    %241 = vmatpush.msra.mxu0 %v51
    %242 = vmatpush.msra.mxu0 %v49
    %243 = vmatpush.msra.mxu0 %v47
    %244 = vmatpush.msra.mxu0 %v45
    %245 = vmatpush.msra.mxu0 %v43
    %246 = vmatpush.msra.mxu0 %v41
    %247 = vmatpush.msra.mxu0 %v39
    %248 = vmatmul.f32.gmra.mxu0 %v228
    %v249 = vpop.f32.mrf.mxu0
    %v250 = vadd.f32 0.0, %v249
    %251 = vdwg.mxu0
    %252 = vmatpush.msra.mxu0 %v101
    %253 = vmatpush.msra.mxu0 %v99
    %254 = vmatpush.msra.mxu0 %v97
    %255 = vmatpush.msra.mxu0 %v95
    %256 = vmatpush.msra.mxu0 %v93
    %257 = vmatpush.msra.mxu0 %v91
    %258 = vmatpush.msra.mxu0 %v89
    %259 = vmatpush.msra.mxu0 %v87
    %260 = vmatpush.msra.mxu0 %v85
    %261 = vmatpush.msra.mxu0 %v83
    %262 = vmatpush.msra.mxu0 %v81
    %263 = vmatpush.msra.mxu0 %v79
    %264 = vmatpush.msra.mxu0 %v77
    %265 = vmatpush.msra.mxu0 %v75
    %266 = vmatpush.msra.mxu0 %v73
    %267 = vmatpush.msra.mxu0 %v71
    %268 = vmatmul.f32.gmra.mxu0 %v229
    %v269 = vpop.f32.mrf.mxu0
    %v270 = vadd.f32 %v250, %v269
    %271 = vdwg.mxu0
    %272 = vmatpush.msra.mxu0 %v70
    %273 = vmatpush.msra.mxu0 %v68
    %274 = vmatpush.msra.mxu0 %v66
    %275 = vmatpush.msra.mxu0 %v64
    %276 = vmatpush.msra.mxu0 %v62
    %277 = vmatpush.msra.mxu0 %v60
    %278 = vmatpush.msra.mxu0 %v58
    %279 = vmatpush.msra.mxu0 %v56
    %280 = vmatpush.msra.mxu0 %v54
    %281 = vmatpush.msra.mxu0 %v52
    %282 = vmatpush.msra.mxu0 %v50
    %283 = vmatpush.msra.mxu0 %v48
    %284 = vmatpush.msra.mxu0 %v46
    %285 = vmatpush.msra.mxu0 %v44
    %286 = vmatpush.msra.mxu0 %v42
    %287 = vmatpush.msra.mxu0 %v40
    %288 = vmatmul.f32.gmra.mxu0 %v228
    %v289 = vpop.f32.mrf.mxu0
    %v290 = vadd.f32 0.0, %v289
    %291 = vdwg.mxu0
    %292 = vmatpush.msra.mxu0 %v102
    %293 = vmatpush.msra.mxu0 %v100
    %294 = vmatpush.msra.mxu0 %v98
    %295 = vmatpush.msra.mxu0 %v96
    %296 = vmatpush.msra.mxu0 %v94
    %297 = vmatpush.msra.mxu0 %v92
    %298 = vmatpush.msra.mxu0 %v90
    %299 = vmatpush.msra.mxu0 %v88
    %300 = vmatpush.msra.mxu0 %v86
    %301 = vmatpush.msra.mxu0 %v84
    %302 = vmatpush.msra.mxu0 %v82
    %303 = vmatpush.msra.mxu0 %v80
    %304 = vmatpush.msra.mxu0 %v78
    %305 = vmatpush.msra.mxu0 %v76
    %306 = vmatpush.msra.mxu0 %v74
    %307 = vmatpush.msra.mxu0 %v72
    %308 = vmatmul.f32.gmra.mxu0 %v229
    %v309 = vpop.f32.mrf.mxu0
    %v310 = vadd.f32 %v290, %v309
    %311 = vdwg.mxu0
    %s312 = scalar_lea.vmem %s0, 8
    %v313 = vld [vmem:[%s312] sm:$0xff]
    %v314 = vadd.f32 %v313, %v270
    %315 = vmatpush.msra.mxu0 %v118
    %316 = vmatpush.msra.mxu0 %v117
    %317 = vmatpush.msra.mxu0 %v116
    %318 = vmatpush.msra.mxu0 %v115
    %319 = vmatpush.msra.mxu0 %v114
    %320 = vmatpush.msra.mxu0 %v113
    %321 = vmatpush.msra.mxu0 %v112
    %322 = vmatpush.msra.mxu0 %v111
    %323 = vmatpush.msra.mxu0 %v110
    %324 = vmatpush.msra.mxu0 %v109
    %325 = vmatpush.msra.mxu0 %v108
    %326 = vmatpush.msra.mxu0 %v107
    %327 = vmatpush.msra.mxu0 %v106
    %328 = vmatpush.msra.mxu0 %v105
    %329 = vmatpush.msra.mxu0 %v104
    %330 = vmatpush.msra.mxu0 %v103
    %331 = vmatmul.f32.gmra.mxu0 %v314
    %v332 = vpop.f32.mrf.mxu0
    %v333 = vadd.f32 %v310, %v332
    %334 = vdwg.mxu0
    %v335 = vadd.f32 %v333, %v121
    %v336 = vtanh.pop %v314
    %v337 = vtanh.pop %v335
    %s338 = scalar_lea.vmem %s6, 16
    %339 = vst [vmem:[%s338] sm:$0xff] %v336
    %340 = vst [vmem:[%s338 + $0x8] sm:$0xff] %v337
    %341 = vmatpush.msra.mxu0 %v69
    %342 = vmatpush.msra.mxu0 %v67
    %343 = vmatpush.msra.mxu0 %v65
    %344 = vmatpush.msra.mxu0 %v63
    %345 = vmatpush.msra.mxu0 %v61
    %346 = vmatpush.msra.mxu0 %v59
    %347 = vmatpush.msra.mxu0 %v57
    %348 = vmatpush.msra.mxu0 %v55
    %349 = vmatpush.msra.mxu0 %v53
    %350 = vmatpush.msra.mxu0 %v51
    %351 = vmatpush.msra.mxu0 %v49
    %352 = vmatpush.msra.mxu0 %v47
    %353 = vmatpush.msra.mxu0 %v45
    %354 = vmatpush.msra.mxu0 %v43
    %355 = vmatpush.msra.mxu0 %v41
    %356 = vmatpush.msra.mxu0 %v39
    %357 = vmatmul.f32.gmra.mxu0 %v336
    %v358 = vpop.f32.mrf.mxu0
    %v359 = vadd.f32 0.0, %v358
    %360 = vdwg.mxu0
    %361 = vmatpush.msra.mxu0 %v101
    %362 = vmatpush.msra.mxu0 %v99
    %363 = vmatpush.msra.mxu0 %v97
    %364 = vmatpush.msra.mxu0 %v95
    %365 = vmatpush.msra.mxu0 %v93
    %366 = vmatpush.msra.mxu0 %v91
    %367 = vmatpush.msra.mxu0 %v89
    %368 = vmatpush.msra.mxu0 %v87
    %369 = vmatpush.msra.mxu0 %v85
    %370 = vmatpush.msra.mxu0 %v83
    %371 = vmatpush.msra.mxu0 %v81
    %372 = vmatpush.msra.mxu0 %v79
    %373 = vmatpush.msra.mxu0 %v77
    %374 = vmatpush.msra.mxu0 %v75
    %375 = vmatpush.msra.mxu0 %v73
    %376 = vmatpush.msra.mxu0 %v71
    %377 = vmatmul.f32.gmra.mxu0 %v337
    %v378 = vpop.f32.mrf.mxu0
    %v379 = vadd.f32 %v359, %v378
    %380 = vdwg.mxu0
    %381 = vmatpush.msra.mxu0 %v70
    %382 = vmatpush.msra.mxu0 %v68
    %383 = vmatpush.msra.mxu0 %v66
    %384 = vmatpush.msra.mxu0 %v64
    %385 = vmatpush.msra.mxu0 %v62
    %386 = vmatpush.msra.mxu0 %v60
    %387 = vmatpush.msra.mxu0 %v58
    %388 = vmatpush.msra.mxu0 %v56
    %389 = vmatpush.msra.mxu0 %v54
    %390 = vmatpush.msra.mxu0 %v52
    %391 = vmatpush.msra.mxu0 %v50
    %392 = vmatpush.msra.mxu0 %v48
    %393 = vmatpush.msra.mxu0 %v46
    %394 = vmatpush.msra.mxu0 %v44
    %395 = vmatpush.msra.mxu0 %v42
    %396 = vmatpush.msra.mxu0 %v40
    %397 = vmatmul.f32.gmra.mxu0 %v336
    %v398 = vpop.f32.mrf.mxu0
    %v399 = vadd.f32 0.0, %v398
    %400 = vdwg.mxu0
    %401 = vmatpush.msra.mxu0 %v102
    %402 = vmatpush.msra.mxu0 %v100
    %403 = vmatpush.msra.mxu0 %v98
    %404 = vmatpush.msra.mxu0 %v96
    %405 = vmatpush.msra.mxu0 %v94
    %406 = vmatpush.msra.mxu0 %v92
    %407 = vmatpush.msra.mxu0 %v90
    %408 = vmatpush.msra.mxu0 %v88
    %409 = vmatpush.msra.mxu0 %v86
    %410 = vmatpush.msra.mxu0 %v84
    %411 = vmatpush.msra.mxu0 %v82
    %412 = vmatpush.msra.mxu0 %v80
    %413 = vmatpush.msra.mxu0 %v78
    %414 = vmatpush.msra.mxu0 %v76
    %415 = vmatpush.msra.mxu0 %v74
    %416 = vmatpush.msra.mxu0 %v72
    %417 = vmatmul.f32.gmra.mxu0 %v337
    %v418 = vpop.f32.mrf.mxu0
    %v419 = vadd.f32 %v399, %v418
    %420 = vdwg.mxu0
    %s421 = scalar_lea.vmem %s0, 16
    %v422 = vld [vmem:[%s421] sm:$0xff]
    %v423 = vadd.f32 %v422, %v379
    %424 = vmatpush.msra.mxu0 %v118
    %425 = vmatpush.msra.mxu0 %v117
    %426 = vmatpush.msra.mxu0 %v116
    %427 = vmatpush.msra.mxu0 %v115
    %428 = vmatpush.msra.mxu0 %v114
    %429 = vmatpush.msra.mxu0 %v113
    %430 = vmatpush.msra.mxu0 %v112
    %431 = vmatpush.msra.mxu0 %v111
    %432 = vmatpush.msra.mxu0 %v110
    %433 = vmatpush.msra.mxu0 %v109
    %434 = vmatpush.msra.mxu0 %v108
    %435 = vmatpush.msra.mxu0 %v107
    %436 = vmatpush.msra.mxu0 %v106
    %437 = vmatpush.msra.mxu0 %v105
    %438 = vmatpush.msra.mxu0 %v104
    %439 = vmatpush.msra.mxu0 %v103
    %440 = vmatmul.f32.gmra.mxu0 %v423
    %v441 = vpop.f32.mrf.mxu0
    %v442 = vadd.f32 %v419, %v441
    %443 = vdwg.mxu0
    %v444 = vadd.f32 %v442, %v121
    %v445 = vtanh.pop %v423
    %v446 = vtanh.pop %v444
    %s447 = scalar_lea.vmem %s6, 32
    %448 = vst [vmem:[%s447] sm:$0xff] %v445
    %449 = vst [vmem:[%s447 + $0x8] sm:$0xff] %v446
    %450 = vmatpush.msra.mxu0 %v69
    %451 = vmatpush.msra.mxu0 %v67
    %452 = vmatpush.msra.mxu0 %v65
    %453 = vmatpush.msra.mxu0 %v63
    %454 = vmatpush.msra.mxu0 %v61
    %455 = vmatpush.msra.mxu0 %v59
    %456 = vmatpush.msra.mxu0 %v57
    %457 = vmatpush.msra.mxu0 %v55
    %458 = vmatpush.msra.mxu0 %v53
    %459 = vmatpush.msra.mxu0 %v51
    %460 = vmatpush.msra.mxu0 %v49
    %461 = vmatpush.msra.mxu0 %v47
    %462 = vmatpush.msra.mxu0 %v45
    %463 = vmatpush.msra.mxu0 %v43
    %464 = vmatpush.msra.mxu0 %v41
    %465 = vmatpush.msra.mxu0 %v39
    %466 = vmatmul.f32.gmra.mxu0 %v445
    %v467 = vpop.f32.mrf.mxu0
    %v468 = vadd.f32 0.0, %v467
    %469 = vdwg.mxu0
    %470 = vmatpush.msra.mxu0 %v101
    %471 = vmatpush.msra.mxu0 %v99
    %472 = vmatpush.msra.mxu0 %v97
    %473 = vmatpush.msra.mxu0 %v95
    %474 = vmatpush.msra.mxu0 %v93
    %475 = vmatpush.msra.mxu0 %v91
    %476 = vmatpush.msra.mxu0 %v89
    %477 = vmatpush.msra.mxu0 %v87
    %478 = vmatpush.msra.mxu0 %v85
    %479 = vmatpush.msra.mxu0 %v83
    %480 = vmatpush.msra.mxu0 %v81
    %481 = vmatpush.msra.mxu0 %v79
    %482 = vmatpush.msra.mxu0 %v77
    %483 = vmatpush.msra.mxu0 %v75
    %484 = vmatpush.msra.mxu0 %v73
    %485 = vmatpush.msra.mxu0 %v71
    %486 = vmatmul.f32.gmra.mxu0 %v446
    %v487 = vpop.f32.mrf.mxu0
    %v488 = vadd.f32 %v468, %v487
    %489 = vdwg.mxu0
    %490 = vmatpush.msra.mxu0 %v70
    %491 = vmatpush.msra.mxu0 %v68
    %492 = vmatpush.msra.mxu0 %v66
    %493 = vmatpush.msra.mxu0 %v64
    %494 = vmatpush.msra.mxu0 %v62
    %495 = vmatpush.msra.mxu0 %v60
    %496 = vmatpush.msra.mxu0 %v58
    %497 = vmatpush.msra.mxu0 %v56
    %498 = vmatpush.msra.mxu0 %v54
    %499 = vmatpush.msra.mxu0 %v52
    %500 = vmatpush.msra.mxu0 %v50
    %501 = vmatpush.msra.mxu0 %v48
    %502 = vmatpush.msra.mxu0 %v46
    %503 = vmatpush.msra.mxu0 %v44
    %504 = vmatpush.msra.mxu0 %v42
    %505 = vmatpush.msra.mxu0 %v40
    %506 = vmatmul.f32.gmra.mxu0 %v445
    %v507 = vpop.f32.mrf.mxu0
    %v508 = vadd.f32 0.0, %v507
    %509 = vdwg.mxu0
    %510 = vmatpush.msra.mxu0 %v102
    %511 = vmatpush.msra.mxu0 %v100
    %512 = vmatpush.msra.mxu0 %v98
    %513 = vmatpush.msra.mxu0 %v96
    %514 = vmatpush.msra.mxu0 %v94
    %515 = vmatpush.msra.mxu0 %v92
    %516 = vmatpush.msra.mxu0 %v90
    %517 = vmatpush.msra.mxu0 %v88
    %518 = vmatpush.msra.mxu0 %v86
    %519 = vmatpush.msra.mxu0 %v84
    %520 = vmatpush.msra.mxu0 %v82
    %521 = vmatpush.msra.mxu0 %v80
    %522 = vmatpush.msra.mxu0 %v78
    %523 = vmatpush.msra.mxu0 %v76
    %524 = vmatpush.msra.mxu0 %v74
    %525 = vmatpush.msra.mxu0 %v72
    %526 = vmatmul.f32.gmra.mxu0 %v446
    %v527 = vpop.f32.mrf.mxu0
    %v528 = vadd.f32 %v508, %v527
    %529 = vdwg.mxu0
    %s530 = scalar_lea.vmem %s0, 24
    %v531 = vld [vmem:[%s530] sm:$0xff]
    %v532 = vadd.f32 %v531, %v488
    %533 = vmatpush.msra.mxu0 %v118
    %534 = vmatpush.msra.mxu0 %v117
    %535 = vmatpush.msra.mxu0 %v116
    %536 = vmatpush.msra.mxu0 %v115
    %537 = vmatpush.msra.mxu0 %v114
    %538 = vmatpush.msra.mxu0 %v113
    %539 = vmatpush.msra.mxu0 %v112
    %540 = vmatpush.msra.mxu0 %v111
    %541 = vmatpush.msra.mxu0 %v110
    %542 = vmatpush.msra.mxu0 %v109
    %543 = vmatpush.msra.mxu0 %v108
    %544 = vmatpush.msra.mxu0 %v107
    %545 = vmatpush.msra.mxu0 %v106
    %546 = vmatpush.msra.mxu0 %v105
    %547 = vmatpush.msra.mxu0 %v104
    %548 = vmatpush.msra.mxu0 %v103
    %549 = vmatmul.f32.gmra.mxu0 %v532
    %v550 = vpop.f32.mrf.mxu0
    %v551 = vadd.f32 %v528, %v550
    %552 = vdwg.mxu0
    %v553 = vadd.f32 %v551, %v121
    %v554 = vtanh.pop %v532
    %v555 = vtanh.pop %v553
    %s556 = scalar_lea.vmem %s6, 48
    %557 = vst [vmem:[%s556] sm:$0xff] %v554
    %558 = vst [vmem:[%s556 + $0x8] sm:$0xff] %v555
    %559 = vmatpush.msra.mxu0 %v69
    %560 = vmatpush.msra.mxu0 %v67
    %561 = vmatpush.msra.mxu0 %v65
    %562 = vmatpush.msra.mxu0 %v63
    %563 = vmatpush.msra.mxu0 %v61
    %564 = vmatpush.msra.mxu0 %v59
    %565 = vmatpush.msra.mxu0 %v57
    %566 = vmatpush.msra.mxu0 %v55
    %567 = vmatpush.msra.mxu0 %v53
    %568 = vmatpush.msra.mxu0 %v51
    %569 = vmatpush.msra.mxu0 %v49
    %570 = vmatpush.msra.mxu0 %v47
    %571 = vmatpush.msra.mxu0 %v45
    %572 = vmatpush.msra.mxu0 %v43
    %573 = vmatpush.msra.mxu0 %v41
    %574 = vmatpush.msra.mxu0 %v39
    %575 = vmatmul.f32.gmra.mxu0 %v554
    %v576 = vpop.f32.mrf.mxu0
    %v577 = vadd.f32 0.0, %v576
    %578 = vdwg.mxu0
    %579 = vmatpush.msra.mxu0 %v101
    %580 = vmatpush.msra.mxu0 %v99
    %581 = vmatpush.msra.mxu0 %v97
    %582 = vmatpush.msra.mxu0 %v95
    %583 = vmatpush.msra.mxu0 %v93
    %584 = vmatpush.msra.mxu0 %v91
    %585 = vmatpush.msra.mxu0 %v89
    %586 = vmatpush.msra.mxu0 %v87
    %587 = vmatpush.msra.mxu0 %v85
    %588 = vmatpush.msra.mxu0 %v83
    %589 = vmatpush.msra.mxu0 %v81
    %590 = vmatpush.msra.mxu0 %v79
    %591 = vmatpush.msra.mxu0 %v77
    %592 = vmatpush.msra.mxu0 %v75
    %593 = vmatpush.msra.mxu0 %v73
    %594 = vmatpush.msra.mxu0 %v71
    %595 = vmatmul.f32.gmra.mxu0 %v555
    %v596 = vpop.f32.mrf.mxu0
    %v597 = vadd.f32 %v577, %v596
    %598 = vdwg.mxu0
    %599 = vmatpush.msra.mxu0 %v70
    %600 = vmatpush.msra.mxu0 %v68
    %601 = vmatpush.msra.mxu0 %v66
    %602 = vmatpush.msra.mxu0 %v64
    %603 = vmatpush.msra.mxu0 %v62
    %604 = vmatpush.msra.mxu0 %v60
    %605 = vmatpush.msra.mxu0 %v58
    %606 = vmatpush.msra.mxu0 %v56
    %607 = vmatpush.msra.mxu0 %v54
    %608 = vmatpush.msra.mxu0 %v52
    %609 = vmatpush.msra.mxu0 %v50
    %610 = vmatpush.msra.mxu0 %v48
    %611 = vmatpush.msra.mxu0 %v46
    %612 = vmatpush.msra.mxu0 %v44
    %613 = vmatpush.msra.mxu0 %v42
    %614 = vmatpush.msra.mxu0 %v40
    %615 = vmatmul.f32.gmra.mxu0 %v554
    %v616 = vpop.f32.mrf.mxu0
    %v617 = vadd.f32 0.0, %v616
    %618 = vdwg.mxu0
    %619 = vmatpush.msra.mxu0 %v102
    %620 = vmatpush.msra.mxu0 %v100
    %621 = vmatpush.msra.mxu0 %v98
    %622 = vmatpush.msra.mxu0 %v96
    %623 = vmatpush.msra.mxu0 %v94
    %624 = vmatpush.msra.mxu0 %v92
    %625 = vmatpush.msra.mxu0 %v90
    %626 = vmatpush.msra.mxu0 %v88
    %627 = vmatpush.msra.mxu0 %v86
    %628 = vmatpush.msra.mxu0 %v84
    %629 = vmatpush.msra.mxu0 %v82
    %630 = vmatpush.msra.mxu0 %v80
    %631 = vmatpush.msra.mxu0 %v78
    %632 = vmatpush.msra.mxu0 %v76
    %633 = vmatpush.msra.mxu0 %v74
    %634 = vmatpush.msra.mxu0 %v72
    %635 = vmatmul.f32.gmra.mxu0 %v555
    %v636 = vpop.f32.mrf.mxu0
    %v637 = vadd.f32 %v617, %v636
    %638 = vdwg.mxu0
    %s639 = scalar_lea.vmem %s0, 32
    %v640 = vld [vmem:[%s639] sm:$0xff]
    %v641 = vadd.f32 %v640, %v597
    %642 = vmatpush.msra.mxu0 %v118
    %643 = vmatpush.msra.mxu0 %v117
    %644 = vmatpush.msra.mxu0 %v116
    %645 = vmatpush.msra.mxu0 %v115
    %646 = vmatpush.msra.mxu0 %v114
    %647 = vmatpush.msra.mxu0 %v113
    %648 = vmatpush.msra.mxu0 %v112
    %649 = vmatpush.msra.mxu0 %v111
    %650 = vmatpush.msra.mxu0 %v110
    %651 = vmatpush.msra.mxu0 %v109
    %652 = vmatpush.msra.mxu0 %v108
    %653 = vmatpush.msra.mxu0 %v107
    %654 = vmatpush.msra.mxu0 %v106
    %655 = vmatpush.msra.mxu0 %v105
    %656 = vmatpush.msra.mxu0 %v104
    %657 = vmatpush.msra.mxu0 %v103
    %658 = vmatmul.f32.gmra.mxu0 %v641
    %v659 = vpop.f32.mrf.mxu0
    %v660 = vadd.f32 %v637, %v659
    %661 = vdwg.mxu0
    %v662 = vadd.f32 %v660, %v121
    %v663 = vtanh.pop %v641
    %v664 = vtanh.pop %v662
    %s665 = scalar_lea.vmem %s6, 64
    %666 = vst [vmem:[%s665] sm:$0xff] %v663
    %667 = vst [vmem:[%s665 + $0x8] sm:$0xff] %v664
    %668 = vmatpush.msra.mxu0 %v69
    %669 = vmatpush.msra.mxu0 %v67
    %670 = vmatpush.msra.mxu0 %v65
    %671 = vmatpush.msra.mxu0 %v63
    %672 = vmatpush.msra.mxu0 %v61
    %673 = vmatpush.msra.mxu0 %v59
    %674 = vmatpush.msra.mxu0 %v57
    %675 = vmatpush.msra.mxu0 %v55
    %676 = vmatpush.msra.mxu0 %v53
    %677 = vmatpush.msra.mxu0 %v51
    %678 = vmatpush.msra.mxu0 %v49
    %679 = vmatpush.msra.mxu0 %v47
    %680 = vmatpush.msra.mxu0 %v45
    %681 = vmatpush.msra.mxu0 %v43
    %682 = vmatpush.msra.mxu0 %v41
    %683 = vmatpush.msra.mxu0 %v39
    %684 = vmatmul.f32.gmra.mxu0 %v663
    %v685 = vpop.f32.mrf.mxu0
    %v686 = vadd.f32 0.0, %v685
    %687 = vdwg.mxu0
    %688 = vmatpush.msra.mxu0 %v101
    %689 = vmatpush.msra.mxu0 %v99
    %690 = vmatpush.msra.mxu0 %v97
    %691 = vmatpush.msra.mxu0 %v95
    %692 = vmatpush.msra.mxu0 %v93
    %693 = vmatpush.msra.mxu0 %v91
    %694 = vmatpush.msra.mxu0 %v89
    %695 = vmatpush.msra.mxu0 %v87
    %696 = vmatpush.msra.mxu0 %v85
    %697 = vmatpush.msra.mxu0 %v83
    %698 = vmatpush.msra.mxu0 %v81
    %699 = vmatpush.msra.mxu0 %v79
    %700 = vmatpush.msra.mxu0 %v77
    %701 = vmatpush.msra.mxu0 %v75
    %702 = vmatpush.msra.mxu0 %v73
    %703 = vmatpush.msra.mxu0 %v71
    %704 = vmatmul.f32.gmra.mxu0 %v664
    %v705 = vpop.f32.mrf.mxu0
    %v706 = vadd.f32 %v686, %v705
    %707 = vdwg.mxu0
    %708 = vmatpush.msra.mxu0 %v70
    %709 = vmatpush.msra.mxu0 %v68
    %710 = vmatpush.msra.mxu0 %v66
    %711 = vmatpush.msra.mxu0 %v64
    %712 = vmatpush.msra.mxu0 %v62
    %713 = vmatpush.msra.mxu0 %v60
    %714 = vmatpush.msra.mxu0 %v58
    %715 = vmatpush.msra.mxu0 %v56
    %716 = vmatpush.msra.mxu0 %v54
    %717 = vmatpush.msra.mxu0 %v52
    %718 = vmatpush.msra.mxu0 %v50
    %719 = vmatpush.msra.mxu0 %v48
    %720 = vmatpush.msra.mxu0 %v46
    %721 = vmatpush.msra.mxu0 %v44
    %722 = vmatpush.msra.mxu0 %v42
    %723 = vmatpush.msra.mxu0 %v40
    %724 = vmatmul.f32.gmra.mxu0 %v663
    %v725 = vpop.f32.mrf.mxu0
    %v726 = vadd.f32 0.0, %v725
    %727 = vdwg.mxu0
    %728 = vmatpush.msra.mxu0 %v102
    %729 = vmatpush.msra.mxu0 %v100
    %730 = vmatpush.msra.mxu0 %v98
    %731 = vmatpush.msra.mxu0 %v96
    %732 = vmatpush.msra.mxu0 %v94
    %733 = vmatpush.msra.mxu0 %v92
    %734 = vmatpush.msra.mxu0 %v90
    %735 = vmatpush.msra.mxu0 %v88
    %736 = vmatpush.msra.mxu0 %v86
    %737 = vmatpush.msra.mxu0 %v84
    %738 = vmatpush.msra.mxu0 %v82
    %739 = vmatpush.msra.mxu0 %v80
    %740 = vmatpush.msra.mxu0 %v78
    %741 = vmatpush.msra.mxu0 %v76
    %742 = vmatpush.msra.mxu0 %v74
    %743 = vmatpush.msra.mxu0 %v72
    %744 = vmatmul.f32.gmra.mxu0 %v664
    %v745 = vpop.f32.mrf.mxu0
    %v746 = vadd.f32 %v726, %v745
    %747 = vdwg.mxu0
    %s748 = scalar_lea.vmem %s0, 40
    %v749 = vld [vmem:[%s748] sm:$0xff]
    %v750 = vadd.f32 %v749, %v706
    %751 = vmatpush.msra.mxu0 %v118
    %752 = vmatpush.msra.mxu0 %v117
    %753 = vmatpush.msra.mxu0 %v116
    %754 = vmatpush.msra.mxu0 %v115
    %755 = vmatpush.msra.mxu0 %v114
    %756 = vmatpush.msra.mxu0 %v113
    %757 = vmatpush.msra.mxu0 %v112
    %758 = vmatpush.msra.mxu0 %v111
    %759 = vmatpush.msra.mxu0 %v110
    %760 = vmatpush.msra.mxu0 %v109
    %761 = vmatpush.msra.mxu0 %v108
    %762 = vmatpush.msra.mxu0 %v107
    %763 = vmatpush.msra.mxu0 %v106
    %764 = vmatpush.msra.mxu0 %v105
    %765 = vmatpush.msra.mxu0 %v104
    %766 = vmatpush.msra.mxu0 %v103
    %767 = vmatmul.f32.gmra.mxu0 %v750
    %v768 = vpop.f32.mrf.mxu0
    %v769 = vadd.f32 %v746, %v768
    %770 = vdwg.mxu0
    %v771 = vadd.f32 %v769, %v121
    %v772 = vtanh.pop %v750
    %v773 = vtanh.pop %v771
    %s774 = scalar_lea.vmem %s6, 80
    %775 = vst [vmem:[%s774] sm:$0xff] %v772
    %776 = vst [vmem:[%s774 + $0x8] sm:$0xff] %v773
    %777 = vmatpush.msra.mxu0 %v69
    %778 = vmatpush.msra.mxu0 %v67
    %779 = vmatpush.msra.mxu0 %v65
    %780 = vmatpush.msra.mxu0 %v63
    %781 = vmatpush.msra.mxu0 %v61
    %782 = vmatpush.msra.mxu0 %v59
    %783 = vmatpush.msra.mxu0 %v57
    %784 = vmatpush.msra.mxu0 %v55
    %785 = vmatpush.msra.mxu0 %v53
    %786 = vmatpush.msra.mxu0 %v51
    %787 = vmatpush.msra.mxu0 %v49
    %788 = vmatpush.msra.mxu0 %v47
    %789 = vmatpush.msra.mxu0 %v45
    %790 = vmatpush.msra.mxu0 %v43
    %791 = vmatpush.msra.mxu0 %v41
    %792 = vmatpush.msra.mxu0 %v39
    %793 = vmatmul.f32.gmra.mxu0 %v772
    %v794 = vpop.f32.mrf.mxu0
    %v795 = vadd.f32 0.0, %v794
    %796 = vdwg.mxu0
    %797 = vmatpush.msra.mxu0 %v101
    %798 = vmatpush.msra.mxu0 %v99
    %799 = vmatpush.msra.mxu0 %v97
    %800 = vmatpush.msra.mxu0 %v95
    %801 = vmatpush.msra.mxu0 %v93
    %802 = vmatpush.msra.mxu0 %v91
    %803 = vmatpush.msra.mxu0 %v89
    %804 = vmatpush.msra.mxu0 %v87
    %805 = vmatpush.msra.mxu0 %v85
    %806 = vmatpush.msra.mxu0 %v83
    %807 = vmatpush.msra.mxu0 %v81
    %808 = vmatpush.msra.mxu0 %v79
    %809 = vmatpush.msra.mxu0 %v77
    %810 = vmatpush.msra.mxu0 %v75
    %811 = vmatpush.msra.mxu0 %v73
    %812 = vmatpush.msra.mxu0 %v71
    %813 = vmatmul.f32.gmra.mxu0 %v773
    %v814 = vpop.f32.mrf.mxu0
    %v815 = vadd.f32 %v795, %v814
    %816 = vdwg.mxu0
    %817 = vmatpush.msra.mxu0 %v70
    %818 = vmatpush.msra.mxu0 %v68
    %819 = vmatpush.msra.mxu0 %v66
    %820 = vmatpush.msra.mxu0 %v64
    %821 = vmatpush.msra.mxu0 %v62
    %822 = vmatpush.msra.mxu0 %v60
    %823 = vmatpush.msra.mxu0 %v58
    %824 = vmatpush.msra.mxu0 %v56
    %825 = vmatpush.msra.mxu0 %v54
    %826 = vmatpush.msra.mxu0 %v52
    %827 = vmatpush.msra.mxu0 %v50
    %828 = vmatpush.msra.mxu0 %v48
    %829 = vmatpush.msra.mxu0 %v46
    %830 = vmatpush.msra.mxu0 %v44
    %831 = vmatpush.msra.mxu0 %v42
    %832 = vmatpush.msra.mxu0 %v40
    %833 = vmatmul.f32.gmra.mxu0 %v772
    %v834 = vpop.f32.mrf.mxu0
    %v835 = vadd.f32 0.0, %v834
    %836 = vdwg.mxu0
    %837 = vmatpush.msra.mxu0 %v102
    %838 = vmatpush.msra.mxu0 %v100
    %839 = vmatpush.msra.mxu0 %v98
    %840 = vmatpush.msra.mxu0 %v96
    %841 = vmatpush.msra.mxu0 %v94
    %842 = vmatpush.msra.mxu0 %v92
    %843 = vmatpush.msra.mxu0 %v90
    %844 = vmatpush.msra.mxu0 %v88
    %845 = vmatpush.msra.mxu0 %v86
    %846 = vmatpush.msra.mxu0 %v84
    %847 = vmatpush.msra.mxu0 %v82
    %848 = vmatpush.msra.mxu0 %v80
    %849 = vmatpush.msra.mxu0 %v78
    %850 = vmatpush.msra.mxu0 %v76
    %851 = vmatpush.msra.mxu0 %v74
    %852 = vmatpush.msra.mxu0 %v72
    %853 = vmatmul.f32.gmra.mxu0 %v773
    %v854 = vpop.f32.mrf.mxu0
    %v855 = vadd.f32 %v835, %v854
    %856 = vdwg.mxu0
    %s857 = scalar_lea.vmem %s0, 48
    %v858 = vld [vmem:[%s857] sm:$0xff]
    %v859 = vadd.f32 %v858, %v815
    %860 = vmatpush.msra.mxu0 %v118
    %861 = vmatpush.msra.mxu0 %v117
    %862 = vmatpush.msra.mxu0 %v116
    %863 = vmatpush.msra.mxu0 %v115
    %864 = vmatpush.msra.mxu0 %v114
    %865 = vmatpush.msra.mxu0 %v113
    %866 = vmatpush.msra.mxu0 %v112
    %867 = vmatpush.msra.mxu0 %v111
    %868 = vmatpush.msra.mxu0 %v110
    %869 = vmatpush.msra.mxu0 %v109
    %870 = vmatpush.msra.mxu0 %v108
    %871 = vmatpush.msra.mxu0 %v107
    %872 = vmatpush.msra.mxu0 %v106
    %873 = vmatpush.msra.mxu0 %v105
    %874 = vmatpush.msra.mxu0 %v104
    %875 = vmatpush.msra.mxu0 %v103
    %876 = vmatmul.f32.gmra.mxu0 %v859
    %v877 = vpop.f32.mrf.mxu0
    %v878 = vadd.f32 %v855, %v877
    %879 = vdwg.mxu0
    %v880 = vadd.f32 %v878, %v121
    %v881 = vtanh.pop %v859
    %v882 = vtanh.pop %v880
    %s883 = scalar_lea.vmem %s6, 96
    %884 = vst [vmem:[%s883] sm:$0xff] %v881
    %885 = vst [vmem:[%s883 + $0x8] sm:$0xff] %v882
    %886 = vmatpush.msra.mxu0 %v69
    %887 = vmatpush.msra.mxu0 %v67
    %888 = vmatpush.msra.mxu0 %v65
    %889 = vmatpush.msra.mxu0 %v63
    %890 = vmatpush.msra.mxu0 %v61
    %891 = vmatpush.msra.mxu0 %v59
    %892 = vmatpush.msra.mxu0 %v57
    %893 = vmatpush.msra.mxu0 %v55
    %894 = vmatpush.msra.mxu0 %v53
    %895 = vmatpush.msra.mxu0 %v51
    %896 = vmatpush.msra.mxu0 %v49
    %897 = vmatpush.msra.mxu0 %v47
    %898 = vmatpush.msra.mxu0 %v45
    %899 = vmatpush.msra.mxu0 %v43
    %900 = vmatpush.msra.mxu0 %v41
    %901 = vmatpush.msra.mxu0 %v39
    %902 = vmatmul.f32.gmra.mxu0 %v881
    %v903 = vpop.f32.mrf.mxu0
    %v904 = vadd.f32 0.0, %v903
    %905 = vdwg.mxu0
    %906 = vmatpush.msra.mxu0 %v101
    %907 = vmatpush.msra.mxu0 %v99
    %908 = vmatpush.msra.mxu0 %v97
    %909 = vmatpush.msra.mxu0 %v95
    %910 = vmatpush.msra.mxu0 %v93
    %911 = vmatpush.msra.mxu0 %v91
    %912 = vmatpush.msra.mxu0 %v89
    %913 = vmatpush.msra.mxu0 %v87
    %914 = vmatpush.msra.mxu0 %v85
    %915 = vmatpush.msra.mxu0 %v83
    %916 = vmatpush.msra.mxu0 %v81
    %917 = vmatpush.msra.mxu0 %v79
    %918 = vmatpush.msra.mxu0 %v77
    %919 = vmatpush.msra.mxu0 %v75
    %920 = vmatpush.msra.mxu0 %v73
    %921 = vmatpush.msra.mxu0 %v71
    %922 = vmatmul.f32.gmra.mxu0 %v882
    %v923 = vpop.f32.mrf.mxu0
    %v924 = vadd.f32 %v904, %v923
    %925 = vdwg.mxu0
    %926 = vmatpush.msra.mxu0 %v70
    %927 = vmatpush.msra.mxu0 %v68
    %928 = vmatpush.msra.mxu0 %v66
    %929 = vmatpush.msra.mxu0 %v64
    %930 = vmatpush.msra.mxu0 %v62
    %931 = vmatpush.msra.mxu0 %v60
    %932 = vmatpush.msra.mxu0 %v58
    %933 = vmatpush.msra.mxu0 %v56
    %934 = vmatpush.msra.mxu0 %v54
    %935 = vmatpush.msra.mxu0 %v52
    %936 = vmatpush.msra.mxu0 %v50
    %937 = vmatpush.msra.mxu0 %v48
    %938 = vmatpush.msra.mxu0 %v46
    %939 = vmatpush.msra.mxu0 %v44
    %940 = vmatpush.msra.mxu0 %v42
    %941 = vmatpush.msra.mxu0 %v40
    %942 = vmatmul.f32.gmra.mxu0 %v881
    %v943 = vpop.f32.mrf.mxu0
    %v944 = vadd.f32 0.0, %v943
    %945 = vdwg.mxu0
    %946 = vmatpush.msra.mxu0 %v102
    %947 = vmatpush.msra.mxu0 %v100
    %948 = vmatpush.msra.mxu0 %v98
    %949 = vmatpush.msra.mxu0 %v96
    %950 = vmatpush.msra.mxu0 %v94
    %951 = vmatpush.msra.mxu0 %v92
    %952 = vmatpush.msra.mxu0 %v90
    %953 = vmatpush.msra.mxu0 %v88
    %954 = vmatpush.msra.mxu0 %v86
    %955 = vmatpush.msra.mxu0 %v84
    %956 = vmatpush.msra.mxu0 %v82
    %957 = vmatpush.msra.mxu0 %v80
    %958 = vmatpush.msra.mxu0 %v78
    %959 = vmatpush.msra.mxu0 %v76
    %960 = vmatpush.msra.mxu0 %v74
    %961 = vmatpush.msra.mxu0 %v72
    %962 = vmatmul.f32.gmra.mxu0 %v882
    %v963 = vpop.f32.mrf.mxu0
    %v964 = vadd.f32 %v944, %v963
    %965 = vdwg.mxu0
    %s966 = scalar_lea.vmem %s0, 56
    %v967 = vld [vmem:[%s966] sm:$0xff]
    %v968 = vadd.f32 %v967, %v924
    %969 = vmatpush.msra.mxu0 %v118
    %970 = vmatpush.msra.mxu0 %v117
    %971 = vmatpush.msra.mxu0 %v116
    %972 = vmatpush.msra.mxu0 %v115
    %973 = vmatpush.msra.mxu0 %v114
    %974 = vmatpush.msra.mxu0 %v113
    %975 = vmatpush.msra.mxu0 %v112
    %976 = vmatpush.msra.mxu0 %v111
    %977 = vmatpush.msra.mxu0 %v110
    %978 = vmatpush.msra.mxu0 %v109
    %979 = vmatpush.msra.mxu0 %v108
    %980 = vmatpush.msra.mxu0 %v107
    %981 = vmatpush.msra.mxu0 %v106
    %982 = vmatpush.msra.mxu0 %v105
    %983 = vmatpush.msra.mxu0 %v104
    %984 = vmatpush.msra.mxu0 %v103
    %985 = vmatmul.f32.gmra.mxu0 %v968
    %v986 = vpop.f32.mrf.mxu0
    %v987 = vadd.f32 %v964, %v986
    %988 = vdwg.mxu0
    %v989 = vadd.f32 %v987, %v121
    %v990 = vtanh.pop %v968
    %v991 = vtanh.pop %v989
    %s992 = scalar_lea.vmem %s6, 112
    %993 = vst [vmem:[%s992] sm:$0xff] %v990
    %994 = vst [vmem:[%s992 + $0x8] sm:$0xff] %v991
    %995 = vmatpush.msra.mxu0 %v69
    %996 = vmatpush.msra.mxu0 %v67
    %997 = vmatpush.msra.mxu0 %v65
    %998 = vmatpush.msra.mxu0 %v63
    %999 = vmatpush.msra.mxu0 %v61
    %1000 = vmatpush.msra.mxu0 %v59
    %1001 = vmatpush.msra.mxu0 %v57
    %1002 = vmatpush.msra.mxu0 %v55
    %1003 = vmatpush.msra.mxu0 %v53
    %1004 = vmatpush.msra.mxu0 %v51
    %1005 = vmatpush.msra.mxu0 %v49
    %1006 = vmatpush.msra.mxu0 %v47
    %1007 = vmatpush.msra.mxu0 %v45
    %1008 = vmatpush.msra.mxu0 %v43
    %1009 = vmatpush.msra.mxu0 %v41
    %1010 = vmatpush.msra.mxu0 %v39
    %1011 = vmatmul.f32.gmra.mxu0 %v990
    %v1012 = vpop.f32.mrf.mxu0
    %v1013 = vadd.f32 0.0, %v1012
    %1014 = vdwg.mxu0
    %1015 = vmatpush.msra.mxu0 %v101
    %1016 = vmatpush.msra.mxu0 %v99
    %1017 = vmatpush.msra.mxu0 %v97
    %1018 = vmatpush.msra.mxu0 %v95
    %1019 = vmatpush.msra.mxu0 %v93
    %1020 = vmatpush.msra.mxu0 %v91
    %1021 = vmatpush.msra.mxu0 %v89
    %1022 = vmatpush.msra.mxu0 %v87
    %1023 = vmatpush.msra.mxu0 %v85
    %1024 = vmatpush.msra.mxu0 %v83
    %1025 = vmatpush.msra.mxu0 %v81
    %1026 = vmatpush.msra.mxu0 %v79
    %1027 = vmatpush.msra.mxu0 %v77
    %1028 = vmatpush.msra.mxu0 %v75
    %1029 = vmatpush.msra.mxu0 %v73
    %1030 = vmatpush.msra.mxu0 %v71
    %1031 = vmatmul.f32.gmra.mxu0 %v991
    %v1032 = vpop.f32.mrf.mxu0
    %v1033 = vadd.f32 %v1013, %v1032
    %1034 = vdwg.mxu0
    %1035 = vmatpush.msra.mxu0 %v70
    %1036 = vmatpush.msra.mxu0 %v68
    %1037 = vmatpush.msra.mxu0 %v66
    %1038 = vmatpush.msra.mxu0 %v64
    %1039 = vmatpush.msra.mxu0 %v62
    %1040 = vmatpush.msra.mxu0 %v60
    %1041 = vmatpush.msra.mxu0 %v58
    %1042 = vmatpush.msra.mxu0 %v56
    %1043 = vmatpush.msra.mxu0 %v54
    %1044 = vmatpush.msra.mxu0 %v52
    %1045 = vmatpush.msra.mxu0 %v50
    %1046 = vmatpush.msra.mxu0 %v48
    %1047 = vmatpush.msra.mxu0 %v46
    %1048 = vmatpush.msra.mxu0 %v44
    %1049 = vmatpush.msra.mxu0 %v42
    %1050 = vmatpush.msra.mxu0 %v40
    %1051 = vmatmul.f32.gmra.mxu0 %v990
    %v1052 = vpop.f32.mrf.mxu0
    %v1053 = vadd.f32 0.0, %v1052
    %1054 = vdwg.mxu0
    %1055 = vmatpush.msra.mxu0 %v102
    %1056 = vmatpush.msra.mxu0 %v100
    %1057 = vmatpush.msra.mxu0 %v98
    %1058 = vmatpush.msra.mxu0 %v96
    %1059 = vmatpush.msra.mxu0 %v94
    %1060 = vmatpush.msra.mxu0 %v92
    %1061 = vmatpush.msra.mxu0 %v90
    %1062 = vmatpush.msra.mxu0 %v88
    %1063 = vmatpush.msra.mxu0 %v86
    %1064 = vmatpush.msra.mxu0 %v84
    %1065 = vmatpush.msra.mxu0 %v82
    %1066 = vmatpush.msra.mxu0 %v80
    %1067 = vmatpush.msra.mxu0 %v78
    %1068 = vmatpush.msra.mxu0 %v76
    %1069 = vmatpush.msra.mxu0 %v74
    %1070 = vmatpush.msra.mxu0 %v72
    %1071 = vmatmul.f32.gmra.mxu0 %v991
    %v1072 = vpop.f32.mrf.mxu0
    %v1073 = vadd.f32 %v1053, %v1072
    %1074 = vdwg.mxu0
    %s1075 = scalar_lea.vmem %s0, 64
    %v1076 = vld [vmem:[%s1075] sm:$0xff]
    %v1077 = vadd.f32 %v1076, %v1033
    %1078 = vmatpush.msra.mxu0 %v118
    %1079 = vmatpush.msra.mxu0 %v117
    %1080 = vmatpush.msra.mxu0 %v116
    %1081 = vmatpush.msra.mxu0 %v115
    %1082 = vmatpush.msra.mxu0 %v114
    %1083 = vmatpush.msra.mxu0 %v113
    %1084 = vmatpush.msra.mxu0 %v112
    %1085 = vmatpush.msra.mxu0 %v111
    %1086 = vmatpush.msra.mxu0 %v110
    %1087 = vmatpush.msra.mxu0 %v109
    %1088 = vmatpush.msra.mxu0 %v108
    %1089 = vmatpush.msra.mxu0 %v107
    %1090 = vmatpush.msra.mxu0 %v106
    %1091 = vmatpush.msra.mxu0 %v105
    %1092 = vmatpush.msra.mxu0 %v104
    %1093 = vmatpush.msra.mxu0 %v103
    %1094 = vmatmul.f32.gmra.mxu0 %v1077
    %v1095 = vpop.f32.mrf.mxu0
    %v1096 = vadd.f32 %v1073, %v1095
    %1097 = vdwg.mxu0
    %v1098 = vadd.f32 %v1096, %v121
    %v1099 = vtanh.pop %v1077
    %v1100 = vtanh.pop %v1098
    %s1101 = scalar_lea.vmem %s6, 128
    %1102 = vst [vmem:[%s1101] sm:$0xff] %v1099
    %1103 = vst [vmem:[%s1101 + $0x8] sm:$0xff] %v1100
    %1104 = vmatpush.msra.mxu0 %v69
    %1105 = vmatpush.msra.mxu0 %v67
    %1106 = vmatpush.msra.mxu0 %v65
    %1107 = vmatpush.msra.mxu0 %v63
    %1108 = vmatpush.msra.mxu0 %v61
    %1109 = vmatpush.msra.mxu0 %v59
    %1110 = vmatpush.msra.mxu0 %v57
    %1111 = vmatpush.msra.mxu0 %v55
    %1112 = vmatpush.msra.mxu0 %v53
    %1113 = vmatpush.msra.mxu0 %v51
    %1114 = vmatpush.msra.mxu0 %v49
    %1115 = vmatpush.msra.mxu0 %v47
    %1116 = vmatpush.msra.mxu0 %v45
    %1117 = vmatpush.msra.mxu0 %v43
    %1118 = vmatpush.msra.mxu0 %v41
    %1119 = vmatpush.msra.mxu0 %v39
    %1120 = vmatmul.f32.gmra.mxu0 %v1099
    %v1121 = vpop.f32.mrf.mxu0
    %v1122 = vadd.f32 0.0, %v1121
    %1123 = vdwg.mxu0
    %1124 = vmatpush.msra.mxu0 %v101
    %1125 = vmatpush.msra.mxu0 %v99
    %1126 = vmatpush.msra.mxu0 %v97
    %1127 = vmatpush.msra.mxu0 %v95
    %1128 = vmatpush.msra.mxu0 %v93
    %1129 = vmatpush.msra.mxu0 %v91
    %1130 = vmatpush.msra.mxu0 %v89
    %1131 = vmatpush.msra.mxu0 %v87
    %1132 = vmatpush.msra.mxu0 %v85
    %1133 = vmatpush.msra.mxu0 %v83
    %1134 = vmatpush.msra.mxu0 %v81
    %1135 = vmatpush.msra.mxu0 %v79
    %1136 = vmatpush.msra.mxu0 %v77
    %1137 = vmatpush.msra.mxu0 %v75
    %1138 = vmatpush.msra.mxu0 %v73
    %1139 = vmatpush.msra.mxu0 %v71
    %1140 = vmatmul.f32.gmra.mxu0 %v1100
    %v1141 = vpop.f32.mrf.mxu0
    %v1142 = vadd.f32 %v1122, %v1141
    %1143 = vdwg.mxu0
    %1144 = vmatpush.msra.mxu0 %v70
    %1145 = vmatpush.msra.mxu0 %v68
    %1146 = vmatpush.msra.mxu0 %v66
    %1147 = vmatpush.msra.mxu0 %v64
    %1148 = vmatpush.msra.mxu0 %v62
    %1149 = vmatpush.msra.mxu0 %v60
    %1150 = vmatpush.msra.mxu0 %v58
    %1151 = vmatpush.msra.mxu0 %v56
    %1152 = vmatpush.msra.mxu0 %v54
    %1153 = vmatpush.msra.mxu0 %v52
    %1154 = vmatpush.msra.mxu0 %v50
    %1155 = vmatpush.msra.mxu0 %v48
    %1156 = vmatpush.msra.mxu0 %v46
    %1157 = vmatpush.msra.mxu0 %v44
    %1158 = vmatpush.msra.mxu0 %v42
    %1159 = vmatpush.msra.mxu0 %v40
    %1160 = vmatmul.f32.gmra.mxu0 %v1099
    %v1161 = vpop.f32.mrf.mxu0
    %v1162 = vadd.f32 0.0, %v1161
    %1163 = vdwg.mxu0
    %1164 = vmatpush.msra.mxu0 %v102
    %1165 = vmatpush.msra.mxu0 %v100
    %1166 = vmatpush.msra.mxu0 %v98
    %1167 = vmatpush.msra.mxu0 %v96
    %1168 = vmatpush.msra.mxu0 %v94
    %1169 = vmatpush.msra.mxu0 %v92
    %1170 = vmatpush.msra.mxu0 %v90
    %1171 = vmatpush.msra.mxu0 %v88
    %1172 = vmatpush.msra.mxu0 %v86
    %1173 = vmatpush.msra.mxu0 %v84
    %1174 = vmatpush.msra.mxu0 %v82
    %1175 = vmatpush.msra.mxu0 %v80
    %1176 = vmatpush.msra.mxu0 %v78
    %1177 = vmatpush.msra.mxu0 %v76
    %1178 = vmatpush.msra.mxu0 %v74
    %1179 = vmatpush.msra.mxu0 %v72
    %1180 = vmatmul.f32.gmra.mxu0 %v1100
    %v1181 = vpop.f32.mrf.mxu0
    %v1182 = vadd.f32 %v1162, %v1181
    %1183 = vdwg.mxu0
    %s1184 = scalar_lea.vmem %s0, 72
    %v1185 = vld [vmem:[%s1184] sm:$0xff]
    %v1186 = vadd.f32 %v1185, %v1142
    %1187 = vmatpush.msra.mxu0 %v118
    %1188 = vmatpush.msra.mxu0 %v117
    %1189 = vmatpush.msra.mxu0 %v116
    %1190 = vmatpush.msra.mxu0 %v115
    %1191 = vmatpush.msra.mxu0 %v114
    %1192 = vmatpush.msra.mxu0 %v113
    %1193 = vmatpush.msra.mxu0 %v112
    %1194 = vmatpush.msra.mxu0 %v111
    %1195 = vmatpush.msra.mxu0 %v110
    %1196 = vmatpush.msra.mxu0 %v109
    %1197 = vmatpush.msra.mxu0 %v108
    %1198 = vmatpush.msra.mxu0 %v107
    %1199 = vmatpush.msra.mxu0 %v106
    %1200 = vmatpush.msra.mxu0 %v105
    %1201 = vmatpush.msra.mxu0 %v104
    %1202 = vmatpush.msra.mxu0 %v103
    %1203 = vmatmul.f32.gmra.mxu0 %v1186
    %v1204 = vpop.f32.mrf.mxu0
    %v1205 = vadd.f32 %v1182, %v1204
    %1206 = vdwg.mxu0
    %v1207 = vadd.f32 %v1205, %v121
    %v1208 = vtanh.pop %v1186
    %v1209 = vtanh.pop %v1207
    %s1210 = scalar_lea.vmem %s6, 144
    %1211 = vst [vmem:[%s1210] sm:$0xff] %v1208
    %1212 = vst [vmem:[%s1210 + $0x8] sm:$0xff] %v1209
    %1213 = vmatpush.msra.mxu0 %v69
    %1214 = vmatpush.msra.mxu0 %v67
    %1215 = vmatpush.msra.mxu0 %v65
    %1216 = vmatpush.msra.mxu0 %v63
    %1217 = vmatpush.msra.mxu0 %v61
    %1218 = vmatpush.msra.mxu0 %v59
    %1219 = vmatpush.msra.mxu0 %v57
    %1220 = vmatpush.msra.mxu0 %v55
    %1221 = vmatpush.msra.mxu0 %v53
    %1222 = vmatpush.msra.mxu0 %v51
    %1223 = vmatpush.msra.mxu0 %v49
    %1224 = vmatpush.msra.mxu0 %v47
    %1225 = vmatpush.msra.mxu0 %v45
    %1226 = vmatpush.msra.mxu0 %v43
    %1227 = vmatpush.msra.mxu0 %v41
    %1228 = vmatpush.msra.mxu0 %v39
    %1229 = vmatmul.f32.gmra.mxu0 %v1208
    %v1230 = vpop.f32.mrf.mxu0
    %v1231 = vadd.f32 0.0, %v1230
    %1232 = vdwg.mxu0
    %1233 = vmatpush.msra.mxu0 %v101
    %1234 = vmatpush.msra.mxu0 %v99
    %1235 = vmatpush.msra.mxu0 %v97
    %1236 = vmatpush.msra.mxu0 %v95
    %1237 = vmatpush.msra.mxu0 %v93
    %1238 = vmatpush.msra.mxu0 %v91
    %1239 = vmatpush.msra.mxu0 %v89
    %1240 = vmatpush.msra.mxu0 %v87
    %1241 = vmatpush.msra.mxu0 %v85
    %1242 = vmatpush.msra.mxu0 %v83
    %1243 = vmatpush.msra.mxu0 %v81
    %1244 = vmatpush.msra.mxu0 %v79
    %1245 = vmatpush.msra.mxu0 %v77
    %1246 = vmatpush.msra.mxu0 %v75
    %1247 = vmatpush.msra.mxu0 %v73
    %1248 = vmatpush.msra.mxu0 %v71
    %1249 = vmatmul.f32.gmra.mxu0 %v1209
    %v1250 = vpop.f32.mrf.mxu0
    %v1251 = vadd.f32 %v1231, %v1250
    %1252 = vdwg.mxu0
    %1253 = vmatpush.msra.mxu0 %v70
    %1254 = vmatpush.msra.mxu0 %v68
    %1255 = vmatpush.msra.mxu0 %v66
    %1256 = vmatpush.msra.mxu0 %v64
    %1257 = vmatpush.msra.mxu0 %v62
    %1258 = vmatpush.msra.mxu0 %v60
    %1259 = vmatpush.msra.mxu0 %v58
    %1260 = vmatpush.msra.mxu0 %v56
    %1261 = vmatpush.msra.mxu0 %v54
    %1262 = vmatpush.msra.mxu0 %v52
    %1263 = vmatpush.msra.mxu0 %v50
    %1264 = vmatpush.msra.mxu0 %v48
    %1265 = vmatpush.msra.mxu0 %v46
    %1266 = vmatpush.msra.mxu0 %v44
    %1267 = vmatpush.msra.mxu0 %v42
    %1268 = vmatpush.msra.mxu0 %v40
    %1269 = vmatmul.f32.gmra.mxu0 %v1208
    %v1270 = vpop.f32.mrf.mxu0
    %v1271 = vadd.f32 0.0, %v1270
    %1272 = vdwg.mxu0
    %1273 = vmatpush.msra.mxu0 %v102
    %1274 = vmatpush.msra.mxu0 %v100
    %1275 = vmatpush.msra.mxu0 %v98
    %1276 = vmatpush.msra.mxu0 %v96
    %1277 = vmatpush.msra.mxu0 %v94
    %1278 = vmatpush.msra.mxu0 %v92
    %1279 = vmatpush.msra.mxu0 %v90
    %1280 = vmatpush.msra.mxu0 %v88
    %1281 = vmatpush.msra.mxu0 %v86
    %1282 = vmatpush.msra.mxu0 %v84
    %1283 = vmatpush.msra.mxu0 %v82
    %1284 = vmatpush.msra.mxu0 %v80
    %1285 = vmatpush.msra.mxu0 %v78
    %1286 = vmatpush.msra.mxu0 %v76
    %1287 = vmatpush.msra.mxu0 %v74
    %1288 = vmatpush.msra.mxu0 %v72
    %1289 = vmatmul.f32.gmra.mxu0 %v1209
    %v1290 = vpop.f32.mrf.mxu0
    %v1291 = vadd.f32 %v1271, %v1290
    %1292 = vdwg.mxu0
    %s1293 = scalar_lea.vmem %s0, 80
    %v1294 = vld [vmem:[%s1293] sm:$0xff]
    %v1295 = vadd.f32 %v1294, %v1251
    %1296 = vmatpush.msra.mxu0 %v118
    %1297 = vmatpush.msra.mxu0 %v117
    %1298 = vmatpush.msra.mxu0 %v116
    %1299 = vmatpush.msra.mxu0 %v115
    %1300 = vmatpush.msra.mxu0 %v114
    %1301 = vmatpush.msra.mxu0 %v113
    %1302 = vmatpush.msra.mxu0 %v112
    %1303 = vmatpush.msra.mxu0 %v111
    %1304 = vmatpush.msra.mxu0 %v110
    %1305 = vmatpush.msra.mxu0 %v109
    %1306 = vmatpush.msra.mxu0 %v108
    %1307 = vmatpush.msra.mxu0 %v107
    %1308 = vmatpush.msra.mxu0 %v106
    %1309 = vmatpush.msra.mxu0 %v105
    %1310 = vmatpush.msra.mxu0 %v104
    %1311 = vmatpush.msra.mxu0 %v103
    %1312 = vmatmul.f32.gmra.mxu0 %v1295
    %v1313 = vpop.f32.mrf.mxu0
    %v1314 = vadd.f32 %v1291, %v1313
    %1315 = vdwg.mxu0
    %v1316 = vadd.f32 %v1314, %v121
    %v1317 = vtanh.pop %v1295
    %v1318 = vtanh.pop %v1316
    %s1319 = scalar_lea.vmem %s6, 160
    %1320 = vst [vmem:[%s1319] sm:$0xff] %v1317
    %1321 = vst [vmem:[%s1319 + $0x8] sm:$0xff] %v1318
    %1322 = vmatpush.msra.mxu0 %v69
    %1323 = vmatpush.msra.mxu0 %v67
    %1324 = vmatpush.msra.mxu0 %v65
    %1325 = vmatpush.msra.mxu0 %v63
    %1326 = vmatpush.msra.mxu0 %v61
    %1327 = vmatpush.msra.mxu0 %v59
    %1328 = vmatpush.msra.mxu0 %v57
    %1329 = vmatpush.msra.mxu0 %v55
    %1330 = vmatpush.msra.mxu0 %v53
    %1331 = vmatpush.msra.mxu0 %v51
    %1332 = vmatpush.msra.mxu0 %v49
    %1333 = vmatpush.msra.mxu0 %v47
    %1334 = vmatpush.msra.mxu0 %v45
    %1335 = vmatpush.msra.mxu0 %v43
    %1336 = vmatpush.msra.mxu0 %v41
    %1337 = vmatpush.msra.mxu0 %v39
    %1338 = vmatmul.f32.gmra.mxu0 %v1317
    %v1339 = vpop.f32.mrf.mxu0
    %v1340 = vadd.f32 0.0, %v1339
    %1341 = vdwg.mxu0
    %1342 = vmatpush.msra.mxu0 %v101
    %1343 = vmatpush.msra.mxu0 %v99
    %1344 = vmatpush.msra.mxu0 %v97
    %1345 = vmatpush.msra.mxu0 %v95
    %1346 = vmatpush.msra.mxu0 %v93
    %1347 = vmatpush.msra.mxu0 %v91
    %1348 = vmatpush.msra.mxu0 %v89
    %1349 = vmatpush.msra.mxu0 %v87
    %1350 = vmatpush.msra.mxu0 %v85
    %1351 = vmatpush.msra.mxu0 %v83
    %1352 = vmatpush.msra.mxu0 %v81
    %1353 = vmatpush.msra.mxu0 %v79
    %1354 = vmatpush.msra.mxu0 %v77
    %1355 = vmatpush.msra.mxu0 %v75
    %1356 = vmatpush.msra.mxu0 %v73
    %1357 = vmatpush.msra.mxu0 %v71
    %1358 = vmatmul.f32.gmra.mxu0 %v1318
    %v1359 = vpop.f32.mrf.mxu0
    %v1360 = vadd.f32 %v1340, %v1359
    %1361 = vdwg.mxu0
    %1362 = vmatpush.msra.mxu0 %v70
    %1363 = vmatpush.msra.mxu0 %v68
    %1364 = vmatpush.msra.mxu0 %v66
    %1365 = vmatpush.msra.mxu0 %v64
    %1366 = vmatpush.msra.mxu0 %v62
    %1367 = vmatpush.msra.mxu0 %v60
    %1368 = vmatpush.msra.mxu0 %v58
    %1369 = vmatpush.msra.mxu0 %v56
    %1370 = vmatpush.msra.mxu0 %v54
    %1371 = vmatpush.msra.mxu0 %v52
    %1372 = vmatpush.msra.mxu0 %v50
    %1373 = vmatpush.msra.mxu0 %v48
    %1374 = vmatpush.msra.mxu0 %v46
    %1375 = vmatpush.msra.mxu0 %v44
    %1376 = vmatpush.msra.mxu0 %v42
    %1377 = vmatpush.msra.mxu0 %v40
    %1378 = vmatmul.f32.gmra.mxu0 %v1317
    %v1379 = vpop.f32.mrf.mxu0
    %v1380 = vadd.f32 0.0, %v1379
    %1381 = vdwg.mxu0
    %1382 = vmatpush.msra.mxu0 %v102
    %1383 = vmatpush.msra.mxu0 %v100
    %1384 = vmatpush.msra.mxu0 %v98
    %1385 = vmatpush.msra.mxu0 %v96
    %1386 = vmatpush.msra.mxu0 %v94
    %1387 = vmatpush.msra.mxu0 %v92
    %1388 = vmatpush.msra.mxu0 %v90
    %1389 = vmatpush.msra.mxu0 %v88
    %1390 = vmatpush.msra.mxu0 %v86
    %1391 = vmatpush.msra.mxu0 %v84
    %1392 = vmatpush.msra.mxu0 %v82
    %1393 = vmatpush.msra.mxu0 %v80
    %1394 = vmatpush.msra.mxu0 %v78
    %1395 = vmatpush.msra.mxu0 %v76
    %1396 = vmatpush.msra.mxu0 %v74
    %1397 = vmatpush.msra.mxu0 %v72
    %1398 = vmatmul.f32.gmra.mxu0 %v1318
    %v1399 = vpop.f32.mrf.mxu0
    %v1400 = vadd.f32 %v1380, %v1399
    %1401 = vdwg.mxu0
    %s1402 = scalar_lea.vmem %s0, 88
    %v1403 = vld [vmem:[%s1402] sm:$0xff]
    %v1404 = vadd.f32 %v1403, %v1360
    %1405 = vmatpush.msra.mxu0 %v118
    %1406 = vmatpush.msra.mxu0 %v117
    %1407 = vmatpush.msra.mxu0 %v116
    %1408 = vmatpush.msra.mxu0 %v115
    %1409 = vmatpush.msra.mxu0 %v114
    %1410 = vmatpush.msra.mxu0 %v113
    %1411 = vmatpush.msra.mxu0 %v112
    %1412 = vmatpush.msra.mxu0 %v111
    %1413 = vmatpush.msra.mxu0 %v110
    %1414 = vmatpush.msra.mxu0 %v109
    %1415 = vmatpush.msra.mxu0 %v108
    %1416 = vmatpush.msra.mxu0 %v107
    %1417 = vmatpush.msra.mxu0 %v106
    %1418 = vmatpush.msra.mxu0 %v105
    %1419 = vmatpush.msra.mxu0 %v104
    %1420 = vmatpush.msra.mxu0 %v103
    %1421 = vmatmul.f32.gmra.mxu0 %v1404
    %v1422 = vpop.f32.mrf.mxu0
    %v1423 = vadd.f32 %v1400, %v1422
    %1424 = vdwg.mxu0
    %v1425 = vadd.f32 %v1423, %v121
    %v1426 = vtanh.pop %v1404
    %v1427 = vtanh.pop %v1425
    %s1428 = scalar_lea.vmem %s6, 176
    %1429 = vst [vmem:[%s1428] sm:$0xff] %v1426
    %1430 = vst [vmem:[%s1428 + $0x8] sm:$0xff] %v1427
    %1431 = vmatpush.msra.mxu0 %v69
    %1432 = vmatpush.msra.mxu0 %v67
    %1433 = vmatpush.msra.mxu0 %v65
    %1434 = vmatpush.msra.mxu0 %v63
    %1435 = vmatpush.msra.mxu0 %v61
    %1436 = vmatpush.msra.mxu0 %v59
    %1437 = vmatpush.msra.mxu0 %v57
    %1438 = vmatpush.msra.mxu0 %v55
    %1439 = vmatpush.msra.mxu0 %v53
    %1440 = vmatpush.msra.mxu0 %v51
    %1441 = vmatpush.msra.mxu0 %v49
    %1442 = vmatpush.msra.mxu0 %v47
    %1443 = vmatpush.msra.mxu0 %v45
    %1444 = vmatpush.msra.mxu0 %v43
    %1445 = vmatpush.msra.mxu0 %v41
    %1446 = vmatpush.msra.mxu0 %v39
    %1447 = vmatmul.f32.gmra.mxu0 %v1426
    %v1448 = vpop.f32.mrf.mxu0
    %v1449 = vadd.f32 0.0, %v1448
    %1450 = vdwg.mxu0
    %1451 = vmatpush.msra.mxu0 %v101
    %1452 = vmatpush.msra.mxu0 %v99
    %1453 = vmatpush.msra.mxu0 %v97
    %1454 = vmatpush.msra.mxu0 %v95
    %1455 = vmatpush.msra.mxu0 %v93
    %1456 = vmatpush.msra.mxu0 %v91
    %1457 = vmatpush.msra.mxu0 %v89
    %1458 = vmatpush.msra.mxu0 %v87
    %1459 = vmatpush.msra.mxu0 %v85
    %1460 = vmatpush.msra.mxu0 %v83
    %1461 = vmatpush.msra.mxu0 %v81
    %1462 = vmatpush.msra.mxu0 %v79
    %1463 = vmatpush.msra.mxu0 %v77
    %1464 = vmatpush.msra.mxu0 %v75
    %1465 = vmatpush.msra.mxu0 %v73
    %1466 = vmatpush.msra.mxu0 %v71
    %1467 = vmatmul.f32.gmra.mxu0 %v1427
    %v1468 = vpop.f32.mrf.mxu0
    %v1469 = vadd.f32 %v1449, %v1468
    %1470 = vdwg.mxu0
    %1471 = vmatpush.msra.mxu0 %v70
    %1472 = vmatpush.msra.mxu0 %v68
    %1473 = vmatpush.msra.mxu0 %v66
    %1474 = vmatpush.msra.mxu0 %v64
    %1475 = vmatpush.msra.mxu0 %v62
    %1476 = vmatpush.msra.mxu0 %v60
    %1477 = vmatpush.msra.mxu0 %v58
    %1478 = vmatpush.msra.mxu0 %v56
    %1479 = vmatpush.msra.mxu0 %v54
    %1480 = vmatpush.msra.mxu0 %v52
    %1481 = vmatpush.msra.mxu0 %v50
    %1482 = vmatpush.msra.mxu0 %v48
    %1483 = vmatpush.msra.mxu0 %v46
    %1484 = vmatpush.msra.mxu0 %v44
    %1485 = vmatpush.msra.mxu0 %v42
    %1486 = vmatpush.msra.mxu0 %v40
    %1487 = vmatmul.f32.gmra.mxu0 %v1426
    %v1488 = vpop.f32.mrf.mxu0
    %v1489 = vadd.f32 0.0, %v1488
    %1490 = vdwg.mxu0
    %1491 = vmatpush.msra.mxu0 %v102
    %1492 = vmatpush.msra.mxu0 %v100
    %1493 = vmatpush.msra.mxu0 %v98
    %1494 = vmatpush.msra.mxu0 %v96
    %1495 = vmatpush.msra.mxu0 %v94
    %1496 = vmatpush.msra.mxu0 %v92
    %1497 = vmatpush.msra.mxu0 %v90
    %1498 = vmatpush.msra.mxu0 %v88
    %1499 = vmatpush.msra.mxu0 %v86
    %1500 = vmatpush.msra.mxu0 %v84
    %1501 = vmatpush.msra.mxu0 %v82
    %1502 = vmatpush.msra.mxu0 %v80
    %1503 = vmatpush.msra.mxu0 %v78
    %1504 = vmatpush.msra.mxu0 %v76
    %1505 = vmatpush.msra.mxu0 %v74
    %1506 = vmatpush.msra.mxu0 %v72
    %1507 = vmatmul.f32.gmra.mxu0 %v1427
    %v1508 = vpop.f32.mrf.mxu0
    %v1509 = vadd.f32 %v1489, %v1508
    %1510 = vdwg.mxu0
    %s1511 = scalar_lea.vmem %s0, 96
    %v1512 = vld [vmem:[%s1511] sm:$0xff]
    %v1513 = vadd.f32 %v1512, %v1469
    %1514 = vmatpush.msra.mxu0 %v118
    %1515 = vmatpush.msra.mxu0 %v117
    %1516 = vmatpush.msra.mxu0 %v116
    %1517 = vmatpush.msra.mxu0 %v115
    %1518 = vmatpush.msra.mxu0 %v114
    %1519 = vmatpush.msra.mxu0 %v113
    %1520 = vmatpush.msra.mxu0 %v112
    %1521 = vmatpush.msra.mxu0 %v111
    %1522 = vmatpush.msra.mxu0 %v110
    %1523 = vmatpush.msra.mxu0 %v109
    %1524 = vmatpush.msra.mxu0 %v108
    %1525 = vmatpush.msra.mxu0 %v107
    %1526 = vmatpush.msra.mxu0 %v106
    %1527 = vmatpush.msra.mxu0 %v105
    %1528 = vmatpush.msra.mxu0 %v104
    %1529 = vmatpush.msra.mxu0 %v103
    %1530 = vmatmul.f32.gmra.mxu0 %v1513
    %v1531 = vpop.f32.mrf.mxu0
    %v1532 = vadd.f32 %v1509, %v1531
    %1533 = vdwg.mxu0
    %v1534 = vadd.f32 %v1532, %v121
    %v1535 = vtanh.pop %v1513
    %v1536 = vtanh.pop %v1534
    %s1537 = scalar_lea.vmem %s6, 192
    %1538 = vst [vmem:[%s1537] sm:$0xff] %v1535
    %1539 = vst [vmem:[%s1537 + $0x8] sm:$0xff] %v1536
    %1540 = vmatpush.msra.mxu0 %v69
    %1541 = vmatpush.msra.mxu0 %v67
    %1542 = vmatpush.msra.mxu0 %v65
    %1543 = vmatpush.msra.mxu0 %v63
    %1544 = vmatpush.msra.mxu0 %v61
    %1545 = vmatpush.msra.mxu0 %v59
    %1546 = vmatpush.msra.mxu0 %v57
    %1547 = vmatpush.msra.mxu0 %v55
    %1548 = vmatpush.msra.mxu0 %v53
    %1549 = vmatpush.msra.mxu0 %v51
    %1550 = vmatpush.msra.mxu0 %v49
    %1551 = vmatpush.msra.mxu0 %v47
    %1552 = vmatpush.msra.mxu0 %v45
    %1553 = vmatpush.msra.mxu0 %v43
    %1554 = vmatpush.msra.mxu0 %v41
    %1555 = vmatpush.msra.mxu0 %v39
    %1556 = vmatmul.f32.gmra.mxu0 %v1535
    %v1557 = vpop.f32.mrf.mxu0
    %v1558 = vadd.f32 0.0, %v1557
    %1559 = vdwg.mxu0
    %1560 = vmatpush.msra.mxu0 %v101
    %1561 = vmatpush.msra.mxu0 %v99
    %1562 = vmatpush.msra.mxu0 %v97
    %1563 = vmatpush.msra.mxu0 %v95
    %1564 = vmatpush.msra.mxu0 %v93
    %1565 = vmatpush.msra.mxu0 %v91
    %1566 = vmatpush.msra.mxu0 %v89
    %1567 = vmatpush.msra.mxu0 %v87
    %1568 = vmatpush.msra.mxu0 %v85
    %1569 = vmatpush.msra.mxu0 %v83
    %1570 = vmatpush.msra.mxu0 %v81
    %1571 = vmatpush.msra.mxu0 %v79
    %1572 = vmatpush.msra.mxu0 %v77
    %1573 = vmatpush.msra.mxu0 %v75
    %1574 = vmatpush.msra.mxu0 %v73
    %1575 = vmatpush.msra.mxu0 %v71
    %1576 = vmatmul.f32.gmra.mxu0 %v1536
    %v1577 = vpop.f32.mrf.mxu0
    %v1578 = vadd.f32 %v1558, %v1577
    %1579 = vdwg.mxu0
    %1580 = vmatpush.msra.mxu0 %v70
    %1581 = vmatpush.msra.mxu0 %v68
    %1582 = vmatpush.msra.mxu0 %v66
    %1583 = vmatpush.msra.mxu0 %v64
    %1584 = vmatpush.msra.mxu0 %v62
    %1585 = vmatpush.msra.mxu0 %v60
    %1586 = vmatpush.msra.mxu0 %v58
    %1587 = vmatpush.msra.mxu0 %v56
    %1588 = vmatpush.msra.mxu0 %v54
    %1589 = vmatpush.msra.mxu0 %v52
    %1590 = vmatpush.msra.mxu0 %v50
    %1591 = vmatpush.msra.mxu0 %v48
    %1592 = vmatpush.msra.mxu0 %v46
    %1593 = vmatpush.msra.mxu0 %v44
    %1594 = vmatpush.msra.mxu0 %v42
    %1595 = vmatpush.msra.mxu0 %v40
    %1596 = vmatmul.f32.gmra.mxu0 %v1535
    %v1597 = vpop.f32.mrf.mxu0
    %v1598 = vadd.f32 0.0, %v1597
    %1599 = vdwg.mxu0
    %1600 = vmatpush.msra.mxu0 %v102
    %1601 = vmatpush.msra.mxu0 %v100
    %1602 = vmatpush.msra.mxu0 %v98
    %1603 = vmatpush.msra.mxu0 %v96
    %1604 = vmatpush.msra.mxu0 %v94
    %1605 = vmatpush.msra.mxu0 %v92
    %1606 = vmatpush.msra.mxu0 %v90
    %1607 = vmatpush.msra.mxu0 %v88
    %1608 = vmatpush.msra.mxu0 %v86
    %1609 = vmatpush.msra.mxu0 %v84
    %1610 = vmatpush.msra.mxu0 %v82
    %1611 = vmatpush.msra.mxu0 %v80
    %1612 = vmatpush.msra.mxu0 %v78
    %1613 = vmatpush.msra.mxu0 %v76
    %1614 = vmatpush.msra.mxu0 %v74
    %1615 = vmatpush.msra.mxu0 %v72
    %1616 = vmatmul.f32.gmra.mxu0 %v1536
    %v1617 = vpop.f32.mrf.mxu0
    %v1618 = vadd.f32 %v1598, %v1617
    %1619 = vdwg.mxu0
    %s1620 = scalar_lea.vmem %s0, 104
    %v1621 = vld [vmem:[%s1620] sm:$0xff]
    %v1622 = vadd.f32 %v1621, %v1578
    %1623 = vmatpush.msra.mxu0 %v118
    %1624 = vmatpush.msra.mxu0 %v117
    %1625 = vmatpush.msra.mxu0 %v116
    %1626 = vmatpush.msra.mxu0 %v115
    %1627 = vmatpush.msra.mxu0 %v114
    %1628 = vmatpush.msra.mxu0 %v113
    %1629 = vmatpush.msra.mxu0 %v112
    %1630 = vmatpush.msra.mxu0 %v111
    %1631 = vmatpush.msra.mxu0 %v110
    %1632 = vmatpush.msra.mxu0 %v109
    %1633 = vmatpush.msra.mxu0 %v108
    %1634 = vmatpush.msra.mxu0 %v107
    %1635 = vmatpush.msra.mxu0 %v106
    %1636 = vmatpush.msra.mxu0 %v105
    %1637 = vmatpush.msra.mxu0 %v104
    %1638 = vmatpush.msra.mxu0 %v103
    %1639 = vmatmul.f32.gmra.mxu0 %v1622
    %v1640 = vpop.f32.mrf.mxu0
    %v1641 = vadd.f32 %v1618, %v1640
    %1642 = vdwg.mxu0
    %v1643 = vadd.f32 %v1641, %v121
    %v1644 = vtanh.pop %v1622
    %v1645 = vtanh.pop %v1643
    %s1646 = scalar_lea.vmem %s6, 208
    %1647 = vst [vmem:[%s1646] sm:$0xff] %v1644
    %1648 = vst [vmem:[%s1646 + $0x8] sm:$0xff] %v1645
    %1649 = vmatpush.msra.mxu0 %v69
    %1650 = vmatpush.msra.mxu0 %v67
    %1651 = vmatpush.msra.mxu0 %v65
    %1652 = vmatpush.msra.mxu0 %v63
    %1653 = vmatpush.msra.mxu0 %v61
    %1654 = vmatpush.msra.mxu0 %v59
    %1655 = vmatpush.msra.mxu0 %v57
    %1656 = vmatpush.msra.mxu0 %v55
    %1657 = vmatpush.msra.mxu0 %v53
    %1658 = vmatpush.msra.mxu0 %v51
    %1659 = vmatpush.msra.mxu0 %v49
    %1660 = vmatpush.msra.mxu0 %v47
    %1661 = vmatpush.msra.mxu0 %v45
    %1662 = vmatpush.msra.mxu0 %v43
    %1663 = vmatpush.msra.mxu0 %v41
    %1664 = vmatpush.msra.mxu0 %v39
    %1665 = vmatmul.f32.gmra.mxu0 %v1644
    %v1666 = vpop.f32.mrf.mxu0
    %v1667 = vadd.f32 0.0, %v1666
    %1668 = vdwg.mxu0
    %1669 = vmatpush.msra.mxu0 %v101
    %1670 = vmatpush.msra.mxu0 %v99
    %1671 = vmatpush.msra.mxu0 %v97
    %1672 = vmatpush.msra.mxu0 %v95
    %1673 = vmatpush.msra.mxu0 %v93
    %1674 = vmatpush.msra.mxu0 %v91
    %1675 = vmatpush.msra.mxu0 %v89
    %1676 = vmatpush.msra.mxu0 %v87
    %1677 = vmatpush.msra.mxu0 %v85
    %1678 = vmatpush.msra.mxu0 %v83
    %1679 = vmatpush.msra.mxu0 %v81
    %1680 = vmatpush.msra.mxu0 %v79
    %1681 = vmatpush.msra.mxu0 %v77
    %1682 = vmatpush.msra.mxu0 %v75
    %1683 = vmatpush.msra.mxu0 %v73
    %1684 = vmatpush.msra.mxu0 %v71
    %1685 = vmatmul.f32.gmra.mxu0 %v1645
    %v1686 = vpop.f32.mrf.mxu0
    %v1687 = vadd.f32 %v1667, %v1686
    %1688 = vdwg.mxu0
    %1689 = vmatpush.msra.mxu0 %v70
    %1690 = vmatpush.msra.mxu0 %v68
    %1691 = vmatpush.msra.mxu0 %v66
    %1692 = vmatpush.msra.mxu0 %v64
    %1693 = vmatpush.msra.mxu0 %v62
    %1694 = vmatpush.msra.mxu0 %v60
    %1695 = vmatpush.msra.mxu0 %v58
    %1696 = vmatpush.msra.mxu0 %v56
    %1697 = vmatpush.msra.mxu0 %v54
    %1698 = vmatpush.msra.mxu0 %v52
    %1699 = vmatpush.msra.mxu0 %v50
    %1700 = vmatpush.msra.mxu0 %v48
    %1701 = vmatpush.msra.mxu0 %v46
    %1702 = vmatpush.msra.mxu0 %v44
    %1703 = vmatpush.msra.mxu0 %v42
    %1704 = vmatpush.msra.mxu0 %v40
    %1705 = vmatmul.f32.gmra.mxu0 %v1644
    %v1706 = vpop.f32.mrf.mxu0
    %v1707 = vadd.f32 0.0, %v1706
    %1708 = vdwg.mxu0
    %1709 = vmatpush.msra.mxu0 %v102
    %1710 = vmatpush.msra.mxu0 %v100
    %1711 = vmatpush.msra.mxu0 %v98
    %1712 = vmatpush.msra.mxu0 %v96
    %1713 = vmatpush.msra.mxu0 %v94
    %1714 = vmatpush.msra.mxu0 %v92
    %1715 = vmatpush.msra.mxu0 %v90
    %1716 = vmatpush.msra.mxu0 %v88
    %1717 = vmatpush.msra.mxu0 %v86
    %1718 = vmatpush.msra.mxu0 %v84
    %1719 = vmatpush.msra.mxu0 %v82
    %1720 = vmatpush.msra.mxu0 %v80
    %1721 = vmatpush.msra.mxu0 %v78
    %1722 = vmatpush.msra.mxu0 %v76
    %1723 = vmatpush.msra.mxu0 %v74
    %1724 = vmatpush.msra.mxu0 %v72
    %1725 = vmatmul.f32.gmra.mxu0 %v1645
    %v1726 = vpop.f32.mrf.mxu0
    %v1727 = vadd.f32 %v1707, %v1726
    %1728 = vdwg.mxu0
    %s1729 = scalar_lea.vmem %s0, 112
    %v1730 = vld [vmem:[%s1729] sm:$0xff]
    %v1731 = vadd.f32 %v1730, %v1687
    %1732 = vmatpush.msra.mxu0 %v118
    %1733 = vmatpush.msra.mxu0 %v117
    %1734 = vmatpush.msra.mxu0 %v116
    %1735 = vmatpush.msra.mxu0 %v115
    %1736 = vmatpush.msra.mxu0 %v114
    %1737 = vmatpush.msra.mxu0 %v113
    %1738 = vmatpush.msra.mxu0 %v112
    %1739 = vmatpush.msra.mxu0 %v111
    %1740 = vmatpush.msra.mxu0 %v110
    %1741 = vmatpush.msra.mxu0 %v109
    %1742 = vmatpush.msra.mxu0 %v108
    %1743 = vmatpush.msra.mxu0 %v107
    %1744 = vmatpush.msra.mxu0 %v106
    %1745 = vmatpush.msra.mxu0 %v105
    %1746 = vmatpush.msra.mxu0 %v104
    %1747 = vmatpush.msra.mxu0 %v103
    %1748 = vmatmul.f32.gmra.mxu0 %v1731
    %v1749 = vpop.f32.mrf.mxu0
    %v1750 = vadd.f32 %v1727, %v1749
    %1751 = vdwg.mxu0
    %v1752 = vadd.f32 %v1750, %v121
    %v1753 = vtanh.pop %v1731
    %v1754 = vtanh.pop %v1752
    %s1755 = scalar_lea.vmem %s6, 224
    %1756 = vst [vmem:[%s1755] sm:$0xff] %v1753
    %1757 = vst [vmem:[%s1755 + $0x8] sm:$0xff] %v1754
    %1758 = vmatpush.msra.mxu0 %v69
    %1759 = vmatpush.msra.mxu0 %v67
    %1760 = vmatpush.msra.mxu0 %v65
    %1761 = vmatpush.msra.mxu0 %v63
    %1762 = vmatpush.msra.mxu0 %v61
    %1763 = vmatpush.msra.mxu0 %v59
    %1764 = vmatpush.msra.mxu0 %v57
    %1765 = vmatpush.msra.mxu0 %v55
    %1766 = vmatpush.msra.mxu0 %v53
    %1767 = vmatpush.msra.mxu0 %v51
    %1768 = vmatpush.msra.mxu0 %v49
    %1769 = vmatpush.msra.mxu0 %v47
    %1770 = vmatpush.msra.mxu0 %v45
    %1771 = vmatpush.msra.mxu0 %v43
    %1772 = vmatpush.msra.mxu0 %v41
    %1773 = vmatpush.msra.mxu0 %v39
    %1774 = vmatmul.f32.gmra.mxu0 %v1753
    %v1775 = vpop.f32.mrf.mxu0
    %v1776 = vadd.f32 0.0, %v1775
    %1777 = vdwg.mxu0
    %1778 = vmatpush.msra.mxu0 %v101
    %1779 = vmatpush.msra.mxu0 %v99
    %1780 = vmatpush.msra.mxu0 %v97
    %1781 = vmatpush.msra.mxu0 %v95
    %1782 = vmatpush.msra.mxu0 %v93
    %1783 = vmatpush.msra.mxu0 %v91
    %1784 = vmatpush.msra.mxu0 %v89
    %1785 = vmatpush.msra.mxu0 %v87
    %1786 = vmatpush.msra.mxu0 %v85
    %1787 = vmatpush.msra.mxu0 %v83
    %1788 = vmatpush.msra.mxu0 %v81
    %1789 = vmatpush.msra.mxu0 %v79
    %1790 = vmatpush.msra.mxu0 %v77
    %1791 = vmatpush.msra.mxu0 %v75
    %1792 = vmatpush.msra.mxu0 %v73
    %1793 = vmatpush.msra.mxu0 %v71
    %1794 = vmatmul.f32.gmra.mxu0 %v1754
    %v1795 = vpop.f32.mrf.mxu0
    %v1796 = vadd.f32 %v1776, %v1795
    %1797 = vdwg.mxu0
    %1798 = vmatpush.msra.mxu0 %v70
    %1799 = vmatpush.msra.mxu0 %v68
    %1800 = vmatpush.msra.mxu0 %v66
    %1801 = vmatpush.msra.mxu0 %v64
    %1802 = vmatpush.msra.mxu0 %v62
    %1803 = vmatpush.msra.mxu0 %v60
    %1804 = vmatpush.msra.mxu0 %v58
    %1805 = vmatpush.msra.mxu0 %v56
    %1806 = vmatpush.msra.mxu0 %v54
    %1807 = vmatpush.msra.mxu0 %v52
    %1808 = vmatpush.msra.mxu0 %v50
    %1809 = vmatpush.msra.mxu0 %v48
    %1810 = vmatpush.msra.mxu0 %v46
    %1811 = vmatpush.msra.mxu0 %v44
    %1812 = vmatpush.msra.mxu0 %v42
    %1813 = vmatpush.msra.mxu0 %v40
    %1814 = vmatmul.f32.gmra.mxu0 %v1753
    %v1815 = vpop.f32.mrf.mxu0
    %v1816 = vadd.f32 0.0, %v1815
    %1817 = vdwg.mxu0
    %1818 = vmatpush.msra.mxu0 %v102
    %1819 = vmatpush.msra.mxu0 %v100
    %1820 = vmatpush.msra.mxu0 %v98
    %1821 = vmatpush.msra.mxu0 %v96
    %1822 = vmatpush.msra.mxu0 %v94
    %1823 = vmatpush.msra.mxu0 %v92
    %1824 = vmatpush.msra.mxu0 %v90
    %1825 = vmatpush.msra.mxu0 %v88
    %1826 = vmatpush.msra.mxu0 %v86
    %1827 = vmatpush.msra.mxu0 %v84
    %1828 = vmatpush.msra.mxu0 %v82
    %1829 = vmatpush.msra.mxu0 %v80
    %1830 = vmatpush.msra.mxu0 %v78
    %1831 = vmatpush.msra.mxu0 %v76
    %1832 = vmatpush.msra.mxu0 %v74
    %1833 = vmatpush.msra.mxu0 %v72
    %1834 = vmatmul.f32.gmra.mxu0 %v1754
    %v1835 = vpop.f32.mrf.mxu0
    %v1836 = vadd.f32 %v1816, %v1835
    %1837 = vdwg.mxu0
    %s1838 = scalar_lea.vmem %s0, 120
    %v1839 = vld [vmem:[%s1838] sm:$0xff]
    %v1840 = vadd.f32 %v1839, %v1796
    %1841 = vmatpush.msra.mxu0 %v118
    %1842 = vmatpush.msra.mxu0 %v117
    %1843 = vmatpush.msra.mxu0 %v116
    %1844 = vmatpush.msra.mxu0 %v115
    %1845 = vmatpush.msra.mxu0 %v114
    %1846 = vmatpush.msra.mxu0 %v113
    %1847 = vmatpush.msra.mxu0 %v112
    %1848 = vmatpush.msra.mxu0 %v111
    %1849 = vmatpush.msra.mxu0 %v110
    %1850 = vmatpush.msra.mxu0 %v109
    %1851 = vmatpush.msra.mxu0 %v108
    %1852 = vmatpush.msra.mxu0 %v107
    %1853 = vmatpush.msra.mxu0 %v106
    %1854 = vmatpush.msra.mxu0 %v105
    %1855 = vmatpush.msra.mxu0 %v104
    %1856 = vmatpush.msra.mxu0 %v103
    %1857 = vmatmul.f32.gmra.mxu0 %v1840
    %v1858 = vpop.f32.mrf.mxu0
    %v1859 = vadd.f32 %v1836, %v1858
    %1860 = vdwg.mxu0
    %v1861 = vadd.f32 %v1859, %v121
    %v1862 = vtanh.pop %v1840
    %v1863 = vtanh.pop %v1861
    %s1864 = scalar_lea.vmem %s6, 240
    %1865 = vst [vmem:[%s1864] sm:$0xff] %v1862
    %1866 = vst [vmem:[%s1864 + $0x8] sm:$0xff] %v1863
    %1867 = vmatpush.msra.mxu0 %v69
    %1868 = vmatpush.msra.mxu0 %v67
    %1869 = vmatpush.msra.mxu0 %v65
    %1870 = vmatpush.msra.mxu0 %v63
    %1871 = vmatpush.msra.mxu0 %v61
    %1872 = vmatpush.msra.mxu0 %v59
    %1873 = vmatpush.msra.mxu0 %v57
    %1874 = vmatpush.msra.mxu0 %v55
    %1875 = vmatpush.msra.mxu0 %v53
    %1876 = vmatpush.msra.mxu0 %v51
    %1877 = vmatpush.msra.mxu0 %v49
    %1878 = vmatpush.msra.mxu0 %v47
    %1879 = vmatpush.msra.mxu0 %v45
    %1880 = vmatpush.msra.mxu0 %v43
    %1881 = vmatpush.msra.mxu0 %v41
    %1882 = vmatpush.msra.mxu0 %v39
    %1883 = vmatmul.f32.gmra.mxu0 %v1862
    %v1884 = vpop.f32.mrf.mxu0
    %v1885 = vadd.f32 0.0, %v1884
    %1886 = vdwg.mxu0
    %1887 = vmatpush.msra.mxu0 %v101
    %1888 = vmatpush.msra.mxu0 %v99
    %1889 = vmatpush.msra.mxu0 %v97
    %1890 = vmatpush.msra.mxu0 %v95
    %1891 = vmatpush.msra.mxu0 %v93
    %1892 = vmatpush.msra.mxu0 %v91
    %1893 = vmatpush.msra.mxu0 %v89
    %1894 = vmatpush.msra.mxu0 %v87
    %1895 = vmatpush.msra.mxu0 %v85
    %1896 = vmatpush.msra.mxu0 %v83
    %1897 = vmatpush.msra.mxu0 %v81
    %1898 = vmatpush.msra.mxu0 %v79
    %1899 = vmatpush.msra.mxu0 %v77
    %1900 = vmatpush.msra.mxu0 %v75
    %1901 = vmatpush.msra.mxu0 %v73
    %1902 = vmatpush.msra.mxu0 %v71
    %1903 = vmatmul.f32.gmra.mxu0 %v1863
    %v1904 = vpop.f32.mrf.mxu0
    %v1905 = vadd.f32 %v1885, %v1904
    %1906 = vdwg.mxu0
    %1907 = vmatpush.msra.mxu0 %v70
    %1908 = vmatpush.msra.mxu0 %v68
    %1909 = vmatpush.msra.mxu0 %v66
    %1910 = vmatpush.msra.mxu0 %v64
    %1911 = vmatpush.msra.mxu0 %v62
    %1912 = vmatpush.msra.mxu0 %v60
    %1913 = vmatpush.msra.mxu0 %v58
    %1914 = vmatpush.msra.mxu0 %v56
    %1915 = vmatpush.msra.mxu0 %v54
    %1916 = vmatpush.msra.mxu0 %v52
    %1917 = vmatpush.msra.mxu0 %v50
    %1918 = vmatpush.msra.mxu0 %v48
    %1919 = vmatpush.msra.mxu0 %v46
    %1920 = vmatpush.msra.mxu0 %v44
    %1921 = vmatpush.msra.mxu0 %v42
    %1922 = vmatpush.msra.mxu0 %v40
    %1923 = vmatmul.f32.gmra.mxu0 %v1862
    %v1924 = vpop.f32.mrf.mxu0
    %v1925 = vadd.f32 0.0, %v1924
    %1926 = vdwg.mxu0
    %1927 = vmatpush.msra.mxu0 %v102
    %1928 = vmatpush.msra.mxu0 %v100
    %1929 = vmatpush.msra.mxu0 %v98
    %1930 = vmatpush.msra.mxu0 %v96
    %1931 = vmatpush.msra.mxu0 %v94
    %1932 = vmatpush.msra.mxu0 %v92
    %1933 = vmatpush.msra.mxu0 %v90
    %1934 = vmatpush.msra.mxu0 %v88
    %1935 = vmatpush.msra.mxu0 %v86
    %1936 = vmatpush.msra.mxu0 %v84
    %1937 = vmatpush.msra.mxu0 %v82
    %1938 = vmatpush.msra.mxu0 %v80
    %1939 = vmatpush.msra.mxu0 %v78
    %1940 = vmatpush.msra.mxu0 %v76
    %1941 = vmatpush.msra.mxu0 %v74
    %1942 = vmatpush.msra.mxu0 %v72
    %1943 = vmatmul.f32.gmra.mxu0 %v1863
    %v1944 = vpop.f32.mrf.mxu0
    %v1945 = vadd.f32 %v1925, %v1944
    %1946 = vdwg.mxu0
    %s1947 = scalar_lea.vmem %s0, 128
    %v1948 = vld [vmem:[%s1947] sm:$0xff]
    %v1949 = vadd.f32 %v1948, %v1905
    %1950 = vmatpush.msra.mxu0 %v118
    %1951 = vmatpush.msra.mxu0 %v117
    %1952 = vmatpush.msra.mxu0 %v116
    %1953 = vmatpush.msra.mxu0 %v115
    %1954 = vmatpush.msra.mxu0 %v114
    %1955 = vmatpush.msra.mxu0 %v113
    %1956 = vmatpush.msra.mxu0 %v112
    %1957 = vmatpush.msra.mxu0 %v111
    %1958 = vmatpush.msra.mxu0 %v110
    %1959 = vmatpush.msra.mxu0 %v109
    %1960 = vmatpush.msra.mxu0 %v108
    %1961 = vmatpush.msra.mxu0 %v107
    %1962 = vmatpush.msra.mxu0 %v106
    %1963 = vmatpush.msra.mxu0 %v105
    %1964 = vmatpush.msra.mxu0 %v104
    %1965 = vmatpush.msra.mxu0 %v103
    %1966 = vmatmul.f32.gmra.mxu0 %v1949
    %v1967 = vpop.f32.mrf.mxu0
    %v1968 = vadd.f32 %v1945, %v1967
    %1969 = vdwg.mxu0
    %v1970 = vadd.f32 %v1968, %v121
    %v1971 = vtanh.pop %v1949
    %v1972 = vtanh.pop %v1970
    %s1973 = scalar_lea.vmem %s6, 256
    %1974 = vst [vmem:[%s1973] sm:$0xff] %v1971
    %1975 = vst [vmem:[%s1973 + $0x8] sm:$0xff] %v1972
    %1976 = vmatpush.msra.mxu0 %v69
    %1977 = vmatpush.msra.mxu0 %v67
    %1978 = vmatpush.msra.mxu0 %v65
    %1979 = vmatpush.msra.mxu0 %v63
    %1980 = vmatpush.msra.mxu0 %v61
    %1981 = vmatpush.msra.mxu0 %v59
    %1982 = vmatpush.msra.mxu0 %v57
    %1983 = vmatpush.msra.mxu0 %v55
    %1984 = vmatpush.msra.mxu0 %v53
    %1985 = vmatpush.msra.mxu0 %v51
    %1986 = vmatpush.msra.mxu0 %v49
    %1987 = vmatpush.msra.mxu0 %v47
    %1988 = vmatpush.msra.mxu0 %v45
    %1989 = vmatpush.msra.mxu0 %v43
    %1990 = vmatpush.msra.mxu0 %v41
    %1991 = vmatpush.msra.mxu0 %v39
    %1992 = vmatmul.f32.gmra.mxu0 %v1971
    %v1993 = vpop.f32.mrf.mxu0
    %v1994 = vadd.f32 0.0, %v1993
    %1995 = vdwg.mxu0
    %1996 = vmatpush.msra.mxu0 %v101
    %1997 = vmatpush.msra.mxu0 %v99
    %1998 = vmatpush.msra.mxu0 %v97
    %1999 = vmatpush.msra.mxu0 %v95
    %2000 = vmatpush.msra.mxu0 %v93
    %2001 = vmatpush.msra.mxu0 %v91
    %2002 = vmatpush.msra.mxu0 %v89
    %2003 = vmatpush.msra.mxu0 %v87
    %2004 = vmatpush.msra.mxu0 %v85
    %2005 = vmatpush.msra.mxu0 %v83
    %2006 = vmatpush.msra.mxu0 %v81
    %2007 = vmatpush.msra.mxu0 %v79
    %2008 = vmatpush.msra.mxu0 %v77
    %2009 = vmatpush.msra.mxu0 %v75
    %2010 = vmatpush.msra.mxu0 %v73
    %2011 = vmatpush.msra.mxu0 %v71
    %2012 = vmatmul.f32.gmra.mxu0 %v1972
    %v2013 = vpop.f32.mrf.mxu0
    %v2014 = vadd.f32 %v1994, %v2013
    %2015 = vdwg.mxu0
    %2016 = vmatpush.msra.mxu0 %v70
    %2017 = vmatpush.msra.mxu0 %v68
    %2018 = vmatpush.msra.mxu0 %v66
    %2019 = vmatpush.msra.mxu0 %v64
    %2020 = vmatpush.msra.mxu0 %v62
    %2021 = vmatpush.msra.mxu0 %v60
    %2022 = vmatpush.msra.mxu0 %v58
    %2023 = vmatpush.msra.mxu0 %v56
    %2024 = vmatpush.msra.mxu0 %v54
    %2025 = vmatpush.msra.mxu0 %v52
    %2026 = vmatpush.msra.mxu0 %v50
    %2027 = vmatpush.msra.mxu0 %v48
    %2028 = vmatpush.msra.mxu0 %v46
    %2029 = vmatpush.msra.mxu0 %v44
    %2030 = vmatpush.msra.mxu0 %v42
    %2031 = vmatpush.msra.mxu0 %v40
    %2032 = vmatmul.f32.gmra.mxu0 %v1971
    %v2033 = vpop.f32.mrf.mxu0
    %v2034 = vadd.f32 0.0, %v2033
    %2035 = vdwg.mxu0
    %2036 = vmatpush.msra.mxu0 %v102
    %2037 = vmatpush.msra.mxu0 %v100
    %2038 = vmatpush.msra.mxu0 %v98
    %2039 = vmatpush.msra.mxu0 %v96
    %2040 = vmatpush.msra.mxu0 %v94
    %2041 = vmatpush.msra.mxu0 %v92
    %2042 = vmatpush.msra.mxu0 %v90
    %2043 = vmatpush.msra.mxu0 %v88
    %2044 = vmatpush.msra.mxu0 %v86
    %2045 = vmatpush.msra.mxu0 %v84
    %2046 = vmatpush.msra.mxu0 %v82
    %2047 = vmatpush.msra.mxu0 %v80
    %2048 = vmatpush.msra.mxu0 %v78
    %2049 = vmatpush.msra.mxu0 %v76
    %2050 = vmatpush.msra.mxu0 %v74
    %2051 = vmatpush.msra.mxu0 %v72
    %2052 = vmatmul.f32.gmra.mxu0 %v1972
    %v2053 = vpop.f32.mrf.mxu0
    %v2054 = vadd.f32 %v2034, %v2053
    %2055 = vdwg.mxu0
    %s2056 = scalar_lea.vmem %s0, 136
    %v2057 = vld [vmem:[%s2056] sm:$0xff]
    %v2058 = vadd.f32 %v2057, %v2014
    %2059 = vmatpush.msra.mxu0 %v118
    %2060 = vmatpush.msra.mxu0 %v117
    %2061 = vmatpush.msra.mxu0 %v116
    %2062 = vmatpush.msra.mxu0 %v115
    %2063 = vmatpush.msra.mxu0 %v114
    %2064 = vmatpush.msra.mxu0 %v113
    %2065 = vmatpush.msra.mxu0 %v112
    %2066 = vmatpush.msra.mxu0 %v111
    %2067 = vmatpush.msra.mxu0 %v110
    %2068 = vmatpush.msra.mxu0 %v109
    %2069 = vmatpush.msra.mxu0 %v108
    %2070 = vmatpush.msra.mxu0 %v107
    %2071 = vmatpush.msra.mxu0 %v106
    %2072 = vmatpush.msra.mxu0 %v105
    %2073 = vmatpush.msra.mxu0 %v104
    %2074 = vmatpush.msra.mxu0 %v103
    %2075 = vmatmul.f32.gmra.mxu0 %v2058
    %v2076 = vpop.f32.mrf.mxu0
    %v2077 = vadd.f32 %v2054, %v2076
    %2078 = vdwg.mxu0
    %v2079 = vadd.f32 %v2077, %v121
    %v2080 = vtanh.pop %v2058
    %v2081 = vtanh.pop %v2079
    %s2082 = scalar_lea.vmem %s6, 272
    %2083 = vst [vmem:[%s2082] sm:$0xff] %v2080
    %2084 = vst [vmem:[%s2082 + $0x8] sm:$0xff] %v2081
    %2085 = vmatpush.msra.mxu0 %v69
    %2086 = vmatpush.msra.mxu0 %v67
    %2087 = vmatpush.msra.mxu0 %v65
    %2088 = vmatpush.msra.mxu0 %v63
    %2089 = vmatpush.msra.mxu0 %v61
    %2090 = vmatpush.msra.mxu0 %v59
    %2091 = vmatpush.msra.mxu0 %v57
    %2092 = vmatpush.msra.mxu0 %v55
    %2093 = vmatpush.msra.mxu0 %v53
    %2094 = vmatpush.msra.mxu0 %v51
    %2095 = vmatpush.msra.mxu0 %v49
    %2096 = vmatpush.msra.mxu0 %v47
    %2097 = vmatpush.msra.mxu0 %v45
    %2098 = vmatpush.msra.mxu0 %v43
    %2099 = vmatpush.msra.mxu0 %v41
    %2100 = vmatpush.msra.mxu0 %v39
    %2101 = vmatmul.f32.gmra.mxu0 %v2080
    %v2102 = vpop.f32.mrf.mxu0
    %v2103 = vadd.f32 0.0, %v2102
    %2104 = vdwg.mxu0
    %2105 = vmatpush.msra.mxu0 %v101
    %2106 = vmatpush.msra.mxu0 %v99
    %2107 = vmatpush.msra.mxu0 %v97
    %2108 = vmatpush.msra.mxu0 %v95
    %2109 = vmatpush.msra.mxu0 %v93
    %2110 = vmatpush.msra.mxu0 %v91
    %2111 = vmatpush.msra.mxu0 %v89
    %2112 = vmatpush.msra.mxu0 %v87
    %2113 = vmatpush.msra.mxu0 %v85
    %2114 = vmatpush.msra.mxu0 %v83
    %2115 = vmatpush.msra.mxu0 %v81
    %2116 = vmatpush.msra.mxu0 %v79
    %2117 = vmatpush.msra.mxu0 %v77
    %2118 = vmatpush.msra.mxu0 %v75
    %2119 = vmatpush.msra.mxu0 %v73
    %2120 = vmatpush.msra.mxu0 %v71
    %2121 = vmatmul.f32.gmra.mxu0 %v2081
    %v2122 = vpop.f32.mrf.mxu0
    %v2123 = vadd.f32 %v2103, %v2122
    %2124 = vdwg.mxu0
    %2125 = vmatpush.msra.mxu0 %v70
    %2126 = vmatpush.msra.mxu0 %v68
    %2127 = vmatpush.msra.mxu0 %v66
    %2128 = vmatpush.msra.mxu0 %v64
    %2129 = vmatpush.msra.mxu0 %v62
    %2130 = vmatpush.msra.mxu0 %v60
    %2131 = vmatpush.msra.mxu0 %v58
    %2132 = vmatpush.msra.mxu0 %v56
    %2133 = vmatpush.msra.mxu0 %v54
    %2134 = vmatpush.msra.mxu0 %v52
    %2135 = vmatpush.msra.mxu0 %v50
    %2136 = vmatpush.msra.mxu0 %v48
    %2137 = vmatpush.msra.mxu0 %v46
    %2138 = vmatpush.msra.mxu0 %v44
    %2139 = vmatpush.msra.mxu0 %v42
    %2140 = vmatpush.msra.mxu0 %v40
    %2141 = vmatmul.f32.gmra.mxu0 %v2080
    %v2142 = vpop.f32.mrf.mxu0
    %v2143 = vadd.f32 0.0, %v2142
    %2144 = vdwg.mxu0
    %2145 = vmatpush.msra.mxu0 %v102
    %2146 = vmatpush.msra.mxu0 %v100
    %2147 = vmatpush.msra.mxu0 %v98
    %2148 = vmatpush.msra.mxu0 %v96
    %2149 = vmatpush.msra.mxu0 %v94
    %2150 = vmatpush.msra.mxu0 %v92
    %2151 = vmatpush.msra.mxu0 %v90
    %2152 = vmatpush.msra.mxu0 %v88
    %2153 = vmatpush.msra.mxu0 %v86
    %2154 = vmatpush.msra.mxu0 %v84
    %2155 = vmatpush.msra.mxu0 %v82
    %2156 = vmatpush.msra.mxu0 %v80
    %2157 = vmatpush.msra.mxu0 %v78
    %2158 = vmatpush.msra.mxu0 %v76
    %2159 = vmatpush.msra.mxu0 %v74
    %2160 = vmatpush.msra.mxu0 %v72
    %2161 = vmatmul.f32.gmra.mxu0 %v2081
    %v2162 = vpop.f32.mrf.mxu0
    %v2163 = vadd.f32 %v2143, %v2162
    %2164 = vdwg.mxu0
    %s2165 = scalar_lea.vmem %s0, 144
    %v2166 = vld [vmem:[%s2165] sm:$0xff]
    %v2167 = vadd.f32 %v2166, %v2123
    %2168 = vmatpush.msra.mxu0 %v118
    %2169 = vmatpush.msra.mxu0 %v117
    %2170 = vmatpush.msra.mxu0 %v116
    %2171 = vmatpush.msra.mxu0 %v115
    %2172 = vmatpush.msra.mxu0 %v114
    %2173 = vmatpush.msra.mxu0 %v113
    %2174 = vmatpush.msra.mxu0 %v112
    %2175 = vmatpush.msra.mxu0 %v111
    %2176 = vmatpush.msra.mxu0 %v110
    %2177 = vmatpush.msra.mxu0 %v109
    %2178 = vmatpush.msra.mxu0 %v108
    %2179 = vmatpush.msra.mxu0 %v107
    %2180 = vmatpush.msra.mxu0 %v106
    %2181 = vmatpush.msra.mxu0 %v105
    %2182 = vmatpush.msra.mxu0 %v104
    %2183 = vmatpush.msra.mxu0 %v103
    %2184 = vmatmul.f32.gmra.mxu0 %v2167
    %v2185 = vpop.f32.mrf.mxu0
    %v2186 = vadd.f32 %v2163, %v2185
    %2187 = vdwg.mxu0
    %v2188 = vadd.f32 %v2186, %v121
    %v2189 = vtanh.pop %v2167
    %v2190 = vtanh.pop %v2188
    %s2191 = scalar_lea.vmem %s6, 288
    %2192 = vst [vmem:[%s2191] sm:$0xff] %v2189
    %2193 = vst [vmem:[%s2191 + $0x8] sm:$0xff] %v2190
    %2194 = vmatpush.msra.mxu0 %v69
    %2195 = vmatpush.msra.mxu0 %v67
    %2196 = vmatpush.msra.mxu0 %v65
    %2197 = vmatpush.msra.mxu0 %v63
    %2198 = vmatpush.msra.mxu0 %v61
    %2199 = vmatpush.msra.mxu0 %v59
    %2200 = vmatpush.msra.mxu0 %v57
    %2201 = vmatpush.msra.mxu0 %v55
    %2202 = vmatpush.msra.mxu0 %v53
    %2203 = vmatpush.msra.mxu0 %v51
    %2204 = vmatpush.msra.mxu0 %v49
    %2205 = vmatpush.msra.mxu0 %v47
    %2206 = vmatpush.msra.mxu0 %v45
    %2207 = vmatpush.msra.mxu0 %v43
    %2208 = vmatpush.msra.mxu0 %v41
    %2209 = vmatpush.msra.mxu0 %v39
    %2210 = vmatmul.f32.gmra.mxu0 %v2189
    %v2211 = vpop.f32.mrf.mxu0
    %v2212 = vadd.f32 0.0, %v2211
    %2213 = vdwg.mxu0
    %2214 = vmatpush.msra.mxu0 %v101
    %2215 = vmatpush.msra.mxu0 %v99
    %2216 = vmatpush.msra.mxu0 %v97
    %2217 = vmatpush.msra.mxu0 %v95
    %2218 = vmatpush.msra.mxu0 %v93
    %2219 = vmatpush.msra.mxu0 %v91
    %2220 = vmatpush.msra.mxu0 %v89
    %2221 = vmatpush.msra.mxu0 %v87
    %2222 = vmatpush.msra.mxu0 %v85
    %2223 = vmatpush.msra.mxu0 %v83
    %2224 = vmatpush.msra.mxu0 %v81
    %2225 = vmatpush.msra.mxu0 %v79
    %2226 = vmatpush.msra.mxu0 %v77
    %2227 = vmatpush.msra.mxu0 %v75
    %2228 = vmatpush.msra.mxu0 %v73
    %2229 = vmatpush.msra.mxu0 %v71
    %2230 = vmatmul.f32.gmra.mxu0 %v2190
    %v2231 = vpop.f32.mrf.mxu0
    %v2232 = vadd.f32 %v2212, %v2231
    %2233 = vdwg.mxu0
    %2234 = vmatpush.msra.mxu0 %v70
    %2235 = vmatpush.msra.mxu0 %v68
    %2236 = vmatpush.msra.mxu0 %v66
    %2237 = vmatpush.msra.mxu0 %v64
    %2238 = vmatpush.msra.mxu0 %v62
    %2239 = vmatpush.msra.mxu0 %v60
    %2240 = vmatpush.msra.mxu0 %v58
    %2241 = vmatpush.msra.mxu0 %v56
    %2242 = vmatpush.msra.mxu0 %v54
    %2243 = vmatpush.msra.mxu0 %v52
    %2244 = vmatpush.msra.mxu0 %v50
    %2245 = vmatpush.msra.mxu0 %v48
    %2246 = vmatpush.msra.mxu0 %v46
    %2247 = vmatpush.msra.mxu0 %v44
    %2248 = vmatpush.msra.mxu0 %v42
    %2249 = vmatpush.msra.mxu0 %v40
    %2250 = vmatmul.f32.gmra.mxu0 %v2189
    %v2251 = vpop.f32.mrf.mxu0
    %v2252 = vadd.f32 0.0, %v2251
    %2253 = vdwg.mxu0
    %2254 = vmatpush.msra.mxu0 %v102
    %2255 = vmatpush.msra.mxu0 %v100
    %2256 = vmatpush.msra.mxu0 %v98
    %2257 = vmatpush.msra.mxu0 %v96
    %2258 = vmatpush.msra.mxu0 %v94
    %2259 = vmatpush.msra.mxu0 %v92
    %2260 = vmatpush.msra.mxu0 %v90
    %2261 = vmatpush.msra.mxu0 %v88
    %2262 = vmatpush.msra.mxu0 %v86
    %2263 = vmatpush.msra.mxu0 %v84
    %2264 = vmatpush.msra.mxu0 %v82
    %2265 = vmatpush.msra.mxu0 %v80
    %2266 = vmatpush.msra.mxu0 %v78
    %2267 = vmatpush.msra.mxu0 %v76
    %2268 = vmatpush.msra.mxu0 %v74
    %2269 = vmatpush.msra.mxu0 %v72
    %2270 = vmatmul.f32.gmra.mxu0 %v2190
    %v2271 = vpop.f32.mrf.mxu0
    %v2272 = vadd.f32 %v2252, %v2271
    %2273 = vdwg.mxu0
    %s2274 = scalar_lea.vmem %s0, 152
    %v2275 = vld [vmem:[%s2274] sm:$0xff]
    %v2276 = vadd.f32 %v2275, %v2232
    %2277 = vmatpush.msra.mxu0 %v118
    %2278 = vmatpush.msra.mxu0 %v117
    %2279 = vmatpush.msra.mxu0 %v116
    %2280 = vmatpush.msra.mxu0 %v115
    %2281 = vmatpush.msra.mxu0 %v114
    %2282 = vmatpush.msra.mxu0 %v113
    %2283 = vmatpush.msra.mxu0 %v112
    %2284 = vmatpush.msra.mxu0 %v111
    %2285 = vmatpush.msra.mxu0 %v110
    %2286 = vmatpush.msra.mxu0 %v109
    %2287 = vmatpush.msra.mxu0 %v108
    %2288 = vmatpush.msra.mxu0 %v107
    %2289 = vmatpush.msra.mxu0 %v106
    %2290 = vmatpush.msra.mxu0 %v105
    %2291 = vmatpush.msra.mxu0 %v104
    %2292 = vmatpush.msra.mxu0 %v103
    %2293 = vmatmul.f32.gmra.mxu0 %v2276
    %v2294 = vpop.f32.mrf.mxu0
    %v2295 = vadd.f32 %v2272, %v2294
    %2296 = vdwg.mxu0
    %v2297 = vadd.f32 %v2295, %v121
    %v2298 = vtanh.pop %v2276
    %v2299 = vtanh.pop %v2297
    %s2300 = scalar_lea.vmem %s6, 304
    %2301 = vst [vmem:[%s2300] sm:$0xff] %v2298
    %2302 = vst [vmem:[%s2300 + $0x8] sm:$0xff] %v2299
    %2303 = vmatpush.msra.mxu0 %v69
    %2304 = vmatpush.msra.mxu0 %v67
    %2305 = vmatpush.msra.mxu0 %v65
    %2306 = vmatpush.msra.mxu0 %v63
    %2307 = vmatpush.msra.mxu0 %v61
    %2308 = vmatpush.msra.mxu0 %v59
    %2309 = vmatpush.msra.mxu0 %v57
    %2310 = vmatpush.msra.mxu0 %v55
    %2311 = vmatpush.msra.mxu0 %v53
    %2312 = vmatpush.msra.mxu0 %v51
    %2313 = vmatpush.msra.mxu0 %v49
    %2314 = vmatpush.msra.mxu0 %v47
    %2315 = vmatpush.msra.mxu0 %v45
    %2316 = vmatpush.msra.mxu0 %v43
    %2317 = vmatpush.msra.mxu0 %v41
    %2318 = vmatpush.msra.mxu0 %v39
    %2319 = vmatmul.f32.gmra.mxu0 %v2298
    %v2320 = vpop.f32.mrf.mxu0
    %v2321 = vadd.f32 0.0, %v2320
    %2322 = vdwg.mxu0
    %2323 = vmatpush.msra.mxu0 %v101
    %2324 = vmatpush.msra.mxu0 %v99
    %2325 = vmatpush.msra.mxu0 %v97
    %2326 = vmatpush.msra.mxu0 %v95
    %2327 = vmatpush.msra.mxu0 %v93
    %2328 = vmatpush.msra.mxu0 %v91
    %2329 = vmatpush.msra.mxu0 %v89
    %2330 = vmatpush.msra.mxu0 %v87
    %2331 = vmatpush.msra.mxu0 %v85
    %2332 = vmatpush.msra.mxu0 %v83
    %2333 = vmatpush.msra.mxu0 %v81
    %2334 = vmatpush.msra.mxu0 %v79
    %2335 = vmatpush.msra.mxu0 %v77
    %2336 = vmatpush.msra.mxu0 %v75
    %2337 = vmatpush.msra.mxu0 %v73
    %2338 = vmatpush.msra.mxu0 %v71
    %2339 = vmatmul.f32.gmra.mxu0 %v2299
    %v2340 = vpop.f32.mrf.mxu0
    %v2341 = vadd.f32 %v2321, %v2340
    %2342 = vdwg.mxu0
    %2343 = vmatpush.msra.mxu0 %v70
    %2344 = vmatpush.msra.mxu0 %v68
    %2345 = vmatpush.msra.mxu0 %v66
    %2346 = vmatpush.msra.mxu0 %v64
    %2347 = vmatpush.msra.mxu0 %v62
    %2348 = vmatpush.msra.mxu0 %v60
    %2349 = vmatpush.msra.mxu0 %v58
    %2350 = vmatpush.msra.mxu0 %v56
    %2351 = vmatpush.msra.mxu0 %v54
    %2352 = vmatpush.msra.mxu0 %v52
    %2353 = vmatpush.msra.mxu0 %v50
    %2354 = vmatpush.msra.mxu0 %v48
    %2355 = vmatpush.msra.mxu0 %v46
    %2356 = vmatpush.msra.mxu0 %v44
    %2357 = vmatpush.msra.mxu0 %v42
    %2358 = vmatpush.msra.mxu0 %v40
    %2359 = vmatmul.f32.gmra.mxu0 %v2298
    %v2360 = vpop.f32.mrf.mxu0
    %v2361 = vadd.f32 0.0, %v2360
    %2362 = vdwg.mxu0
    %2363 = vmatpush.msra.mxu0 %v102
    %2364 = vmatpush.msra.mxu0 %v100
    %2365 = vmatpush.msra.mxu0 %v98
    %2366 = vmatpush.msra.mxu0 %v96
    %2367 = vmatpush.msra.mxu0 %v94
    %2368 = vmatpush.msra.mxu0 %v92
    %2369 = vmatpush.msra.mxu0 %v90
    %2370 = vmatpush.msra.mxu0 %v88
    %2371 = vmatpush.msra.mxu0 %v86
    %2372 = vmatpush.msra.mxu0 %v84
    %2373 = vmatpush.msra.mxu0 %v82
    %2374 = vmatpush.msra.mxu0 %v80
    %2375 = vmatpush.msra.mxu0 %v78
    %2376 = vmatpush.msra.mxu0 %v76
    %2377 = vmatpush.msra.mxu0 %v74
    %2378 = vmatpush.msra.mxu0 %v72
    %2379 = vmatmul.f32.gmra.mxu0 %v2299
    %v2380 = vpop.f32.mrf.mxu0
    %v2381 = vadd.f32 %v2361, %v2380
    %2382 = vdwg.mxu0
    %s2383 = scalar_lea.vmem %s0, 160
    %v2384 = vld [vmem:[%s2383] sm:$0xff]
    %v2385 = vadd.f32 %v2384, %v2341
    %2386 = vmatpush.msra.mxu0 %v118
    %2387 = vmatpush.msra.mxu0 %v117
    %2388 = vmatpush.msra.mxu0 %v116
    %2389 = vmatpush.msra.mxu0 %v115
    %2390 = vmatpush.msra.mxu0 %v114
    %2391 = vmatpush.msra.mxu0 %v113
    %2392 = vmatpush.msra.mxu0 %v112
    %2393 = vmatpush.msra.mxu0 %v111
    %2394 = vmatpush.msra.mxu0 %v110
    %2395 = vmatpush.msra.mxu0 %v109
    %2396 = vmatpush.msra.mxu0 %v108
    %2397 = vmatpush.msra.mxu0 %v107
    %2398 = vmatpush.msra.mxu0 %v106
    %2399 = vmatpush.msra.mxu0 %v105
    %2400 = vmatpush.msra.mxu0 %v104
    %2401 = vmatpush.msra.mxu0 %v103
    %2402 = vmatmul.f32.gmra.mxu0 %v2385
    %v2403 = vpop.f32.mrf.mxu0
    %v2404 = vadd.f32 %v2381, %v2403
    %2405 = vdwg.mxu0
    %v2406 = vadd.f32 %v2404, %v121
    %v2407 = vtanh.pop %v2385
    %v2408 = vtanh.pop %v2406
    %s2409 = scalar_lea.vmem %s6, 320
    %2410 = vst [vmem:[%s2409] sm:$0xff] %v2407
    %2411 = vst [vmem:[%s2409 + $0x8] sm:$0xff] %v2408
    %2412 = vmatpush.msra.mxu0 %v69
    %2413 = vmatpush.msra.mxu0 %v67
    %2414 = vmatpush.msra.mxu0 %v65
    %2415 = vmatpush.msra.mxu0 %v63
    %2416 = vmatpush.msra.mxu0 %v61
    %2417 = vmatpush.msra.mxu0 %v59
    %2418 = vmatpush.msra.mxu0 %v57
    %2419 = vmatpush.msra.mxu0 %v55
    %2420 = vmatpush.msra.mxu0 %v53
    %2421 = vmatpush.msra.mxu0 %v51
    %2422 = vmatpush.msra.mxu0 %v49
    %2423 = vmatpush.msra.mxu0 %v47
    %2424 = vmatpush.msra.mxu0 %v45
    %2425 = vmatpush.msra.mxu0 %v43
    %2426 = vmatpush.msra.mxu0 %v41
    %2427 = vmatpush.msra.mxu0 %v39
    %2428 = vmatmul.f32.gmra.mxu0 %v2407
    %v2429 = vpop.f32.mrf.mxu0
    %v2430 = vadd.f32 0.0, %v2429
    %2431 = vdwg.mxu0
    %2432 = vmatpush.msra.mxu0 %v101
    %2433 = vmatpush.msra.mxu0 %v99
    %2434 = vmatpush.msra.mxu0 %v97
    %2435 = vmatpush.msra.mxu0 %v95
    %2436 = vmatpush.msra.mxu0 %v93
    %2437 = vmatpush.msra.mxu0 %v91
    %2438 = vmatpush.msra.mxu0 %v89
    %2439 = vmatpush.msra.mxu0 %v87
    %2440 = vmatpush.msra.mxu0 %v85
    %2441 = vmatpush.msra.mxu0 %v83
    %2442 = vmatpush.msra.mxu0 %v81
    %2443 = vmatpush.msra.mxu0 %v79
    %2444 = vmatpush.msra.mxu0 %v77
    %2445 = vmatpush.msra.mxu0 %v75
    %2446 = vmatpush.msra.mxu0 %v73
    %2447 = vmatpush.msra.mxu0 %v71
    %2448 = vmatmul.f32.gmra.mxu0 %v2408
    %v2449 = vpop.f32.mrf.mxu0
    %v2450 = vadd.f32 %v2430, %v2449
    %2451 = vdwg.mxu0
    %2452 = vmatpush.msra.mxu0 %v70
    %2453 = vmatpush.msra.mxu0 %v68
    %2454 = vmatpush.msra.mxu0 %v66
    %2455 = vmatpush.msra.mxu0 %v64
    %2456 = vmatpush.msra.mxu0 %v62
    %2457 = vmatpush.msra.mxu0 %v60
    %2458 = vmatpush.msra.mxu0 %v58
    %2459 = vmatpush.msra.mxu0 %v56
    %2460 = vmatpush.msra.mxu0 %v54
    %2461 = vmatpush.msra.mxu0 %v52
    %2462 = vmatpush.msra.mxu0 %v50
    %2463 = vmatpush.msra.mxu0 %v48
    %2464 = vmatpush.msra.mxu0 %v46
    %2465 = vmatpush.msra.mxu0 %v44
    %2466 = vmatpush.msra.mxu0 %v42
    %2467 = vmatpush.msra.mxu0 %v40
    %2468 = vmatmul.f32.gmra.mxu0 %v2407
    %v2469 = vpop.f32.mrf.mxu0
    %v2470 = vadd.f32 0.0, %v2469
    %2471 = vdwg.mxu0
    %2472 = vmatpush.msra.mxu0 %v102
    %2473 = vmatpush.msra.mxu0 %v100
    %2474 = vmatpush.msra.mxu0 %v98
    %2475 = vmatpush.msra.mxu0 %v96
    %2476 = vmatpush.msra.mxu0 %v94
    %2477 = vmatpush.msra.mxu0 %v92
    %2478 = vmatpush.msra.mxu0 %v90
    %2479 = vmatpush.msra.mxu0 %v88
    %2480 = vmatpush.msra.mxu0 %v86
    %2481 = vmatpush.msra.mxu0 %v84
    %2482 = vmatpush.msra.mxu0 %v82
    %2483 = vmatpush.msra.mxu0 %v80
    %2484 = vmatpush.msra.mxu0 %v78
    %2485 = vmatpush.msra.mxu0 %v76
    %2486 = vmatpush.msra.mxu0 %v74
    %2487 = vmatpush.msra.mxu0 %v72
    %2488 = vmatmul.f32.gmra.mxu0 %v2408
    %v2489 = vpop.f32.mrf.mxu0
    %v2490 = vadd.f32 %v2470, %v2489
    %2491 = vdwg.mxu0
    %s2492 = scalar_lea.vmem %s0, 168
    %v2493 = vld [vmem:[%s2492] sm:$0xff]
    %v2494 = vadd.f32 %v2493, %v2450
    %2495 = vmatpush.msra.mxu0 %v118
    %2496 = vmatpush.msra.mxu0 %v117
    %2497 = vmatpush.msra.mxu0 %v116
    %2498 = vmatpush.msra.mxu0 %v115
    %2499 = vmatpush.msra.mxu0 %v114
    %2500 = vmatpush.msra.mxu0 %v113
    %2501 = vmatpush.msra.mxu0 %v112
    %2502 = vmatpush.msra.mxu0 %v111
    %2503 = vmatpush.msra.mxu0 %v110
    %2504 = vmatpush.msra.mxu0 %v109
    %2505 = vmatpush.msra.mxu0 %v108
    %2506 = vmatpush.msra.mxu0 %v107
    %2507 = vmatpush.msra.mxu0 %v106
    %2508 = vmatpush.msra.mxu0 %v105
    %2509 = vmatpush.msra.mxu0 %v104
    %2510 = vmatpush.msra.mxu0 %v103
    %2511 = vmatmul.f32.gmra.mxu0 %v2494
    %v2512 = vpop.f32.mrf.mxu0
    %v2513 = vadd.f32 %v2490, %v2512
    %2514 = vdwg.mxu0
    %v2515 = vadd.f32 %v2513, %v121
    %v2516 = vtanh.pop %v2494
    %v2517 = vtanh.pop %v2515
    %s2518 = scalar_lea.vmem %s6, 336
    %2519 = vst [vmem:[%s2518] sm:$0xff] %v2516
    %2520 = vst [vmem:[%s2518 + $0x8] sm:$0xff] %v2517
    %2521 = vmatpush.msra.mxu0 %v69
    %2522 = vmatpush.msra.mxu0 %v67
    %2523 = vmatpush.msra.mxu0 %v65
    %2524 = vmatpush.msra.mxu0 %v63
    %2525 = vmatpush.msra.mxu0 %v61
    %2526 = vmatpush.msra.mxu0 %v59
    %2527 = vmatpush.msra.mxu0 %v57
    %2528 = vmatpush.msra.mxu0 %v55
    %2529 = vmatpush.msra.mxu0 %v53
    %2530 = vmatpush.msra.mxu0 %v51
    %2531 = vmatpush.msra.mxu0 %v49
    %2532 = vmatpush.msra.mxu0 %v47
    %2533 = vmatpush.msra.mxu0 %v45
    %2534 = vmatpush.msra.mxu0 %v43
    %2535 = vmatpush.msra.mxu0 %v41
    %2536 = vmatpush.msra.mxu0 %v39
    %2537 = vmatmul.f32.gmra.mxu0 %v2516
    %v2538 = vpop.f32.mrf.mxu0
    %v2539 = vadd.f32 0.0, %v2538
    %2540 = vdwg.mxu0
    %2541 = vmatpush.msra.mxu0 %v101
    %2542 = vmatpush.msra.mxu0 %v99
    %2543 = vmatpush.msra.mxu0 %v97
    %2544 = vmatpush.msra.mxu0 %v95
    %2545 = vmatpush.msra.mxu0 %v93
    %2546 = vmatpush.msra.mxu0 %v91
    %2547 = vmatpush.msra.mxu0 %v89
    %2548 = vmatpush.msra.mxu0 %v87
    %2549 = vmatpush.msra.mxu0 %v85
    %2550 = vmatpush.msra.mxu0 %v83
    %2551 = vmatpush.msra.mxu0 %v81
    %2552 = vmatpush.msra.mxu0 %v79
    %2553 = vmatpush.msra.mxu0 %v77
    %2554 = vmatpush.msra.mxu0 %v75
    %2555 = vmatpush.msra.mxu0 %v73
    %2556 = vmatpush.msra.mxu0 %v71
    %2557 = vmatmul.f32.gmra.mxu0 %v2517
    %v2558 = vpop.f32.mrf.mxu0
    %v2559 = vadd.f32 %v2539, %v2558
    %2560 = vdwg.mxu0
    %2561 = vmatpush.msra.mxu0 %v70
    %2562 = vmatpush.msra.mxu0 %v68
    %2563 = vmatpush.msra.mxu0 %v66
    %2564 = vmatpush.msra.mxu0 %v64
    %2565 = vmatpush.msra.mxu0 %v62
    %2566 = vmatpush.msra.mxu0 %v60
    %2567 = vmatpush.msra.mxu0 %v58
    %2568 = vmatpush.msra.mxu0 %v56
    %2569 = vmatpush.msra.mxu0 %v54
    %2570 = vmatpush.msra.mxu0 %v52
    %2571 = vmatpush.msra.mxu0 %v50
    %2572 = vmatpush.msra.mxu0 %v48
    %2573 = vmatpush.msra.mxu0 %v46
    %2574 = vmatpush.msra.mxu0 %v44
    %2575 = vmatpush.msra.mxu0 %v42
    %2576 = vmatpush.msra.mxu0 %v40
    %2577 = vmatmul.f32.gmra.mxu0 %v2516
    %v2578 = vpop.f32.mrf.mxu0
    %v2579 = vadd.f32 0.0, %v2578
    %2580 = vdwg.mxu0
    %2581 = vmatpush.msra.mxu0 %v102
    %2582 = vmatpush.msra.mxu0 %v100
    %2583 = vmatpush.msra.mxu0 %v98
    %2584 = vmatpush.msra.mxu0 %v96
    %2585 = vmatpush.msra.mxu0 %v94
    %2586 = vmatpush.msra.mxu0 %v92
    %2587 = vmatpush.msra.mxu0 %v90
    %2588 = vmatpush.msra.mxu0 %v88
    %2589 = vmatpush.msra.mxu0 %v86
    %2590 = vmatpush.msra.mxu0 %v84
    %2591 = vmatpush.msra.mxu0 %v82
    %2592 = vmatpush.msra.mxu0 %v80
    %2593 = vmatpush.msra.mxu0 %v78
    %2594 = vmatpush.msra.mxu0 %v76
    %2595 = vmatpush.msra.mxu0 %v74
    %2596 = vmatpush.msra.mxu0 %v72
    %2597 = vmatmul.f32.gmra.mxu0 %v2517
    %v2598 = vpop.f32.mrf.mxu0
    %v2599 = vadd.f32 %v2579, %v2598
    %2600 = vdwg.mxu0
    %s2601 = scalar_lea.vmem %s0, 176
    %v2602 = vld [vmem:[%s2601] sm:$0xff]
    %v2603 = vadd.f32 %v2602, %v2559
    %2604 = vmatpush.msra.mxu0 %v118
    %2605 = vmatpush.msra.mxu0 %v117
    %2606 = vmatpush.msra.mxu0 %v116
    %2607 = vmatpush.msra.mxu0 %v115
    %2608 = vmatpush.msra.mxu0 %v114
    %2609 = vmatpush.msra.mxu0 %v113
    %2610 = vmatpush.msra.mxu0 %v112
    %2611 = vmatpush.msra.mxu0 %v111
    %2612 = vmatpush.msra.mxu0 %v110
    %2613 = vmatpush.msra.mxu0 %v109
    %2614 = vmatpush.msra.mxu0 %v108
    %2615 = vmatpush.msra.mxu0 %v107
    %2616 = vmatpush.msra.mxu0 %v106
    %2617 = vmatpush.msra.mxu0 %v105
    %2618 = vmatpush.msra.mxu0 %v104
    %2619 = vmatpush.msra.mxu0 %v103
    %2620 = vmatmul.f32.gmra.mxu0 %v2603
    %v2621 = vpop.f32.mrf.mxu0
    %v2622 = vadd.f32 %v2599, %v2621
    %2623 = vdwg.mxu0
    %v2624 = vadd.f32 %v2622, %v121
    %v2625 = vtanh.pop %v2603
    %v2626 = vtanh.pop %v2624
    %s2627 = scalar_lea.vmem %s6, 352
    %2628 = vst [vmem:[%s2627] sm:$0xff] %v2625
    %2629 = vst [vmem:[%s2627 + $0x8] sm:$0xff] %v2626
    %2630 = vmatpush.msra.mxu0 %v69
    %2631 = vmatpush.msra.mxu0 %v67
    %2632 = vmatpush.msra.mxu0 %v65
    %2633 = vmatpush.msra.mxu0 %v63
    %2634 = vmatpush.msra.mxu0 %v61
    %2635 = vmatpush.msra.mxu0 %v59
    %2636 = vmatpush.msra.mxu0 %v57
    %2637 = vmatpush.msra.mxu0 %v55
    %2638 = vmatpush.msra.mxu0 %v53
    %2639 = vmatpush.msra.mxu0 %v51
    %2640 = vmatpush.msra.mxu0 %v49
    %2641 = vmatpush.msra.mxu0 %v47
    %2642 = vmatpush.msra.mxu0 %v45
    %2643 = vmatpush.msra.mxu0 %v43
    %2644 = vmatpush.msra.mxu0 %v41
    %2645 = vmatpush.msra.mxu0 %v39
    %2646 = vmatmul.f32.gmra.mxu0 %v2625
    %v2647 = vpop.f32.mrf.mxu0
    %v2648 = vadd.f32 0.0, %v2647
    %2649 = vdwg.mxu0
    %2650 = vmatpush.msra.mxu0 %v101
    %2651 = vmatpush.msra.mxu0 %v99
    %2652 = vmatpush.msra.mxu0 %v97
    %2653 = vmatpush.msra.mxu0 %v95
    %2654 = vmatpush.msra.mxu0 %v93
    %2655 = vmatpush.msra.mxu0 %v91
    %2656 = vmatpush.msra.mxu0 %v89
    %2657 = vmatpush.msra.mxu0 %v87
    %2658 = vmatpush.msra.mxu0 %v85
    %2659 = vmatpush.msra.mxu0 %v83
    %2660 = vmatpush.msra.mxu0 %v81
    %2661 = vmatpush.msra.mxu0 %v79
    %2662 = vmatpush.msra.mxu0 %v77
    %2663 = vmatpush.msra.mxu0 %v75
    %2664 = vmatpush.msra.mxu0 %v73
    %2665 = vmatpush.msra.mxu0 %v71
    %2666 = vmatmul.f32.gmra.mxu0 %v2626
    %v2667 = vpop.f32.mrf.mxu0
    %v2668 = vadd.f32 %v2648, %v2667
    %2669 = vdwg.mxu0
    %2670 = vmatpush.msra.mxu0 %v70
    %2671 = vmatpush.msra.mxu0 %v68
    %2672 = vmatpush.msra.mxu0 %v66
    %2673 = vmatpush.msra.mxu0 %v64
    %2674 = vmatpush.msra.mxu0 %v62
    %2675 = vmatpush.msra.mxu0 %v60
    %2676 = vmatpush.msra.mxu0 %v58
    %2677 = vmatpush.msra.mxu0 %v56
    %2678 = vmatpush.msra.mxu0 %v54
    %2679 = vmatpush.msra.mxu0 %v52
    %2680 = vmatpush.msra.mxu0 %v50
    %2681 = vmatpush.msra.mxu0 %v48
    %2682 = vmatpush.msra.mxu0 %v46
    %2683 = vmatpush.msra.mxu0 %v44
    %2684 = vmatpush.msra.mxu0 %v42
    %2685 = vmatpush.msra.mxu0 %v40
    %2686 = vmatmul.f32.gmra.mxu0 %v2625
    %v2687 = vpop.f32.mrf.mxu0
    %v2688 = vadd.f32 0.0, %v2687
    %2689 = vdwg.mxu0
    %2690 = vmatpush.msra.mxu0 %v102
    %2691 = vmatpush.msra.mxu0 %v100
    %2692 = vmatpush.msra.mxu0 %v98
    %2693 = vmatpush.msra.mxu0 %v96
    %2694 = vmatpush.msra.mxu0 %v94
    %2695 = vmatpush.msra.mxu0 %v92
    %2696 = vmatpush.msra.mxu0 %v90
    %2697 = vmatpush.msra.mxu0 %v88
    %2698 = vmatpush.msra.mxu0 %v86
    %2699 = vmatpush.msra.mxu0 %v84
    %2700 = vmatpush.msra.mxu0 %v82
    %2701 = vmatpush.msra.mxu0 %v80
    %2702 = vmatpush.msra.mxu0 %v78
    %2703 = vmatpush.msra.mxu0 %v76
    %2704 = vmatpush.msra.mxu0 %v74
    %2705 = vmatpush.msra.mxu0 %v72
    %2706 = vmatmul.f32.gmra.mxu0 %v2626
    %v2707 = vpop.f32.mrf.mxu0
    %v2708 = vadd.f32 %v2688, %v2707
    %2709 = vdwg.mxu0
    %s2710 = scalar_lea.vmem %s0, 184
    %v2711 = vld [vmem:[%s2710] sm:$0xff]
    %v2712 = vadd.f32 %v2711, %v2668
    %2713 = vmatpush.msra.mxu0 %v118
    %2714 = vmatpush.msra.mxu0 %v117
    %2715 = vmatpush.msra.mxu0 %v116
    %2716 = vmatpush.msra.mxu0 %v115
    %2717 = vmatpush.msra.mxu0 %v114
    %2718 = vmatpush.msra.mxu0 %v113
    %2719 = vmatpush.msra.mxu0 %v112
    %2720 = vmatpush.msra.mxu0 %v111
    %2721 = vmatpush.msra.mxu0 %v110
    %2722 = vmatpush.msra.mxu0 %v109
    %2723 = vmatpush.msra.mxu0 %v108
    %2724 = vmatpush.msra.mxu0 %v107
    %2725 = vmatpush.msra.mxu0 %v106
    %2726 = vmatpush.msra.mxu0 %v105
    %2727 = vmatpush.msra.mxu0 %v104
    %2728 = vmatpush.msra.mxu0 %v103
    %2729 = vmatmul.f32.gmra.mxu0 %v2712
    %v2730 = vpop.f32.mrf.mxu0
    %v2731 = vadd.f32 %v2708, %v2730
    %2732 = vdwg.mxu0
    %v2733 = vadd.f32 %v2731, %v121
    %v2734 = vtanh.pop %v2712
    %v2735 = vtanh.pop %v2733
    %s2736 = scalar_lea.vmem %s6, 368
    %2737 = vst [vmem:[%s2736] sm:$0xff] %v2734
    %2738 = vst [vmem:[%s2736 + $0x8] sm:$0xff] %v2735
    %2739 = vmatpush.msra.mxu0 %v69
    %2740 = vmatpush.msra.mxu0 %v67
    %2741 = vmatpush.msra.mxu0 %v65
    %2742 = vmatpush.msra.mxu0 %v63
    %2743 = vmatpush.msra.mxu0 %v61
    %2744 = vmatpush.msra.mxu0 %v59
    %2745 = vmatpush.msra.mxu0 %v57
    %2746 = vmatpush.msra.mxu0 %v55
    %2747 = vmatpush.msra.mxu0 %v53
    %2748 = vmatpush.msra.mxu0 %v51
    %2749 = vmatpush.msra.mxu0 %v49
    %2750 = vmatpush.msra.mxu0 %v47
    %2751 = vmatpush.msra.mxu0 %v45
    %2752 = vmatpush.msra.mxu0 %v43
    %2753 = vmatpush.msra.mxu0 %v41
    %2754 = vmatpush.msra.mxu0 %v39
    %2755 = vmatmul.f32.gmra.mxu0 %v2734
    %v2756 = vpop.f32.mrf.mxu0
    %v2757 = vadd.f32 0.0, %v2756
    %2758 = vdwg.mxu0
    %2759 = vmatpush.msra.mxu0 %v101
    %2760 = vmatpush.msra.mxu0 %v99
    %2761 = vmatpush.msra.mxu0 %v97
    %2762 = vmatpush.msra.mxu0 %v95
    %2763 = vmatpush.msra.mxu0 %v93
    %2764 = vmatpush.msra.mxu0 %v91
    %2765 = vmatpush.msra.mxu0 %v89
    %2766 = vmatpush.msra.mxu0 %v87
    %2767 = vmatpush.msra.mxu0 %v85
    %2768 = vmatpush.msra.mxu0 %v83
    %2769 = vmatpush.msra.mxu0 %v81
    %2770 = vmatpush.msra.mxu0 %v79
    %2771 = vmatpush.msra.mxu0 %v77
    %2772 = vmatpush.msra.mxu0 %v75
    %2773 = vmatpush.msra.mxu0 %v73
    %2774 = vmatpush.msra.mxu0 %v71
    %2775 = vmatmul.f32.gmra.mxu0 %v2735
    %v2776 = vpop.f32.mrf.mxu0
    %v2777 = vadd.f32 %v2757, %v2776
    %2778 = vdwg.mxu0
    %2779 = vmatpush.msra.mxu0 %v70
    %2780 = vmatpush.msra.mxu0 %v68
    %2781 = vmatpush.msra.mxu0 %v66
    %2782 = vmatpush.msra.mxu0 %v64
    %2783 = vmatpush.msra.mxu0 %v62
    %2784 = vmatpush.msra.mxu0 %v60
    %2785 = vmatpush.msra.mxu0 %v58
    %2786 = vmatpush.msra.mxu0 %v56
    %2787 = vmatpush.msra.mxu0 %v54
    %2788 = vmatpush.msra.mxu0 %v52
    %2789 = vmatpush.msra.mxu0 %v50
    %2790 = vmatpush.msra.mxu0 %v48
    %2791 = vmatpush.msra.mxu0 %v46
    %2792 = vmatpush.msra.mxu0 %v44
    %2793 = vmatpush.msra.mxu0 %v42
    %2794 = vmatpush.msra.mxu0 %v40
    %2795 = vmatmul.f32.gmra.mxu0 %v2734
    %v2796 = vpop.f32.mrf.mxu0
    %v2797 = vadd.f32 0.0, %v2796
    %2798 = vdwg.mxu0
    %2799 = vmatpush.msra.mxu0 %v102
    %2800 = vmatpush.msra.mxu0 %v100
    %2801 = vmatpush.msra.mxu0 %v98
    %2802 = vmatpush.msra.mxu0 %v96
    %2803 = vmatpush.msra.mxu0 %v94
    %2804 = vmatpush.msra.mxu0 %v92
    %2805 = vmatpush.msra.mxu0 %v90
    %2806 = vmatpush.msra.mxu0 %v88
    %2807 = vmatpush.msra.mxu0 %v86
    %2808 = vmatpush.msra.mxu0 %v84
    %2809 = vmatpush.msra.mxu0 %v82
    %2810 = vmatpush.msra.mxu0 %v80
    %2811 = vmatpush.msra.mxu0 %v78
    %2812 = vmatpush.msra.mxu0 %v76
    %2813 = vmatpush.msra.mxu0 %v74
    %2814 = vmatpush.msra.mxu0 %v72
    %2815 = vmatmul.f32.gmra.mxu0 %v2735
    %v2816 = vpop.f32.mrf.mxu0
    %v2817 = vadd.f32 %v2797, %v2816
    %2818 = vdwg.mxu0
    %s2819 = scalar_lea.vmem %s0, 192
    %v2820 = vld [vmem:[%s2819] sm:$0xff]
    %v2821 = vadd.f32 %v2820, %v2777
    %2822 = vmatpush.msra.mxu0 %v118
    %2823 = vmatpush.msra.mxu0 %v117
    %2824 = vmatpush.msra.mxu0 %v116
    %2825 = vmatpush.msra.mxu0 %v115
    %2826 = vmatpush.msra.mxu0 %v114
    %2827 = vmatpush.msra.mxu0 %v113
    %2828 = vmatpush.msra.mxu0 %v112
    %2829 = vmatpush.msra.mxu0 %v111
    %2830 = vmatpush.msra.mxu0 %v110
    %2831 = vmatpush.msra.mxu0 %v109
    %2832 = vmatpush.msra.mxu0 %v108
    %2833 = vmatpush.msra.mxu0 %v107
    %2834 = vmatpush.msra.mxu0 %v106
    %2835 = vmatpush.msra.mxu0 %v105
    %2836 = vmatpush.msra.mxu0 %v104
    %2837 = vmatpush.msra.mxu0 %v103
    %2838 = vmatmul.f32.gmra.mxu0 %v2821
    %v2839 = vpop.f32.mrf.mxu0
    %v2840 = vadd.f32 %v2817, %v2839
    %2841 = vdwg.mxu0
    %v2842 = vadd.f32 %v2840, %v121
    %v2843 = vtanh.pop %v2821
    %v2844 = vtanh.pop %v2842
    %s2845 = scalar_lea.vmem %s6, 384
    %2846 = vst [vmem:[%s2845] sm:$0xff] %v2843
    %2847 = vst [vmem:[%s2845 + $0x8] sm:$0xff] %v2844
    %2848 = vmatpush.msra.mxu0 %v69
    %2849 = vmatpush.msra.mxu0 %v67
    %2850 = vmatpush.msra.mxu0 %v65
    %2851 = vmatpush.msra.mxu0 %v63
    %2852 = vmatpush.msra.mxu0 %v61
    %2853 = vmatpush.msra.mxu0 %v59
    %2854 = vmatpush.msra.mxu0 %v57
    %2855 = vmatpush.msra.mxu0 %v55
    %2856 = vmatpush.msra.mxu0 %v53
    %2857 = vmatpush.msra.mxu0 %v51
    %2858 = vmatpush.msra.mxu0 %v49
    %2859 = vmatpush.msra.mxu0 %v47
    %2860 = vmatpush.msra.mxu0 %v45
    %2861 = vmatpush.msra.mxu0 %v43
    %2862 = vmatpush.msra.mxu0 %v41
    %2863 = vmatpush.msra.mxu0 %v39
    %2864 = vmatmul.f32.gmra.mxu0 %v2843
    %v2865 = vpop.f32.mrf.mxu0
    %v2866 = vadd.f32 0.0, %v2865
    %2867 = vdwg.mxu0
    %2868 = vmatpush.msra.mxu0 %v101
    %2869 = vmatpush.msra.mxu0 %v99
    %2870 = vmatpush.msra.mxu0 %v97
    %2871 = vmatpush.msra.mxu0 %v95
    %2872 = vmatpush.msra.mxu0 %v93
    %2873 = vmatpush.msra.mxu0 %v91
    %2874 = vmatpush.msra.mxu0 %v89
    %2875 = vmatpush.msra.mxu0 %v87
    %2876 = vmatpush.msra.mxu0 %v85
    %2877 = vmatpush.msra.mxu0 %v83
    %2878 = vmatpush.msra.mxu0 %v81
    %2879 = vmatpush.msra.mxu0 %v79
    %2880 = vmatpush.msra.mxu0 %v77
    %2881 = vmatpush.msra.mxu0 %v75
    %2882 = vmatpush.msra.mxu0 %v73
    %2883 = vmatpush.msra.mxu0 %v71
    %2884 = vmatmul.f32.gmra.mxu0 %v2844
    %v2885 = vpop.f32.mrf.mxu0
    %v2886 = vadd.f32 %v2866, %v2885
    %2887 = vdwg.mxu0
    %2888 = vmatpush.msra.mxu0 %v70
    %2889 = vmatpush.msra.mxu0 %v68
    %2890 = vmatpush.msra.mxu0 %v66
    %2891 = vmatpush.msra.mxu0 %v64
    %2892 = vmatpush.msra.mxu0 %v62
    %2893 = vmatpush.msra.mxu0 %v60
    %2894 = vmatpush.msra.mxu0 %v58
    %2895 = vmatpush.msra.mxu0 %v56
    %2896 = vmatpush.msra.mxu0 %v54
    %2897 = vmatpush.msra.mxu0 %v52
    %2898 = vmatpush.msra.mxu0 %v50
    %2899 = vmatpush.msra.mxu0 %v48
    %2900 = vmatpush.msra.mxu0 %v46
    %2901 = vmatpush.msra.mxu0 %v44
    %2902 = vmatpush.msra.mxu0 %v42
    %2903 = vmatpush.msra.mxu0 %v40
    %2904 = vmatmul.f32.gmra.mxu0 %v2843
    %v2905 = vpop.f32.mrf.mxu0
    %v2906 = vadd.f32 0.0, %v2905
    %2907 = vdwg.mxu0
    %2908 = vmatpush.msra.mxu0 %v102
    %2909 = vmatpush.msra.mxu0 %v100
    %2910 = vmatpush.msra.mxu0 %v98
    %2911 = vmatpush.msra.mxu0 %v96
    %2912 = vmatpush.msra.mxu0 %v94
    %2913 = vmatpush.msra.mxu0 %v92
    %2914 = vmatpush.msra.mxu0 %v90
    %2915 = vmatpush.msra.mxu0 %v88
    %2916 = vmatpush.msra.mxu0 %v86
    %2917 = vmatpush.msra.mxu0 %v84
    %2918 = vmatpush.msra.mxu0 %v82
    %2919 = vmatpush.msra.mxu0 %v80
    %2920 = vmatpush.msra.mxu0 %v78
    %2921 = vmatpush.msra.mxu0 %v76
    %2922 = vmatpush.msra.mxu0 %v74
    %2923 = vmatpush.msra.mxu0 %v72
    %2924 = vmatmul.f32.gmra.mxu0 %v2844
    %v2925 = vpop.f32.mrf.mxu0
    %v2926 = vadd.f32 %v2906, %v2925
    %2927 = vdwg.mxu0
    %s2928 = scalar_lea.vmem %s0, 200
    %v2929 = vld [vmem:[%s2928] sm:$0xff]
    %v2930 = vadd.f32 %v2929, %v2886
    %2931 = vmatpush.msra.mxu0 %v118
    %2932 = vmatpush.msra.mxu0 %v117
    %2933 = vmatpush.msra.mxu0 %v116
    %2934 = vmatpush.msra.mxu0 %v115
    %2935 = vmatpush.msra.mxu0 %v114
    %2936 = vmatpush.msra.mxu0 %v113
    %2937 = vmatpush.msra.mxu0 %v112
    %2938 = vmatpush.msra.mxu0 %v111
    %2939 = vmatpush.msra.mxu0 %v110
    %2940 = vmatpush.msra.mxu0 %v109
    %2941 = vmatpush.msra.mxu0 %v108
    %2942 = vmatpush.msra.mxu0 %v107
    %2943 = vmatpush.msra.mxu0 %v106
    %2944 = vmatpush.msra.mxu0 %v105
    %2945 = vmatpush.msra.mxu0 %v104
    %2946 = vmatpush.msra.mxu0 %v103
    %2947 = vmatmul.f32.gmra.mxu0 %v2930
    %v2948 = vpop.f32.mrf.mxu0
    %v2949 = vadd.f32 %v2926, %v2948
    %2950 = vdwg.mxu0
    %v2951 = vadd.f32 %v2949, %v121
    %v2952 = vtanh.pop %v2930
    %v2953 = vtanh.pop %v2951
    %s2954 = scalar_lea.vmem %s6, 400
    %2955 = vst [vmem:[%s2954] sm:$0xff] %v2952
    %2956 = vst [vmem:[%s2954 + $0x8] sm:$0xff] %v2953
    %2957 = vmatpush.msra.mxu0 %v69
    %2958 = vmatpush.msra.mxu0 %v67
    %2959 = vmatpush.msra.mxu0 %v65
    %2960 = vmatpush.msra.mxu0 %v63
    %2961 = vmatpush.msra.mxu0 %v61
    %2962 = vmatpush.msra.mxu0 %v59
    %2963 = vmatpush.msra.mxu0 %v57
    %2964 = vmatpush.msra.mxu0 %v55
    %2965 = vmatpush.msra.mxu0 %v53
    %2966 = vmatpush.msra.mxu0 %v51
    %2967 = vmatpush.msra.mxu0 %v49
    %2968 = vmatpush.msra.mxu0 %v47
    %2969 = vmatpush.msra.mxu0 %v45
    %2970 = vmatpush.msra.mxu0 %v43
    %2971 = vmatpush.msra.mxu0 %v41
    %2972 = vmatpush.msra.mxu0 %v39
    %2973 = vmatmul.f32.gmra.mxu0 %v2952
    %v2974 = vpop.f32.mrf.mxu0
    %v2975 = vadd.f32 0.0, %v2974
    %2976 = vdwg.mxu0
    %2977 = vmatpush.msra.mxu0 %v101
    %2978 = vmatpush.msra.mxu0 %v99
    %2979 = vmatpush.msra.mxu0 %v97
    %2980 = vmatpush.msra.mxu0 %v95
    %2981 = vmatpush.msra.mxu0 %v93
    %2982 = vmatpush.msra.mxu0 %v91
    %2983 = vmatpush.msra.mxu0 %v89
    %2984 = vmatpush.msra.mxu0 %v87
    %2985 = vmatpush.msra.mxu0 %v85
    %2986 = vmatpush.msra.mxu0 %v83
    %2987 = vmatpush.msra.mxu0 %v81
    %2988 = vmatpush.msra.mxu0 %v79
    %2989 = vmatpush.msra.mxu0 %v77
    %2990 = vmatpush.msra.mxu0 %v75
    %2991 = vmatpush.msra.mxu0 %v73
    %2992 = vmatpush.msra.mxu0 %v71
    %2993 = vmatmul.f32.gmra.mxu0 %v2953
    %v2994 = vpop.f32.mrf.mxu0
    %v2995 = vadd.f32 %v2975, %v2994
    %2996 = vdwg.mxu0
    %2997 = vmatpush.msra.mxu0 %v70
    %2998 = vmatpush.msra.mxu0 %v68
    %2999 = vmatpush.msra.mxu0 %v66
    %3000 = vmatpush.msra.mxu0 %v64
    %3001 = vmatpush.msra.mxu0 %v62
    %3002 = vmatpush.msra.mxu0 %v60
    %3003 = vmatpush.msra.mxu0 %v58
    %3004 = vmatpush.msra.mxu0 %v56
    %3005 = vmatpush.msra.mxu0 %v54
    %3006 = vmatpush.msra.mxu0 %v52
    %3007 = vmatpush.msra.mxu0 %v50
    %3008 = vmatpush.msra.mxu0 %v48
    %3009 = vmatpush.msra.mxu0 %v46
    %3010 = vmatpush.msra.mxu0 %v44
    %3011 = vmatpush.msra.mxu0 %v42
    %3012 = vmatpush.msra.mxu0 %v40
    %3013 = vmatmul.f32.gmra.mxu0 %v2952
    %v3014 = vpop.f32.mrf.mxu0
    %v3015 = vadd.f32 0.0, %v3014
    %3016 = vdwg.mxu0
    %3017 = vmatpush.msra.mxu0 %v102
    %3018 = vmatpush.msra.mxu0 %v100
    %3019 = vmatpush.msra.mxu0 %v98
    %3020 = vmatpush.msra.mxu0 %v96
    %3021 = vmatpush.msra.mxu0 %v94
    %3022 = vmatpush.msra.mxu0 %v92
    %3023 = vmatpush.msra.mxu0 %v90
    %3024 = vmatpush.msra.mxu0 %v88
    %3025 = vmatpush.msra.mxu0 %v86
    %3026 = vmatpush.msra.mxu0 %v84
    %3027 = vmatpush.msra.mxu0 %v82
    %3028 = vmatpush.msra.mxu0 %v80
    %3029 = vmatpush.msra.mxu0 %v78
    %3030 = vmatpush.msra.mxu0 %v76
    %3031 = vmatpush.msra.mxu0 %v74
    %3032 = vmatpush.msra.mxu0 %v72
    %3033 = vmatmul.f32.gmra.mxu0 %v2953
    %v3034 = vpop.f32.mrf.mxu0
    %v3035 = vadd.f32 %v3015, %v3034
    %3036 = vdwg.mxu0
    %s3037 = scalar_lea.vmem %s0, 208
    %v3038 = vld [vmem:[%s3037] sm:$0xff]
    %v3039 = vadd.f32 %v3038, %v2995
    %3040 = vmatpush.msra.mxu0 %v118
    %3041 = vmatpush.msra.mxu0 %v117
    %3042 = vmatpush.msra.mxu0 %v116
    %3043 = vmatpush.msra.mxu0 %v115
    %3044 = vmatpush.msra.mxu0 %v114
    %3045 = vmatpush.msra.mxu0 %v113
    %3046 = vmatpush.msra.mxu0 %v112
    %3047 = vmatpush.msra.mxu0 %v111
    %3048 = vmatpush.msra.mxu0 %v110
    %3049 = vmatpush.msra.mxu0 %v109
    %3050 = vmatpush.msra.mxu0 %v108
    %3051 = vmatpush.msra.mxu0 %v107
    %3052 = vmatpush.msra.mxu0 %v106
    %3053 = vmatpush.msra.mxu0 %v105
    %3054 = vmatpush.msra.mxu0 %v104
    %3055 = vmatpush.msra.mxu0 %v103
    %3056 = vmatmul.f32.gmra.mxu0 %v3039
    %v3057 = vpop.f32.mrf.mxu0
    %v3058 = vadd.f32 %v3035, %v3057
    %3059 = vdwg.mxu0
    %v3060 = vadd.f32 %v3058, %v121
    %v3061 = vtanh.pop %v3039
    %v3062 = vtanh.pop %v3060
    %s3063 = scalar_lea.vmem %s6, 416
    %3064 = vst [vmem:[%s3063] sm:$0xff] %v3061
    %3065 = vst [vmem:[%s3063 + $0x8] sm:$0xff] %v3062
    %3066 = vmatpush.msra.mxu0 %v69
    %3067 = vmatpush.msra.mxu0 %v67
    %3068 = vmatpush.msra.mxu0 %v65
    %3069 = vmatpush.msra.mxu0 %v63
    %3070 = vmatpush.msra.mxu0 %v61
    %3071 = vmatpush.msra.mxu0 %v59
    %3072 = vmatpush.msra.mxu0 %v57
    %3073 = vmatpush.msra.mxu0 %v55
    %3074 = vmatpush.msra.mxu0 %v53
    %3075 = vmatpush.msra.mxu0 %v51
    %3076 = vmatpush.msra.mxu0 %v49
    %3077 = vmatpush.msra.mxu0 %v47
    %3078 = vmatpush.msra.mxu0 %v45
    %3079 = vmatpush.msra.mxu0 %v43
    %3080 = vmatpush.msra.mxu0 %v41
    %3081 = vmatpush.msra.mxu0 %v39
    %3082 = vmatmul.f32.gmra.mxu0 %v3061
    %v3083 = vpop.f32.mrf.mxu0
    %v3084 = vadd.f32 0.0, %v3083
    %3085 = vdwg.mxu0
    %3086 = vmatpush.msra.mxu0 %v101
    %3087 = vmatpush.msra.mxu0 %v99
    %3088 = vmatpush.msra.mxu0 %v97
    %3089 = vmatpush.msra.mxu0 %v95
    %3090 = vmatpush.msra.mxu0 %v93
    %3091 = vmatpush.msra.mxu0 %v91
    %3092 = vmatpush.msra.mxu0 %v89
    %3093 = vmatpush.msra.mxu0 %v87
    %3094 = vmatpush.msra.mxu0 %v85
    %3095 = vmatpush.msra.mxu0 %v83
    %3096 = vmatpush.msra.mxu0 %v81
    %3097 = vmatpush.msra.mxu0 %v79
    %3098 = vmatpush.msra.mxu0 %v77
    %3099 = vmatpush.msra.mxu0 %v75
    %3100 = vmatpush.msra.mxu0 %v73
    %3101 = vmatpush.msra.mxu0 %v71
    %3102 = vmatmul.f32.gmra.mxu0 %v3062
    %v3103 = vpop.f32.mrf.mxu0
    %v3104 = vadd.f32 %v3084, %v3103
    %3105 = vdwg.mxu0
    %3106 = vmatpush.msra.mxu0 %v70
    %3107 = vmatpush.msra.mxu0 %v68
    %3108 = vmatpush.msra.mxu0 %v66
    %3109 = vmatpush.msra.mxu0 %v64
    %3110 = vmatpush.msra.mxu0 %v62
    %3111 = vmatpush.msra.mxu0 %v60
    %3112 = vmatpush.msra.mxu0 %v58
    %3113 = vmatpush.msra.mxu0 %v56
    %3114 = vmatpush.msra.mxu0 %v54
    %3115 = vmatpush.msra.mxu0 %v52
    %3116 = vmatpush.msra.mxu0 %v50
    %3117 = vmatpush.msra.mxu0 %v48
    %3118 = vmatpush.msra.mxu0 %v46
    %3119 = vmatpush.msra.mxu0 %v44
    %3120 = vmatpush.msra.mxu0 %v42
    %3121 = vmatpush.msra.mxu0 %v40
    %3122 = vmatmul.f32.gmra.mxu0 %v3061
    %v3123 = vpop.f32.mrf.mxu0
    %v3124 = vadd.f32 0.0, %v3123
    %3125 = vdwg.mxu0
    %3126 = vmatpush.msra.mxu0 %v102
    %3127 = vmatpush.msra.mxu0 %v100
    %3128 = vmatpush.msra.mxu0 %v98
    %3129 = vmatpush.msra.mxu0 %v96
    %3130 = vmatpush.msra.mxu0 %v94
    %3131 = vmatpush.msra.mxu0 %v92
    %3132 = vmatpush.msra.mxu0 %v90
    %3133 = vmatpush.msra.mxu0 %v88
    %3134 = vmatpush.msra.mxu0 %v86
    %3135 = vmatpush.msra.mxu0 %v84
    %3136 = vmatpush.msra.mxu0 %v82
    %3137 = vmatpush.msra.mxu0 %v80
    %3138 = vmatpush.msra.mxu0 %v78
    %3139 = vmatpush.msra.mxu0 %v76
    %3140 = vmatpush.msra.mxu0 %v74
    %3141 = vmatpush.msra.mxu0 %v72
    %3142 = vmatmul.f32.gmra.mxu0 %v3062
    %v3143 = vpop.f32.mrf.mxu0
    %v3144 = vadd.f32 %v3124, %v3143
    %3145 = vdwg.mxu0
    %s3146 = scalar_lea.vmem %s0, 216
    %v3147 = vld [vmem:[%s3146] sm:$0xff]
    %v3148 = vadd.f32 %v3147, %v3104
    %3149 = vmatpush.msra.mxu0 %v118
    %3150 = vmatpush.msra.mxu0 %v117
    %3151 = vmatpush.msra.mxu0 %v116
    %3152 = vmatpush.msra.mxu0 %v115
    %3153 = vmatpush.msra.mxu0 %v114
    %3154 = vmatpush.msra.mxu0 %v113
    %3155 = vmatpush.msra.mxu0 %v112
    %3156 = vmatpush.msra.mxu0 %v111
    %3157 = vmatpush.msra.mxu0 %v110
    %3158 = vmatpush.msra.mxu0 %v109
    %3159 = vmatpush.msra.mxu0 %v108
    %3160 = vmatpush.msra.mxu0 %v107
    %3161 = vmatpush.msra.mxu0 %v106
    %3162 = vmatpush.msra.mxu0 %v105
    %3163 = vmatpush.msra.mxu0 %v104
    %3164 = vmatpush.msra.mxu0 %v103
    %3165 = vmatmul.f32.gmra.mxu0 %v3148
    %v3166 = vpop.f32.mrf.mxu0
    %v3167 = vadd.f32 %v3144, %v3166
    %3168 = vdwg.mxu0
    %v3169 = vadd.f32 %v3167, %v121
    %v3170 = vtanh.pop %v3148
    %v3171 = vtanh.pop %v3169
    %s3172 = scalar_lea.vmem %s6, 432
    %3173 = vst [vmem:[%s3172] sm:$0xff] %v3170
    %3174 = vst [vmem:[%s3172 + $0x8] sm:$0xff] %v3171
    // Predicated region
    $region30: #{reservior_rollout.1} parent=1 // pred_check
      _
    $region31: #{reservior_rollout.1} parent=1 // pred_check_branch
      %3176 = sbr.rel (0) target = $region33
    $region32: #{reservior_rollout.1} parent=1 // pred_region
      _
    $region33: #{reservior_rollout.1} parent=1 // pred_fallthru
      _
    // Predicated region
    $region34: #{reservior_rollout.1} parent=1 // pred_check
      _
    $region35: #{reservior_rollout.1} parent=1 // pred_check_branch
      %3178 = sbr.rel (0) target = $region37
    $region36: #{reservior_rollout.1} parent=1 // pred_region
      _
    $region37: #{reservior_rollout.1} parent=1 // pred_fallthru
      _
    %3179 = vsyncpa [#allocation3], 1

</llo_original>
